<compile_context>
chip_gen: v5e
topology: v5e:2x2
jax: 0.10.0
libtpu: 0.0.40
codegen_flags: <defaults>
</compile_context>

<pallas_src>
import math
import jax
import jax.numpy as jnp
from jax.experimental import pallas as pl
from jax.experimental.pallas import tpu as pltpu

_LANE = 128
_SUBLANE = 8
_DEFAULT_BATCH_TILE = 256   # multiple of 256 (v6e/v7x MXU) and of 128 (v5e MXU)


def _round_up(x, m):
    return ((x + m - 1) // m) * m


def _pad2d(x, rows, cols):
    r, c = x.shape
    if r == rows and c == cols:
        return x
    return jnp.pad(x, ((0, rows - r), (0, cols - c)))


# ---------------------------------------------------------------------------
# Pallas kernels
# ---------------------------------------------------------------------------

def _gru_norm_kernel(emb_ref, h_ref, td_ref, feat_ref,
                     we_ref, wtd_ref, wf_ref, whh_ref, bih_ref, bhh_ref,
                     out_ref):
    """Fused concat + GRUCell (PyTorch gate order r, z, n) + F.normalize(dim=1).

    All feature axes are padded to D_pad (multiple of 128); padded lanes of the
    weights/biases are zero, so padded output lanes stay exactly zero and the
    L2 norm over D_pad lanes equals the norm over the logical D lanes.
    """
    dp = out_ref.shape[-1]                       # D_pad (multiple of 128)
    emb = emb_ref[...]                           # (TB, D_pad)   "other" embedding
    h = h_ref[...]                               # (TB, D_pad)   hidden state

    # gi = [emb, td, feat] @ W_ih^T + b_ih, with the concat fused away.
    gi = (jnp.dot(emb, we_ref[...], preferred_element_type=jnp.float32)
          + jnp.dot(feat_ref[...], wf_ref[...], preferred_element_type=jnp.float32)
          + td_ref[...] * wtd_ref[...]           # (TB,1)*(1,3*D_pad) broadcast
          + bih_ref[...])
    gh = jnp.dot(h, whh_ref[...], preferred_element_type=jnp.float32) + bhh_ref[...]

    # Gate slices fall exactly on 128-lane boundaries (dp is a multiple of 128).
    i_r, i_z, i_n = gi[:, 0:dp], gi[:, dp:2 * dp], gi[:, 2 * dp:3 * dp]
    h_r, h_z, h_n = gh[:, 0:dp], gh[:, dp:2 * dp], gh[:, 2 * dp:3 * dp]

    r = jax.nn.sigmoid(i_r + h_r)
    z = jax.nn.sigmoid(i_z + h_z)
    n = jnp.tanh(i_n + r * h_n)
    h_new = (1.0 - z) * n + z * h

    # F.normalize(p=2, dim=1, eps=1e-12): x / max(||x||, 1e-12)  ==  x * rsqrt(max(||x||^2, 1e-24))
    sumsq = jnp.sum(h_new * h_new, axis=-1, keepdims=True)
    inv = jax.lax.rsqrt(jnp.maximum(sumsq, 1e-24))
    out_ref[...] = h_new * inv


def _project_kernel(emb_ref, td_ref, w_ref, b1_ref, out_ref):
    """context_convert: emb * (1 + Linear(1->D)(timediffs)); the +1 is folded into b1."""
    out_ref[...] = emb_ref[...] * (td_ref[...] * w_ref[...] + b1_ref[...])


# ---------------------------------------------------------------------------
# pallas_call wrappers (batch-tiled grid, resident weights)
# ---------------------------------------------------------------------------

def _batch_tile(batch, target):
    return min(target, _round_up(max(batch, 1), _SUBLANE))


def gru_update_normalize(x_other, h, td, feat, kp, d, d_pad,
                         batch_tile=_DEFAULT_BATCH_TILE):
    B = h.shape[0]
    NF = feat.shape[1]
    tb = _batch_tile(B, batch_tile)
    b_pad = _round_up(B, tb)
    dp3 = 3 * d_pad

    emb_p = _pad2d(x_other.astype(jnp.float32), b_pad, d_pad)
    h_p = _pad2d(h.astype(jnp.float32), b_pad, d_pad)
    td_p = _pad2d(td.astype(jnp.float32), b_pad, 1)
    feat_p = _pad2d(feat.astype(jnp.float32), b_pad, NF)

    def batch_spec(cols):
        return pl.BlockSpec((tb, cols), lambda i: (i, 0))

    def resident(rows, cols):
        return pl.BlockSpec((rows, cols), lambda i: (0, 0))

    out = pl.pallas_call(
        _gru_norm_kernel,
        out_shape=jax.ShapeDtypeStruct((b_pad, d_pad), jnp.float32),
        grid=(b_pad // tb,),
        in_specs=[
            batch_spec(d_pad),        # emb (the "other" embedding)
            batch_spec(d_pad),        # hidden state
            batch_spec(1),            # timediffs
            batch_spec(NF),           # features
            resident(d_pad, dp3),     # W_e   (emb rows of W_ih^T)
            resident(1, dp3),         # w_td  (timediff row of W_ih^T)
            resident(NF, dp3),        # W_f   (feature rows of W_ih^T)
            resident(d_pad, dp3),     # W_hh^T
            resident(1, dp3),         # b_ih
            resident(1, dp3),         # b_hh
        ],
        out_specs=batch_spec(d_pad),
        compiler_params=pltpu.CompilerParams(dimension_semantics=("parallel",)),
    )(emb_p, h_p, td_p, feat_p,
      kp["w_e_t"], kp["w_td_t"], kp["w_f_t"], kp["w_hh_t"], kp["b_ih"], kp["b_hh"])
    return out[:B, :d]


def project_embedding(emb, td, w_pad, b_plus1_pad, d, d_pad,
                      batch_tile=_DEFAULT_BATCH_TILE):
    B = emb.shape[0]
    tb = _batch_tile(B, batch_tile)
    b_pad = _round_up(B, tb)

    emb_p = _pad2d(emb.astype(jnp.float32), b_pad, d_pad)
    td_p = _pad2d(td.astype(jnp.float32), b_pad, 1)

    out = pl.pallas_call(
        _project_kernel,
        out_shape=jax.ShapeDtypeStruct((b_pad, d_pad), jnp.float32),
        grid=(b_pad // tb,),
        in_specs=[
            pl.BlockSpec((tb, d_pad), lambda i: (i, 0)),
            pl.BlockSpec((tb, 1), lambda i: (i, 0)),
            pl.BlockSpec((1, d_pad), lambda i: (0, 0)),   # weight row, resident
            pl.BlockSpec((1, d_pad), lambda i: (0, 0)),   # bias + 1,  resident
        ],
        out_specs=pl.BlockSpec((tb, d_pad), lambda i: (i, 0)),
        compiler_params=pltpu.CompilerParams(dimension_semantics=("parallel",)),
    )(emb_p, td_p, w_pad, b_plus1_pad)
    return out[:B, :d]


# ---------------------------------------------------------------------------
# JODIE module (JAX side): parameter setup + forward dispatch
# ---------------------------------------------------------------------------

class JodieJax:
    def __init__(self, embedding_dim, num_features, num_users, num_items, key):
        self.embedding_dim = embedding_dim
        self.num_features = num_features
        self.d_pad = _round_up(embedding_dim, _LANE)
        D = embedding_dim
        rnn_in = D + 1 + num_features

        keys = jax.random.split(key, 10)
        k = 1.0 / math.sqrt(D)   # PyTorch GRUCell init bound

        def uni(kk, shape):
            return jax.random.uniform(kk, shape, jnp.float32, minval=-k, maxval=k)

        # Logical GRUCell params, stored transposed: (in, 3D) / (D, 3D); gate order r,z,n.
        self.item_rnn = dict(
            w_ih_t=uni(keys[0], (rnn_in, 3 * D)),
            w_hh_t=uni(keys[1], (D, 3 * D)),
            b_ih=uni(keys[2], (1, 3 * D)),
            b_hh=uni(keys[3], (1, 3 * D)),
        )
        self.user_rnn = dict(
            w_ih_t=uni(keys[4], (rnn_in, 3 * D)),
            w_hh_t=uni(keys[5], (D, 3 * D)),
            b_ih=uni(keys[6], (1, 3 * D)),
            b_hh=uni(keys[7], (1, 3 * D)),
        )
        # Kernel-layout (lane-padded, concat-split) copies.
        self.item_rnn_kernel = self._build_kernel_gru(self.item_rnn)
        self.user_rnn_kernel = self._build_kernel_gru(self.user_rnn)

        # NormalLinear(1, D): weight/bias ~ Normal(0, 1/sqrt(in_features=1)) = Normal(0, 1)
        self.w_emb_t = jax.random.normal(keys[8], (1, D), jnp.float32)   # = weight.T
        self.b_emb = jax.random.normal(keys[9], (1, D), jnp.float32)
        self._w_emb_pad = _pad2d(self.w_emb_t, 1, self.d_pad)
        self._b_emb_plus1_pad = _pad2d(self.b_emb + 1.0, 1, self.d_pad)  # fold the "+1"

        # TODO(synk): predict_label / predict_item_embedding / prediction_layer and the
        # initial_*_embedding parameters are not used by forward(); omitted from kernels.
        del num_users, num_items

    def _build_kernel_gru(self, p):
        """Split W_ih^T into [emb | timediff | features] row blocks and zero-pad every
        per-gate column block (and the emb/hh row blocks) from D to D_pad lanes."""
        D, Dp, NF = self.embedding_dim, self.d_pad, self.num_features

        def pad_gate_cols(w):   # (rows, 3*D) -> (rows, 3*Dp), per-gate zero-padding
            return jnp.concatenate(
                [jnp.pad(w[:, g * D:(g + 1) * D], ((0, 0), (0, Dp - D))) for g in range(3)],
                axis=1)

        w_ih_t = p["w_ih_t"]                                        # (D+1+NF, 3D)
        w_e_t = jnp.pad(pad_gate_cols(w_ih_t[:D, :]), ((0, Dp - D), (0, 0)))   # (Dp, 3Dp)
        w_td_t = pad_gate_cols(w_ih_t[D:D + 1, :])                  # (1, 3Dp)
        w_f_t = pad_gate_cols(w_ih_t[D + 1:, :])                    # (NF, 3Dp)
        w_hh_t = jnp.pad(pad_gate_cols(p["w_hh_t"]), ((0, Dp - D), (0, 0)))    # (Dp, 3Dp)
        b_ih = pad_gate_cols(p["b_ih"])                             # (1, 3Dp)
        b_hh = pad_gate_cols(p["b_hh"])                             # (1, 3Dp)
        return dict(w_e_t=w_e_t, w_td_t=w_td_t, w_f_t=w_f_t, w_hh_t=w_hh_t,
                    b_ih=b_ih, b_hh=b_hh)

    def forward(self, user_embeddings, item_embeddings,
                timediffs=None, features=None, select=None):
        if select == "item_update":
            return gru_update_normalize(user_embeddings, item_embeddings,
                                        timediffs, features, self.item_rnn_kernel,
                                        self.embedding_dim, self.d_pad)
        elif select == "user_update":
            return gru_update_normalize(item_embeddings, user_embeddings,
                                        timediffs, features, self.user_rnn_kernel,
                                        self.embedding_dim, self.d_pad)
        elif select == "project":
            return project_embedding(user_embeddings, timediffs,
                                     self._w_emb_pad, self._b_emb_plus1_pad,
                                     self.embedding_dim, self.d_pad)
        else:
            raise ValueError(select)


# ---------------------------------------------------------------------------
# Pure-JAX reference (for sanity check)
# ---------------------------------------------------------------------------

def _ref_gru_norm(x, h, p):
    D = h.shape[1]
    hi = jax.lax.Precision.HIGHEST
    gi = jnp.dot(x, p["w_ih_t"], precision=hi) + p["b_ih"]
    gh = jnp.dot(h, p["w_hh_t"], precision=hi) + p["b_hh"]
    r = jax.nn.sigmoid(gi[:, :D] + gh[:, :D])
    z = jax.nn.sigmoid(gi[:, D:2 * D] + gh[:, D:2 * D])
    n = jnp.tanh(gi[:, 2 * D:] + r * gh[:, 2 * D:])
    hn = (1 - z) * n + z * h
    nrm = jnp.maximum(jnp.linalg.norm(hn, axis=1, keepdims=True), 1e-12)
    return hn / nrm


def _ref_project(emb, td, w_t, b):
    return emb * (1.0 + (td @ w_t + b))


# ---------------------------------------------------------------------------

if __name__ == "__main__":
    key = jax.random.PRNGKey(0)
    B = 260              # exercises batch tiling (TB=256 -> 2 grid steps) and batch padding
    D = 32               # embedding_dim (lane-padded to 128 inside the kernels)
    NF = 7               # num_features  -> GRU input size = 40
    NUM_USERS, NUM_ITEMS = 16, 16

    kmod, ku, ki, kt, kf = jax.random.split(key, 5)
    model = JodieJax(D, NF, NUM_USERS, NUM_ITEMS, kmod)

    user_emb = jax.random.normal(ku, (B, D), jnp.float32)
    item_emb = jax.random.normal(ki, (B, D), jnp.float32)
    timediffs = jax.random.normal(kt, (B, 1), jnp.float32)
    features = jax.random.normal(kf, (B, NF), jnp.float32)

    out_item = model.forward(user_emb, item_emb, timediffs, features, "item_update")
    out_user = model.forward(user_emb, item_emb, timediffs, features, "user_update")
    out_proj = model.forward(user_emb, item_emb, timediffs, features, "project")
    jax.block_until_ready((out_item, out_user, out_proj))

    # sanity check against pure-JAX reference
    xi = jnp.concatenate([user_emb, timediffs, features], axis=1)
    xu = jnp.concatenate([item_emb, timediffs, features], axis=1)
    ref_item = _ref_gru_norm(xi, item_emb, model.item_rnn)
    ref_user = _ref_gru_norm(xu, user_emb, model.user_rnn)
    ref_proj = _ref_project(user_emb, timediffs, model.w_emb_t, model.b_emb)

    assert out_item.shape == (B, D) and out_user.shape == (B, D) and out_proj.shape == (B, D)
    assert jnp.allclose(out_item, ref_item, atol=1e-4, rtol=1e-4)
    assert jnp.allclose(out_user, ref_user, atol=1e-4, rtol=1e-4)
    assert jnp.allclose(out_proj, ref_proj, atol=1e-4, rtol=1e-4)

    # also exercise the tiny / non-multiple-of-8 batch path
    out_small = model.forward(user_emb[:3], item_emb[:3], timediffs[:3], features[:3],
                              "item_update")
    jax.block_until_ready(out_small)
    assert jnp.allclose(out_small, ref_item[:3], atol=1e-4, rtol=1e-4)

    print("KERNEL_OK")
</pallas_src>

<mosaic_0001>
module attributes {stable_mosaic.version = 11 : i64} {
  func.func @_gru_norm_kernel(%arg0: i32, %arg1: memref<256x128xf32, #tpu.memory_space<vmem>>, %arg2: memref<256x128xf32, #tpu.memory_space<vmem>>, %arg3: memref<256x1xf32, #tpu.memory_space<vmem>>, %arg4: memref<256x7xf32, #tpu.memory_space<vmem>>, %arg5: memref<128x384xf32, #tpu.memory_space<vmem>>, %arg6: memref<1x384xf32, #tpu.memory_space<vmem>>, %arg7: memref<7x384xf32, #tpu.memory_space<vmem>>, %arg8: memref<128x384xf32, #tpu.memory_space<vmem>>, %arg9: memref<1x384xf32, #tpu.memory_space<vmem>>, %arg10: memref<1x384xf32, #tpu.memory_space<vmem>>, %arg11: memref<256x128xf32, #tpu.memory_space<vmem>>) attributes {dimension_semantics = [#tpu.dimension_semantics<parallel>], iteration_bounds = array<i64: 2>, scalar_prefetch = 0 : i64, scratch_operands = 0 : i64, tpu.core_type = #tpu.core_type<tc>, window_params = [{transform_indices = @transform_0, window_bounds = array<i64: 256, 128>}, {transform_indices = @transform_1, window_bounds = array<i64: 256, 128>}, {transform_indices = @transform_2, window_bounds = array<i64: 256, 1>}, {transform_indices = @transform_3, window_bounds = array<i64: 256, 7>}, {pipeline_mode = #tpu.pipeline_mode<synchronous>, transform_indices = @transform_4, window_bounds = array<i64: 128, 384>}, {pipeline_mode = #tpu.pipeline_mode<synchronous>, transform_indices = @transform_5, window_bounds = array<i64: 1, 384>}, {pipeline_mode = #tpu.pipeline_mode<synchronous>, transform_indices = @transform_6, window_bounds = array<i64: 7, 384>}, {pipeline_mode = #tpu.pipeline_mode<synchronous>, transform_indices = @transform_7, window_bounds = array<i64: 128, 384>}, {pipeline_mode = #tpu.pipeline_mode<synchronous>, transform_indices = @transform_8, window_bounds = array<i64: 1, 384>}, {pipeline_mode = #tpu.pipeline_mode<synchronous>, transform_indices = @transform_9, window_bounds = array<i64: 1, 384>}, {transform_indices = @transform_10, window_bounds = array<i64: 256, 128>}]} {
    %c0 = arith.constant 0 : index
    %c0_0 = arith.constant 0 : index
    %0 = vector.load %arg1[%c0, %c0_0] : memref<256x128xf32, #tpu.memory_space<vmem>>, vector<256x128xf32>
    %c0_1 = arith.constant 0 : index
    %c0_2 = arith.constant 0 : index
    %1 = vector.load %arg2[%c0_1, %c0_2] : memref<256x128xf32, #tpu.memory_space<vmem>>, vector<256x128xf32>
    %c0_3 = arith.constant 0 : index
    %c0_4 = arith.constant 0 : index
    %2 = vector.load %arg5[%c0_3, %c0_4] : memref<128x384xf32, #tpu.memory_space<vmem>>, vector<128x384xf32>
    %cst = arith.constant dense<0.000000e+00> : vector<256x384xf32>
    %3 = tpu.matmul %0, %2, %cst {dimension_numbers = #tpu.dot_dimension_numbers<[1], [0], [0], [1], [0, 0, 1, 1], [], []>} : vector<256x128xf32>, vector<128x384xf32>, vector<256x384xf32> -> vector<256x384xf32>
    %c0_5 = arith.constant 0 : index
    %c0_6 = arith.constant 0 : index
    %4 = vector.load %arg4[%c0_5, %c0_6] : memref<256x7xf32, #tpu.memory_space<vmem>>, vector<256x7xf32>
    %c0_7 = arith.constant 0 : index
    %c0_8 = arith.constant 0 : index
    %5 = vector.load %arg7[%c0_7, %c0_8] : memref<7x384xf32, #tpu.memory_space<vmem>>, vector<7x384xf32>
    %cst_9 = arith.constant dense<0.000000e+00> : vector<256x384xf32>
    %6 = tpu.matmul %4, %5, %cst_9 {dimension_numbers = #tpu.dot_dimension_numbers<[1], [0], [0], [1], [0, 0, 1, 1], [], []>} : vector<256x7xf32>, vector<7x384xf32>, vector<256x384xf32> -> vector<256x384xf32>
    %7 = arith.addf %3, %6 : vector<256x384xf32>
    %c0_10 = arith.constant 0 : index
    %c0_11 = arith.constant 0 : index
    %8 = vector.load %arg3[%c0_10, %c0_11] : memref<256x1xf32, #tpu.memory_space<vmem>>, vector<256x1xf32>
    %c0_12 = arith.constant 0 : index
    %c0_13 = arith.constant 0 : index
    %9 = vector.load %arg6[%c0_12, %c0_13] : memref<1x384xf32, #tpu.memory_space<vmem>>, vector<1x384xf32>
    %10 = vector.broadcast %8 : vector<256x1xf32> to vector<256x384xf32>
    %11 = vector.broadcast %9 : vector<1x384xf32> to vector<256x384xf32>
    %12 = arith.mulf %10, %11 : vector<256x384xf32>
    %13 = arith.addf %7, %12 : vector<256x384xf32>
    %c0_14 = arith.constant 0 : index
    %c0_15 = arith.constant 0 : index
    %14 = vector.load %arg9[%c0_14, %c0_15] : memref<1x384xf32, #tpu.memory_space<vmem>>, vector<1x384xf32>
    %15 = vector.broadcast %14 : vector<1x384xf32> to vector<256x384xf32>
    %16 = arith.addf %13, %15 : vector<256x384xf32>
    %c0_16 = arith.constant 0 : index
    %c0_17 = arith.constant 0 : index
    %17 = vector.load %arg8[%c0_16, %c0_17] : memref<128x384xf32, #tpu.memory_space<vmem>>, vector<128x384xf32>
    %cst_18 = arith.constant dense<0.000000e+00> : vector<256x384xf32>
    %18 = tpu.matmul %1, %17, %cst_18 {dimension_numbers = #tpu.dot_dimension_numbers<[1], [0], [0], [1], [0, 0, 1, 1], [], []>} : vector<256x128xf32>, vector<128x384xf32>, vector<256x384xf32> -> vector<256x384xf32>
    %c0_19 = arith.constant 0 : index
    %c0_20 = arith.constant 0 : index
    %19 = vector.load %arg10[%c0_19, %c0_20] : memref<1x384xf32, #tpu.memory_space<vmem>>, vector<1x384xf32>
    %20 = vector.broadcast %19 : vector<1x384xf32> to vector<256x384xf32>
    %21 = arith.addf %18, %20 : vector<256x384xf32>
    %22 = vector.extract_strided_slice %16 {offsets = [0, 0], sizes = [256, 128], strides = [1, 1]} : vector<256x384xf32> to vector<256x128xf32>
    %23 = vector.extract_strided_slice %16 {offsets = [0, 128], sizes = [256, 128], strides = [1, 1]} : vector<256x384xf32> to vector<256x128xf32>
    %24 = vector.extract_strided_slice %16 {offsets = [0, 256], sizes = [256, 128], strides = [1, 1]} : vector<256x384xf32> to vector<256x128xf32>
    %25 = vector.extract_strided_slice %21 {offsets = [0, 0], sizes = [256, 128], strides = [1, 1]} : vector<256x384xf32> to vector<256x128xf32>
    %26 = vector.extract_strided_slice %21 {offsets = [0, 128], sizes = [256, 128], strides = [1, 1]} : vector<256x384xf32> to vector<256x128xf32>
    %27 = vector.extract_strided_slice %21 {offsets = [0, 256], sizes = [256, 128], strides = [1, 1]} : vector<256x384xf32> to vector<256x128xf32>
    %28 = arith.addf %22, %25 : vector<256x128xf32>
    %29 = arith.negf %28 : vector<256x128xf32>
    %30 = math.exp %29 : vector<256x128xf32>
    %cst_21 = arith.constant 1.000000e+00 : f32
    %31 = vector.broadcast %cst_21 : f32 to vector<256x128xf32>
    %32 = arith.addf %31, %30 : vector<256x128xf32>
    %33 = arith.divf %31, %32 : vector<256x128xf32>
    %34 = arith.addf %23, %26 : vector<256x128xf32>
    %35 = arith.negf %34 : vector<256x128xf32>
    %36 = math.exp %35 : vector<256x128xf32>
    %cst_22 = arith.constant 1.000000e+00 : f32
    %37 = vector.broadcast %cst_22 : f32 to vector<256x128xf32>
    %38 = arith.addf %37, %36 : vector<256x128xf32>
    %39 = arith.divf %37, %38 : vector<256x128xf32>
    %40 = arith.mulf %33, %27 : vector<256x128xf32>
    %41 = arith.addf %24, %40 : vector<256x128xf32>
    %42 = math.tanh %41 : vector<256x128xf32>
    %cst_23 = arith.constant 1.000000e+00 : f32
    %43 = vector.broadcast %cst_23 : f32 to vector<256x128xf32>
    %44 = arith.subf %43, %39 : vector<256x128xf32>
    %45 = arith.mulf %44, %42 : vector<256x128xf32>
    %46 = arith.mulf %39, %1 : vector<256x128xf32>
    %47 = arith.addf %45, %46 : vector<256x128xf32>
    %48 = arith.mulf %47, %47 : vector<256x128xf32>
    %cst_24 = arith.constant dense<0.000000e+00> : vector<256xf32>
    %49 = vector.multi_reduction <add>, %48, %cst_24 [1] : vector<256x128xf32> to vector<256xf32>
    %50 = vector.shape_cast %49 : vector<256xf32> to vector<256x1xf32>
    %cst_25 = arith.constant 1.000000e-24 : f32
    %51 = vector.broadcast %cst_25 : f32 to vector<256x1xf32>
    %52 = arith.maximumf %50, %51 : vector<256x1xf32>
    %53 = math.rsqrt %52 : vector<256x1xf32>
    %54 = vector.broadcast %53 : vector<256x1xf32> to vector<256x128xf32>
    %55 = arith.mulf %47, %54 : vector<256x128xf32>
    %c0_26 = arith.constant 0 : index
    %c0_27 = arith.constant 0 : index
    %56 = vector.load %arg11[%c0_26, %c0_27] : memref<256x128xf32, #tpu.memory_space<vmem>>, vector<256x128xf32>
    tpu.vector_store %arg11[%c0_26, %c0_27], %55 {strides = array<i32>} : memref<256x128xf32, #tpu.memory_space<vmem>>, vector<256x128xf32>,
    return
  }
  func.func @transform_0(%arg0: i32) -> (i32, i32) {
    %c0_i32 = arith.constant 0 : i32
    %c0_i32_0 = arith.constant 0 : i32
    return %arg0, %c0_i32 : i32, i32
  }
  func.func @transform_1(%arg0: i32) -> (i32, i32) {
    %c0_i32 = arith.constant 0 : i32
    %c0_i32_0 = arith.constant 0 : i32
    return %arg0, %c0_i32 : i32, i32
  }
  func.func @transform_2(%arg0: i32) -> (i32, i32) {
    %c0_i32 = arith.constant 0 : i32
    %c0_i32_0 = arith.constant 0 : i32
    return %arg0, %c0_i32 : i32, i32
  }
  func.func @transform_3(%arg0: i32) -> (i32, i32) {
    %c0_i32 = arith.constant 0 : i32
    %c0_i32_0 = arith.constant 0 : i32
    return %arg0, %c0_i32 : i32, i32
  }
  func.func @transform_4(%arg0: i32) -> (i32, i32) {
    %c0_i32 = arith.constant 0 : i32
    %c0_i32_0 = arith.constant 0 : i32
    %c0_i32_1 = arith.constant 0 : i32
    return %c0_i32, %c0_i32_0 : i32, i32
  }
  func.func @transform_5(%arg0: i32) -> (i32, i32) {
    %c0_i32 = arith.constant 0 : i32
    %c0_i32_0 = arith.constant 0 : i32
    %c0_i32_1 = arith.constant 0 : i32
    return %c0_i32, %c0_i32_0 : i32, i32
  }
  func.func @transform_6(%arg0: i32) -> (i32, i32) {
    %c0_i32 = arith.constant 0 : i32
    %c0_i32_0 = arith.constant 0 : i32
    %c0_i32_1 = arith.constant 0 : i32
    return %c0_i32, %c0_i32_0 : i32, i32
  }
  func.func @transform_7(%arg0: i32) -> (i32, i32) {
    %c0_i32 = arith.constant 0 : i32
    %c0_i32_0 = arith.constant 0 : i32
    %c0_i32_1 = arith.constant 0 : i32
    return %c0_i32, %c0_i32_0 : i32, i32
  }
  func.func @transform_8(%arg0: i32) -> (i32, i32) {
    %c0_i32 = arith.constant 0 : i32
    %c0_i32_0 = arith.constant 0 : i32
    %c0_i32_1 = arith.constant 0 : i32
    return %c0_i32, %c0_i32_0 : i32, i32
  }
  func.func @transform_9(%arg0: i32) -> (i32, i32) {
    %c0_i32 = arith.constant 0 : i32
    %c0_i32_0 = arith.constant 0 : i32
    %c0_i32_1 = arith.constant 0 : i32
    return %c0_i32, %c0_i32_0 : i32, i32
  }
  func.func @transform_10(%arg0: i32) -> (i32, i32) {
    %c0_i32 = arith.constant 0 : i32
    %c0_i32_0 = arith.constant 0 : i32
    return %arg0, %c0_i32 : i32, i32
  }
}

</mosaic_0001>

<llo_original>
// kernel: tpu_custom_call.1
$region0: #{tpu_custom_call.1}
  #allocation0 [shape = 'u32[]', space=smem, size = 0x4, offset = 0x4, fixed_abs, tag = 'smem constant byte address 0x4 - core index']
  #allocation1 [shape = 'u32[72,128]{1,0:T(1,128)}', space=vmem, size = 0x9000, scoped, tag = 'internal scratch']
  %s0 = inlined_call_operand.vmem [shape: f32[512,128], index: 0, kind: input, shape index: {}]
  %s1 = inlined_call_operand.vmem [shape: f32[512,128], index: 1, kind: input, shape index: {}]
  %s2 = inlined_call_operand.vmem [shape: f32[512,1], index: 2, kind: input, shape index: {}]
  %s3 = inlined_call_operand.vmem [shape: f32[512,7], index: 3, kind: input, shape index: {}]
  %s4 = inlined_call_operand.hbm [shape: f32[128,384], index: 4, kind: input, shape index: {}]
  %s5 = inlined_call_operand.vmem [shape: f32[1,384], index: 5, kind: input, shape index: {}]
  %s6 = inlined_call_operand.hbm [shape: f32[7,384], index: 6, kind: input, shape index: {}]
  %s7 = inlined_call_operand.hbm [shape: f32[128,384], index: 7, kind: input, shape index: {}]
  %s8 = inlined_call_operand.hbm [shape: f32[1,384], index: 8, kind: input, shape index: {}]
  %s9 = inlined_call_operand.hbm [shape: f32[1,384], index: 9, kind: input, shape index: {}]
  %s10 = inlined_call_operand.hbm [shape: f32[512,128], index: 10, kind: output, shape index: {}]
  %s11 = sld [smem:[#allocation0]]
  $region93: #{tpu_custom_call.1} parent=0
    _
  %s13 = ssub.s32 1, %s11
  %s14 = scalar_select 0, %s13, %s11
  $region1: #{tpu_custom_call.1} parent=0
    #allocation2 [shape = 'u8[196608]{0}', space=vmem, size = 0x30000, scoped, tag = 'input window, operand 4, single buffered']
    #allocation3 [shape = 's32[2]{0}', space=sflag, size = 0x8, scoped, tag = 'scoped memory for tpu_custom_call.1']
    #allocation4 [shape = 's32[2]{0}', space=sflag, size = 0x8, scoped, tag = 'scoped memory for tpu_custom_call.1']
    #allocation5 [shape = 'u8[12288]{0}', space=vmem, size = 0x3000, scoped, tag = 'input window, operand 6, single buffered']
    #allocation6 [shape = 's32[1]{0}', space=sflag, size = 0x4, scoped, tag = 'scoped memory for tpu_custom_call.1']
    #allocation7 [shape = 'u8[196608]{0}', space=vmem, size = 0x30000, scoped, tag = 'input window, operand 7, single buffered']
    #allocation8 [shape = 'u8[1536]{0}', space=vmem, size = 0x800, scoped, tag = 'input window, operand 8, single buffered']
    #allocation9 [shape = 's32[1]{0}', space=sflag, size = 0x4, scoped, tag = 'scoped memory for tpu_custom_call.1']
    #allocation10 [shape = 'u8[1536]{0}', space=vmem, size = 0x800, scoped, tag = 'input window, operand 9, single buffered']
    #allocation11 [shape = 'u8[262144]{0}', space=vmem, size = 0x40000, scoped, tag = 'output window, operand 0']
    %15 = vsyncpa [#allocation3], 0
    %16 = vsyncpa [#allocation6], 0
    %17 = vsyncpa [#allocation9], 0
    %18 = vsyncpa [#allocation4], 0
    %s19 = scalar_lea.sflag [#allocation4], 1
    %20 = vsyncpa %s19, 0
    loop: start=0, step=1, limit=4
    $region2: #{tpu_custom_call.1} parent=1 // loop_pre_header
      _
    $region3: #{tpu_custom_call.1} parent=1 // loop_header
      %s22 = sphi 0, %s26
      %p23 = scmp.ge.s32.totalorder %s22, 4
      %s32 = sphi 0, %s34
      %s35 = sphi 0, %s32
      %s36 = sphi 0, %s35
      %s52 = sphi 0, %s36
      %s58 = sphi 0, %s60
      %s61 = sphi 0, %s58
      %s62 = sphi 0, %s61
      %s78 = sphi 0, %s62
      %s84 = sphi 0, %s86
      %s87 = sphi 0, %s84
      %s88 = sphi 0, %s87
      %s104 = sphi 0, %s88
      %s110 = sphi 0, %s112
      %s113 = sphi 0, %s110
      %s114 = sphi 0, %s113
      %s130 = sphi 0, %s114
      %s134 = sphi 0, %s134
      %s136 = sphi 0, %s134
      %s137 = sphi 0, %s136
      %s151 = sphi 0, %s137
      %s155 = sphi 0, %s155
      %s157 = sphi 0, %s155
      %s158 = sphi 0, %s157
      %s172 = sphi 0, %s158
      %s176 = sphi 0, %s176
      %s178 = sphi 0, %s176
      %s179 = sphi 0, %s178
      %s193 = sphi 0, %s179
      %s197 = sphi 0, %s197
      %s199 = sphi 0, %s197
      %s200 = sphi 0, %s199
      %s214 = sphi 0, %s200
      %s218 = sphi 0, %s218
      %s220 = sphi 0, %s218
      %s221 = sphi 0, %s220
      %s235 = sphi 0, %s221
      %s239 = sphi 0, %s239
      %s241 = sphi 0, %s239
      %s242 = sphi 0, %s241
      %s256 = sphi 0, %s242
      %s262 = sphi 0, %s264
      %s265 = sphi 0, %s262
      %s266 = sphi 0, %s265
      %s282 = sphi 0, %s266
    $region4: #{tpu_custom_call.1} parent=1 // loop_header_branch
      %25 = sbr.rel (%p23) target = $region8
    $region5: #{tpu_custom_call.1} parent=1 // loop_body
      %s27 = ssub.s32 %s22, 1
      %s28 = ssub.s32 %s22, 2
      %s29 = sadd.s32 %s22, 1
      %s30 = ssub.s32 %s22, %s29
      %p31 = scmp.eq.s32.totalorder %s30, 0
      %s33 = sadd.s32 %s32, 1
      %s34 = scalar_select %p31, %s32, %s33
      %p37 = pneg %p31
      %p38 = scmp.eq.s32.totalorder %s22, 1
      %p39 = por %p37, %p38
      %p40 = scmp.ne.s32.totalorder %s32, %s35
      %p41 = scmp.eq.s32.totalorder %s22, 0
      %p42 = por %p40, %p41
      %p43 = scmp.ne.s32.totalorder %s32, %s35
      %p44 = scmp.eq.s32.totalorder %s27, 1
      %p45 = por %p43, %p44
      %p46 = scmp.ne.s32.totalorder %s35, %s36
      %p47 = scmp.eq.s32.totalorder %s27, 0
      %p48 = por %p46, %p47
      %p49 = scmp.ne.s32.totalorder %s35, %s36
      %p50 = scmp.eq.s32.totalorder %s28, 1
      %p51 = por %p49, %p50
      %p53 = scmp.ne.s32.totalorder %s36, %s52
      %p54 = scmp.eq.s32.totalorder %s28, 0
      %p55 = por %p53, %p54
      %s56 = ssub.s32 %s22, %s29
      %p57 = scmp.eq.s32.totalorder %s56, 0
      %s59 = sadd.s32 %s58, 1
      %s60 = scalar_select %p57, %s58, %s59
      %p63 = pneg %p57
      %p64 = scmp.eq.s32.totalorder %s22, 1
      %p65 = por %p63, %p64
      %p66 = scmp.ne.s32.totalorder %s58, %s61
      %p67 = scmp.eq.s32.totalorder %s22, 0
      %p68 = por %p66, %p67
      %p69 = scmp.ne.s32.totalorder %s58, %s61
      %p70 = scmp.eq.s32.totalorder %s27, 1
      %p71 = por %p69, %p70
      %p72 = scmp.ne.s32.totalorder %s61, %s62
      %p73 = scmp.eq.s32.totalorder %s27, 0
      %p74 = por %p72, %p73
      %p75 = scmp.ne.s32.totalorder %s61, %s62
      %p76 = scmp.eq.s32.totalorder %s28, 1
      %p77 = por %p75, %p76
      %p79 = scmp.ne.s32.totalorder %s62, %s78
      %p80 = scmp.eq.s32.totalorder %s28, 0
      %p81 = por %p79, %p80
      %s82 = ssub.s32 %s22, %s29
      %p83 = scmp.eq.s32.totalorder %s82, 0
      %s85 = sadd.s32 %s84, 1
      %s86 = scalar_select %p83, %s84, %s85
      %p89 = pneg %p83
      %p90 = scmp.eq.s32.totalorder %s22, 1
      %p91 = por %p89, %p90
      %p92 = scmp.ne.s32.totalorder %s84, %s87
      %p93 = scmp.eq.s32.totalorder %s22, 0
      %p94 = por %p92, %p93
      %p95 = scmp.ne.s32.totalorder %s84, %s87
      %p96 = scmp.eq.s32.totalorder %s27, 1
      %p97 = por %p95, %p96
      %p98 = scmp.ne.s32.totalorder %s87, %s88
      %p99 = scmp.eq.s32.totalorder %s27, 0
      %p100 = por %p98, %p99
      %p101 = scmp.ne.s32.totalorder %s87, %s88
      %p102 = scmp.eq.s32.totalorder %s28, 1
      %p103 = por %p101, %p102
      %p105 = scmp.ne.s32.totalorder %s88, %s104
      %p106 = scmp.eq.s32.totalorder %s28, 0
      %p107 = por %p105, %p106
      %s108 = ssub.s32 %s22, %s29
      %p109 = scmp.eq.s32.totalorder %s108, 0
      %s111 = sadd.s32 %s110, 1
      %s112 = scalar_select %p109, %s110, %s111
      %p115 = pneg %p109
      %p116 = scmp.eq.s32.totalorder %s22, 1
      %p117 = por %p115, %p116
      %p118 = scmp.ne.s32.totalorder %s110, %s113
      %p119 = scmp.eq.s32.totalorder %s22, 0
      %p120 = por %p118, %p119
      %p121 = scmp.ne.s32.totalorder %s110, %s113
      %p122 = scmp.eq.s32.totalorder %s27, 1
      %p123 = por %p121, %p122
      %p124 = scmp.ne.s32.totalorder %s113, %s114
      %p125 = scmp.eq.s32.totalorder %s27, 0
      %p126 = por %p124, %p125
      %p127 = scmp.ne.s32.totalorder %s113, %s114
      %p128 = scmp.eq.s32.totalorder %s28, 1
      %p129 = por %p127, %p128
      %p131 = scmp.ne.s32.totalorder %s114, %s130
      %p132 = scmp.eq.s32.totalorder %s28, 0
      %p133 = por %p131, %p132
      %s135 = sadd.s32 %s134, 1
      %p138 = scmp.eq.s32.totalorder %s22, 1
      %p139 = scmp.ne.s32.totalorder %s134, %s136
      %p140 = scmp.eq.s32.totalorder %s22, 0
      %p141 = por %p139, %p140
      %p142 = scmp.ne.s32.totalorder %s134, %s136
      %p143 = scmp.eq.s32.totalorder %s27, 1
      %p144 = por %p142, %p143
      %p145 = scmp.ne.s32.totalorder %s136, %s137
      %p146 = scmp.eq.s32.totalorder %s27, 0
      %p147 = por %p145, %p146
      %p148 = scmp.ne.s32.totalorder %s136, %s137
      %p149 = scmp.eq.s32.totalorder %s28, 1
      %p150 = por %p148, %p149
      %p152 = scmp.ne.s32.totalorder %s137, %s151
      %p153 = scmp.eq.s32.totalorder %s28, 0
      %p154 = por %p152, %p153
      %s156 = sadd.s32 %s155, 1
      %p159 = scmp.eq.s32.totalorder %s22, 1
      %p160 = scmp.ne.s32.totalorder %s155, %s157
      %p161 = scmp.eq.s32.totalorder %s22, 0
      %p162 = por %p160, %p161
      %p163 = scmp.ne.s32.totalorder %s155, %s157
      %p164 = scmp.eq.s32.totalorder %s27, 1
      %p165 = por %p163, %p164
      %p166 = scmp.ne.s32.totalorder %s157, %s158
      %p167 = scmp.eq.s32.totalorder %s27, 0
      %p168 = por %p166, %p167
      %p169 = scmp.ne.s32.totalorder %s157, %s158
      %p170 = scmp.eq.s32.totalorder %s28, 1
      %p171 = por %p169, %p170
      %p173 = scmp.ne.s32.totalorder %s158, %s172
      %p174 = scmp.eq.s32.totalorder %s28, 0
      %p175 = por %p173, %p174
      %s177 = sadd.s32 %s176, 1
      %p180 = scmp.eq.s32.totalorder %s22, 1
      %p181 = scmp.ne.s32.totalorder %s176, %s178
      %p182 = scmp.eq.s32.totalorder %s22, 0
      %p183 = por %p181, %p182
      %p184 = scmp.ne.s32.totalorder %s176, %s178
      %p185 = scmp.eq.s32.totalorder %s27, 1
      %p186 = por %p184, %p185
      %p187 = scmp.ne.s32.totalorder %s178, %s179
      %p188 = scmp.eq.s32.totalorder %s27, 0
      %p189 = por %p187, %p188
      %p190 = scmp.ne.s32.totalorder %s178, %s179
      %p191 = scmp.eq.s32.totalorder %s28, 1
      %p192 = por %p190, %p191
      %p194 = scmp.ne.s32.totalorder %s179, %s193
      %p195 = scmp.eq.s32.totalorder %s28, 0
      %p196 = por %p194, %p195
      %s198 = sadd.s32 %s197, 1
      %p201 = scmp.eq.s32.totalorder %s22, 1
      %p202 = scmp.ne.s32.totalorder %s197, %s199
      %p203 = scmp.eq.s32.totalorder %s22, 0
      %p204 = por %p202, %p203
      %p205 = scmp.ne.s32.totalorder %s197, %s199
      %p206 = scmp.eq.s32.totalorder %s27, 1
      %p207 = por %p205, %p206
      %p208 = scmp.ne.s32.totalorder %s199, %s200
      %p209 = scmp.eq.s32.totalorder %s27, 0
      %p210 = por %p208, %p209
      %p211 = scmp.ne.s32.totalorder %s199, %s200
      %p212 = scmp.eq.s32.totalorder %s28, 1
      %p213 = por %p211, %p212
      %p215 = scmp.ne.s32.totalorder %s200, %s214
      %p216 = scmp.eq.s32.totalorder %s28, 0
      %p217 = por %p215, %p216
      %s219 = sadd.s32 %s218, 1
      %p222 = scmp.eq.s32.totalorder %s22, 1
      %p223 = scmp.ne.s32.totalorder %s218, %s220
      %p224 = scmp.eq.s32.totalorder %s22, 0
      %p225 = por %p223, %p224
      %p226 = scmp.ne.s32.totalorder %s218, %s220
      %p227 = scmp.eq.s32.totalorder %s27, 1
      %p228 = por %p226, %p227
      %p229 = scmp.ne.s32.totalorder %s220, %s221
      %p230 = scmp.eq.s32.totalorder %s27, 0
      %p231 = por %p229, %p230
      %p232 = scmp.ne.s32.totalorder %s220, %s221
      %p233 = scmp.eq.s32.totalorder %s28, 1
      %p234 = por %p232, %p233
      %p236 = scmp.ne.s32.totalorder %s221, %s235
      %p237 = scmp.eq.s32.totalorder %s28, 0
      %p238 = por %p236, %p237
      %s240 = sadd.s32 %s239, 1
      %p243 = scmp.eq.s32.totalorder %s22, 1
      %p244 = scmp.ne.s32.totalorder %s239, %s241
      %p245 = scmp.eq.s32.totalorder %s22, 0
      %p246 = por %p244, %p245
      %p247 = scmp.ne.s32.totalorder %s239, %s241
      %p248 = scmp.eq.s32.totalorder %s27, 1
      %p249 = por %p247, %p248
      %p250 = scmp.ne.s32.totalorder %s241, %s242
      %p251 = scmp.eq.s32.totalorder %s27, 0
      %p252 = por %p250, %p251
      %p253 = scmp.ne.s32.totalorder %s241, %s242
      %p254 = scmp.eq.s32.totalorder %s28, 1
      %p255 = por %p253, %p254
      %p257 = scmp.ne.s32.totalorder %s242, %s256
      %p258 = scmp.eq.s32.totalorder %s28, 0
      %p259 = por %p257, %p258
      %s260 = ssub.s32 %s22, %s29
      %p261 = scmp.eq.s32.totalorder %s260, 0
      %s263 = sadd.s32 %s262, 1
      %s264 = scalar_select %p261, %s262, %s263
      %p267 = pneg %p261
      %p268 = scmp.eq.s32.totalorder %s22, 1
      %p269 = por %p267, %p268
      %p270 = scmp.ne.s32.totalorder %s262, %s265
      %p271 = scmp.eq.s32.totalorder %s22, 0
      %p272 = por %p270, %p271
      %p273 = scmp.ne.s32.totalorder %s262, %s265
      %p274 = scmp.eq.s32.totalorder %s27, 1
      %p275 = por %p273, %p274
      %p276 = scmp.ne.s32.totalorder %s265, %s266
      %p277 = scmp.eq.s32.totalorder %s27, 0
      %p278 = por %p276, %p277
      %p279 = scmp.ne.s32.totalorder %s265, %s266
      %p280 = scmp.eq.s32.totalorder %s28, 1
      %p281 = por %p279, %p280
      %p283 = scmp.ne.s32.totalorder %s266, %s282
      %p284 = scmp.eq.s32.totalorder %s28, 0
      %p285 = por %p283, %p284
      %p286 = scmp.le.s32.totalorder 1, %s22
      %p287 = scmp.lt.s32.totalorder %s22, 3
      %p288 = pnand %p286, %p287
      %p289 = pneg %p288
      // Predicated region
      $region9: #{tpu_custom_call.1} parent=5 // pred_check
        _
      $region10: #{tpu_custom_call.1} parent=5 // pred_check_branch
        %291 = sbr.rel (%p288) target = $region12
      $region11: #{tpu_custom_call.1} parent=5 // pred_region
        %s292 = ssub.s32 %s22, 1
        // Predicated region
        $region13: #{tpu_custom_call.1} parent=11 // pred_check
          %p293 = pneg %p147
        $region14: #{tpu_custom_call.1} parent=11 // pred_check_branch
          %295 = sbr.rel (%p293) target = $region16
        $region15: #{tpu_custom_call.1} parent=11 // pred_region
          %297 = vsyncadd [#allocation3], 0
          %s298 = sshll.u32 %s4, 4
          %s299 = int_to_ptr.hbm [resolvable:$true] %s298
          %s300 = sshll.u32 [#allocation2], 4
          %s301 = int_to_ptr.vmem [resolvable:$true] %s300
          %306 = dma.hbm_to_vmem [thread:$0]  %s299, 6144, %s301, [#allocation3], 384, 384, 24
        $region16: #{tpu_custom_call.1} parent=11 // pred_fallthru
          _
        // Predicated region
        $region17: #{tpu_custom_call.1} parent=11 // pred_check
          %p307 = pneg %p168
        $region18: #{tpu_custom_call.1} parent=11 // pred_check_branch
          %309 = sbr.rel (%p307) target = $region20
        $region19: #{tpu_custom_call.1} parent=11 // pred_region
          _
        $region20: #{tpu_custom_call.1} parent=11 // pred_fallthru
          _
        // Predicated region
        $region21: #{tpu_custom_call.1} parent=11 // pred_check
          %p310 = pneg %p189
        $region22: #{tpu_custom_call.1} parent=11 // pred_check_branch
          %312 = sbr.rel (%p310) target = $region24
        $region23: #{tpu_custom_call.1} parent=11 // pred_region
          %314 = vsyncadd [#allocation6], 0
          %s316 = sshll.u32 %s6, 4
          %s317 = int_to_ptr.hbm [resolvable:$true] %s316
          %s318 = sshll.u32 [#allocation5], 4
          %s319 = int_to_ptr.vmem [resolvable:$true] %s318
          %321 = dma.hbm_to_vmem [thread:$0]  %s317, 384, %s319, [#allocation6]
        $region24: #{tpu_custom_call.1} parent=11 // pred_fallthru
          _
        // Predicated region
        $region25: #{tpu_custom_call.1} parent=11 // pred_check
          %p322 = pneg %p210
        $region26: #{tpu_custom_call.1} parent=11 // pred_check_branch
          %324 = sbr.rel (%p322) target = $region28
        $region27: #{tpu_custom_call.1} parent=11 // pred_region
          %326 = vsyncadd [#allocation6], 0
          %s327 = sshll.u32 %s7, 4
          %s328 = int_to_ptr.hbm [resolvable:$true] %s327
          %s329 = sshll.u32 [#allocation7], 4
          %s330 = int_to_ptr.vmem [resolvable:$true] %s329
          %335 = dma.hbm_to_vmem [thread:$0]  %s328, 6144, %s330, [#allocation6], 384, 384, 24
        $region28: #{tpu_custom_call.1} parent=11 // pred_fallthru
          _
        // Predicated region
        $region29: #{tpu_custom_call.1} parent=11 // pred_check
          %p336 = pneg %p231
        $region30: #{tpu_custom_call.1} parent=11 // pred_check_branch
          %338 = sbr.rel (%p336) target = $region32
        $region31: #{tpu_custom_call.1} parent=11 // pred_region
          %340 = vsyncadd [#allocation9], 0
          %s342 = sshll.u32 %s8, 4
          %s343 = int_to_ptr.hbm [resolvable:$true] %s342
          %s344 = sshll.u32 [#allocation8], 4
          %s345 = int_to_ptr.vmem [resolvable:$true] %s344
          %347 = dma.hbm_to_vmem [thread:$0]  %s343, 48, %s345, [#allocation9]
        $region32: #{tpu_custom_call.1} parent=11 // pred_fallthru
          _
        // Predicated region
        $region33: #{tpu_custom_call.1} parent=11 // pred_check
          %p348 = pneg %p252
        $region34: #{tpu_custom_call.1} parent=11 // pred_check_branch
          %350 = sbr.rel (%p348) target = $region36
        $region35: #{tpu_custom_call.1} parent=11 // pred_region
          %352 = vsyncadd [#allocation9], 0
          %s354 = sshll.u32 %s9, 4
          %s355 = int_to_ptr.hbm [resolvable:$true] %s354
          %s356 = sshll.u32 [#allocation10], 4
          %s357 = int_to_ptr.vmem [resolvable:$true] %s356
          %359 = dma.hbm_to_vmem [thread:$0]  %s355, 48, %s357, [#allocation9]
        $region36: #{tpu_custom_call.1} parent=11 // pred_fallthru
          _
      $region12: #{tpu_custom_call.1} parent=5 // pred_fallthru
        _
      %p360 = scmp.lt.s32.totalorder %s22, 2
      // Predicated region
      $region37: #{tpu_custom_call.1} parent=5 // pred_check
        %p361 = pneg %p360
      $region38: #{tpu_custom_call.1} parent=5 // pred_check_branch
        %363 = sbr.rel (%p361) target = $region40
      $region39: #{tpu_custom_call.1} parent=5 // pred_region
        // Predicated region
        $region41: #{tpu_custom_call.1} parent=39 // pred_check
          %p364 = pneg %p42
        $region42: #{tpu_custom_call.1} parent=39 // pred_check_branch
          %366 = sbr.rel (%p364) target = $region44
        $region43: #{tpu_custom_call.1} parent=39 // pred_region
          %s367 = smul.u32 32, %s22
          %p368 = scmp.lt.s32.totalorder %s367, 63
          %s369 = scalar_select %p368, %s367, 63
          %s370 = smul.addr %s369, 8
          %s371 = scalar_lea.vmem %s0, %s370
          %s372 = smul.u32 32, %s22
        $region44: #{tpu_custom_call.1} parent=39 // pred_fallthru
          _
        // Predicated region
        $region45: #{tpu_custom_call.1} parent=39 // pred_check
          %p373 = pneg %p68
        $region46: #{tpu_custom_call.1} parent=39 // pred_check_branch
          %375 = sbr.rel (%p373) target = $region48
        $region47: #{tpu_custom_call.1} parent=39 // pred_region
          %s376 = smul.u32 32, %s22
          %p377 = scmp.lt.s32.totalorder %s376, 63
          %s378 = scalar_select %p377, %s376, 63
          %s379 = smul.addr %s378, 8
          %s380 = scalar_lea.vmem %s1, %s379
          %s381 = smul.u32 32, %s22
        $region48: #{tpu_custom_call.1} parent=39 // pred_fallthru
          _
        // Predicated region
        $region49: #{tpu_custom_call.1} parent=39 // pred_check
          %p382 = pneg %p94
        $region50: #{tpu_custom_call.1} parent=39 // pred_check_branch
          %384 = sbr.rel (%p382) target = $region52
        $region51: #{tpu_custom_call.1} parent=39 // pred_region
          %s385 = smul.u32 32, %s22
          %p386 = scmp.lt.s32.totalorder %s385, 63
          %s387 = scalar_select %p386, %s385, 63
          %s388 = smul.addr %s387, 8
          %s389 = scalar_lea.vmem %s2, %s388
          %s390 = smul.u32 32, %s22
        $region52: #{tpu_custom_call.1} parent=39 // pred_fallthru
          _
        // Predicated region
        $region53: #{tpu_custom_call.1} parent=39 // pred_check
          %p391 = pneg %p120
        $region54: #{tpu_custom_call.1} parent=39 // pred_check_branch
          %393 = sbr.rel (%p391) target = $region56
        $region55: #{tpu_custom_call.1} parent=39 // pred_region
          %s394 = smul.u32 32, %s22
          %p395 = scmp.lt.s32.totalorder %s394, 63
          %s396 = scalar_select %p395, %s394, 63
          %s397 = smul.addr %s396, 8
          %s398 = scalar_lea.vmem %s3, %s397
          %s399 = smul.u32 32, %s22
        $region56: #{tpu_custom_call.1} parent=39 // pred_fallthru
          _
      $region40: #{tpu_custom_call.1} parent=5 // pred_fallthru
        _
      %p400 = scmp.le.s32.totalorder 1, %s22
      %p401 = scmp.lt.s32.totalorder %s22, 3
      %p402 = pnand %p400, %p401
      %p403 = pneg %p402
      // Predicated region
      $region57: #{tpu_custom_call.1} parent=5 // pred_check
        _
      $region58: #{tpu_custom_call.1} parent=5 // pred_check_branch
        %405 = sbr.rel (%p402) target = $region60
      $region59: #{tpu_custom_call.1} parent=5 // pred_region
        %s406 = ssub.s32 %s22, 1
        // Predicated region
        $region61: #{tpu_custom_call.1} parent=59 // pred_check
          %p407 = pneg %p147
        $region62: #{tpu_custom_call.1} parent=59 // pred_check_branch
          %409 = sbr.rel (%p407) target = $region64
        $region63: #{tpu_custom_call.1} parent=59 // pred_region
          %411 = dma.done [#allocation3], 6144
        $region64: #{tpu_custom_call.1} parent=59 // pred_fallthru
          _
        // Predicated region
        $region65: #{tpu_custom_call.1} parent=59 // pred_check
          %p412 = pneg %p189
        $region66: #{tpu_custom_call.1} parent=59 // pred_check_branch
          %414 = sbr.rel (%p412) target = $region68
        $region67: #{tpu_custom_call.1} parent=59 // pred_region
          %416 = dma.done [#allocation6], 384
        $region68: #{tpu_custom_call.1} parent=59 // pred_fallthru
          _
        // Predicated region
        $region69: #{tpu_custom_call.1} parent=59 // pred_check
          %p417 = pneg %p210
        $region70: #{tpu_custom_call.1} parent=59 // pred_check_branch
          %419 = sbr.rel (%p417) target = $region72
        $region71: #{tpu_custom_call.1} parent=59 // pred_region
          %421 = dma.done [#allocation6], 6144
        $region72: #{tpu_custom_call.1} parent=59 // pred_fallthru
          _
        // Predicated region
        $region73: #{tpu_custom_call.1} parent=59 // pred_check
          %p422 = pneg %p231
        $region74: #{tpu_custom_call.1} parent=59 // pred_check_branch
          %424 = sbr.rel (%p422) target = $region76
        $region75: #{tpu_custom_call.1} parent=59 // pred_region
          %426 = dma.done [#allocation9], 48
        $region76: #{tpu_custom_call.1} parent=59 // pred_fallthru
          _
        // Predicated region
        $region77: #{tpu_custom_call.1} parent=59 // pred_check
          %p427 = pneg %p252
        $region78: #{tpu_custom_call.1} parent=59 // pred_check_branch
          %429 = sbr.rel (%p427) target = $region80
        $region79: #{tpu_custom_call.1} parent=59 // pred_region
          %431 = dma.done [#allocation9], 48
        $region80: #{tpu_custom_call.1} parent=59 // pred_fallthru
          _
        %s432 = smul.u32 32, %s27
        %p433 = scmp.lt.s32.totalorder %s432, 63
        %s434 = scalar_select %p433, %s432, 63
        %s435 = smul.addr %s434, 8
        %s436 = scalar_lea.vmem %s0, %s435
        %p437 = pneg %p48
        %p438 = pneg %p45
        %s439 = smul.u32 32, %s27
        %p440 = scmp.lt.s32.totalorder %s439, 63
        %s441 = scalar_select %p440, %s439, 63
        %s442 = smul.addr %s441, 8
        %s443 = scalar_lea.vmem %s1, %s442
        %p444 = pneg %p74
        %p445 = pneg %p71
        %s446 = smul.u32 32, %s27
        %p447 = scmp.lt.s32.totalorder %s446, 63
        %s448 = scalar_select %p447, %s446, 63
        %s449 = smul.addr %s448, 8
        %s450 = scalar_lea.vmem %s2, %s449
        %p451 = pneg %p100
        %p452 = pneg %p97
        %s453 = smul.u32 32, %s27
        %p454 = scmp.lt.s32.totalorder %s453, 63
        %s455 = scalar_select %p454, %s453, 63
        %s456 = smul.addr %s455, 8
        %s457 = scalar_lea.vmem %s3, %s456
        %p458 = pneg %p126
        %p459 = pneg %p123
        %p460 = pneg %p147
        %p461 = pneg %p144
        %p462 = pneg %p168
        %p463 = pneg %p165
        %p464 = pneg %p189
        %p465 = pneg %p186
        %p466 = pneg %p210
        %p467 = pneg %p207
        %p468 = pneg %p231
        %p469 = pneg %p228
        %p470 = pneg %p252
        %p471 = pneg %p249
        %p472 = pneg %p278
        %p473 = pneg %p275
        %s474 = sand.u32 %s265, 1
        %s475 = scalar_lea.sflag [#allocation4], %s474
        %s476 = sand.u32 %s265, 1
        %s477 = smul.addr %s476, 256
        %s478 = scalar_lea.vmem [#allocation11], %s477
        %s479 = smul.u32 32, %s27
        %p480 = scmp.lt.s32.totalorder %s479, 63
        %s481 = scalar_select %p480, %s479, 63
        %s482 = smul.addr %s481, 8
        %s483 = scalar_lea.vmem %s0, %s482
        %s484 = smul.u32 32, %s27
        %s485 = smul.u32 32, %s27
        %p486 = scmp.lt.s32.totalorder %s485, 63
        %s487 = scalar_select %p486, %s485, 63
        %s488 = smul.addr %s487, 8
        %s489 = scalar_lea.vmem %s1, %s488
        %s490 = smul.u32 32, %s27
        %s491 = smul.u32 32, %s27
        %p492 = scmp.lt.s32.totalorder %s491, 63
        %s493 = scalar_select %p492, %s491, 63
        %s494 = smul.addr %s493, 8
        %s495 = scalar_lea.vmem %s2, %s494
        %s496 = smul.u32 32, %s27
        %s497 = smul.u32 32, %s27
        %p498 = scmp.lt.s32.totalorder %s497, 63
        %s499 = scalar_select %p498, %s497, 63
        %s500 = smul.addr %s499, 8
        %s501 = scalar_lea.vmem %s3, %s500
        %s502 = smul.u32 32, %s27
        %s503 = smul.u32 32, %s27
        %v504 = vld [vmem:[%s483] sm:$0xff]
        %v505 = vld [vmem:[%s483 + $0x8] sm:$0xff]
        %v506 = vld [vmem:[%s483 + $0x10] sm:$0xff]
        %v507 = vld [vmem:[%s483 + $0x18] sm:$0xff]
        %v508 = vld [vmem:[%s483 + $0x20] sm:$0xff]
        %v509 = vld [vmem:[%s483 + $0x28] sm:$0xff]
        %v510 = vld [vmem:[%s483 + $0x30] sm:$0xff]
        %v511 = vld [vmem:[%s483 + $0x38] sm:$0xff]
        %v512 = vld [vmem:[%s483 + $0x40] sm:$0xff]
        %v513 = vld [vmem:[%s483 + $0x48] sm:$0xff]
        %v514 = vld [vmem:[%s483 + $0x50] sm:$0xff]
        %v515 = vld [vmem:[%s483 + $0x58] sm:$0xff]
        %v516 = vld [vmem:[%s483 + $0x60] sm:$0xff]
        %v517 = vld [vmem:[%s483 + $0x68] sm:$0xff]
        %v518 = vld [vmem:[%s483 + $0x70] sm:$0xff]
        %v519 = vld [vmem:[%s483 + $0x78] sm:$0xff]
        %v520 = vld [vmem:[%s483 + $0x80] sm:$0xff]
        %v521 = vld [vmem:[%s483 + $0x88] sm:$0xff]
        %v522 = vld [vmem:[%s483 + $0x90] sm:$0xff]
        %v523 = vld [vmem:[%s483 + $0x98] sm:$0xff]
        %v524 = vld [vmem:[%s483 + $0xa0] sm:$0xff]
        %v525 = vld [vmem:[%s483 + $0xa8] sm:$0xff]
        %v526 = vld [vmem:[%s483 + $0xb0] sm:$0xff]
        %v527 = vld [vmem:[%s483 + $0xb8] sm:$0xff]
        %v528 = vld [vmem:[%s483 + $0xc0] sm:$0xff]
        %v529 = vld [vmem:[%s483 + $0xc8] sm:$0xff]
        %v530 = vld [vmem:[%s483 + $0xd0] sm:$0xff]
        %v531 = vld [vmem:[%s483 + $0xd8] sm:$0xff]
        %v532 = vld [vmem:[%s483 + $0xe0] sm:$0xff]
        %v533 = vld [vmem:[%s483 + $0xe8] sm:$0xff]
        %v534 = vld [vmem:[%s483 + $0xf0] sm:$0xff]
        %v535 = vld [vmem:[%s483 + $0xf8] sm:$0xff]
        %v536 = vld [vmem:[%s489] sm:$0xff]
        %v537 = vld [vmem:[%s489 + $0x8] sm:$0xff]
        %v538 = vld [vmem:[%s489 + $0x10] sm:$0xff]
        %v539 = vld [vmem:[%s489 + $0x18] sm:$0xff]
        %v540 = vld [vmem:[%s489 + $0x20] sm:$0xff]
        %v541 = vld [vmem:[%s489 + $0x28] sm:$0xff]
        %v542 = vld [vmem:[%s489 + $0x30] sm:$0xff]
        %v543 = vld [vmem:[%s489 + $0x38] sm:$0xff]
        %v544 = vld [vmem:[%s489 + $0x40] sm:$0xff]
        %v545 = vld [vmem:[%s489 + $0x48] sm:$0xff]
        %v546 = vld [vmem:[%s489 + $0x50] sm:$0xff]
        %v547 = vld [vmem:[%s489 + $0x58] sm:$0xff]
        %v548 = vld [vmem:[%s489 + $0x60] sm:$0xff]
        %v549 = vld [vmem:[%s489 + $0x68] sm:$0xff]
        %v550 = vld [vmem:[%s489 + $0x70] sm:$0xff]
        %v551 = vld [vmem:[%s489 + $0x78] sm:$0xff]
        %v552 = vld [vmem:[%s489 + $0x80] sm:$0xff]
        %v553 = vld [vmem:[%s489 + $0x88] sm:$0xff]
        %v554 = vld [vmem:[%s489 + $0x90] sm:$0xff]
        %v555 = vld [vmem:[%s489 + $0x98] sm:$0xff]
        %v556 = vld [vmem:[%s489 + $0xa0] sm:$0xff]
        %v557 = vld [vmem:[%s489 + $0xa8] sm:$0xff]
        %v558 = vld [vmem:[%s489 + $0xb0] sm:$0xff]
        %v559 = vld [vmem:[%s489 + $0xb8] sm:$0xff]
        %v560 = vld [vmem:[%s489 + $0xc0] sm:$0xff]
        %v561 = vld [vmem:[%s489 + $0xc8] sm:$0xff]
        %v562 = vld [vmem:[%s489 + $0xd0] sm:$0xff]
        %v563 = vld [vmem:[%s489 + $0xd8] sm:$0xff]
        %v564 = vld [vmem:[%s489 + $0xe0] sm:$0xff]
        %v565 = vld [vmem:[%s489 + $0xe8] sm:$0xff]
        %v566 = vld [vmem:[%s489 + $0xf0] sm:$0xff]
        %v567 = vld [vmem:[%s489 + $0xf8] sm:$0xff]
        %v568 = vld [vmem:[#allocation2] sm:$0xff]
        %v569 = vld [vmem:[#allocation2 + $0x8] sm:$0xff]
        %v570 = vld [vmem:[#allocation2 + $0x10] sm:$0xff]
        %v571 = vld [vmem:[#allocation2 + $0x18] sm:$0xff]
        %v572 = vld [vmem:[#allocation2 + $0x20] sm:$0xff]
        %v573 = vld [vmem:[#allocation2 + $0x28] sm:$0xff]
        %v574 = vld [vmem:[#allocation2 + $0x30] sm:$0xff]
        %v575 = vld [vmem:[#allocation2 + $0x38] sm:$0xff]
        %v576 = vld [vmem:[#allocation2 + $0x40] sm:$0xff]
        %v577 = vld [vmem:[#allocation2 + $0x48] sm:$0xff]
        %v578 = vld [vmem:[#allocation2 + $0x50] sm:$0xff]
        %v579 = vld [vmem:[#allocation2 + $0x58] sm:$0xff]
        %v580 = vld [vmem:[#allocation2 + $0x60] sm:$0xff]
        %v581 = vld [vmem:[#allocation2 + $0x68] sm:$0xff]
        %v582 = vld [vmem:[#allocation2 + $0x70] sm:$0xff]
        %v583 = vld [vmem:[#allocation2 + $0x78] sm:$0xff]
        %v584 = vld [vmem:[#allocation2 + $0x80] sm:$0xff]
        %v585 = vld [vmem:[#allocation2 + $0x88] sm:$0xff]
        %v586 = vld [vmem:[#allocation2 + $0x90] sm:$0xff]
        %v587 = vld [vmem:[#allocation2 + $0x98] sm:$0xff]
        %v588 = vld [vmem:[#allocation2 + $0xa0] sm:$0xff]
        %v589 = vld [vmem:[#allocation2 + $0xa8] sm:$0xff]
        %v590 = vld [vmem:[#allocation2 + $0xb0] sm:$0xff]
        %v591 = vld [vmem:[#allocation2 + $0xb8] sm:$0xff]
        %v592 = vld [vmem:[#allocation2 + $0xc0] sm:$0xff]
        %v593 = vld [vmem:[#allocation2 + $0xc8] sm:$0xff]
        %v594 = vld [vmem:[#allocation2 + $0xd0] sm:$0xff]
        %v595 = vld [vmem:[#allocation2 + $0xd8] sm:$0xff]
        %v596 = vld [vmem:[#allocation2 + $0xe0] sm:$0xff]
        %v597 = vld [vmem:[#allocation2 + $0xe8] sm:$0xff]
        %v598 = vld [vmem:[#allocation2 + $0xf0] sm:$0xff]
        %v599 = vld [vmem:[#allocation2 + $0xf8] sm:$0xff]
        %v600 = vld [vmem:[#allocation2 + $0x100] sm:$0xff]
        %v601 = vld [vmem:[#allocation2 + $0x108] sm:$0xff]
        %v602 = vld [vmem:[#allocation2 + $0x110] sm:$0xff]
        %v603 = vld [vmem:[#allocation2 + $0x118] sm:$0xff]
        %v604 = vld [vmem:[#allocation2 + $0x120] sm:$0xff]
        %v605 = vld [vmem:[#allocation2 + $0x128] sm:$0xff]
        %v606 = vld [vmem:[#allocation2 + $0x130] sm:$0xff]
        %v607 = vld [vmem:[#allocation2 + $0x138] sm:$0xff]
        %v608 = vld [vmem:[#allocation2 + $0x140] sm:$0xff]
        %v609 = vld [vmem:[#allocation2 + $0x148] sm:$0xff]
        %v610 = vld [vmem:[#allocation2 + $0x150] sm:$0xff]
        %v611 = vld [vmem:[#allocation2 + $0x158] sm:$0xff]
        %v612 = vld [vmem:[#allocation2 + $0x160] sm:$0xff]
        %v613 = vld [vmem:[#allocation2 + $0x168] sm:$0xff]
        %v614 = vld [vmem:[#allocation2 + $0x170] sm:$0xff]
        %v615 = vld [vmem:[#allocation2 + $0x178] sm:$0xff]
        %v616 = vld [vmem:[%s501] sm:$0xff]
        %v617 = vld [vmem:[%s501 + $0x8] sm:$0xff]
        %v618 = vld [vmem:[%s501 + $0x10] sm:$0xff]
        %v619 = vld [vmem:[%s501 + $0x18] sm:$0xff]
        %v620 = vld [vmem:[%s501 + $0x20] sm:$0xff]
        %v621 = vld [vmem:[%s501 + $0x28] sm:$0xff]
        %v622 = vld [vmem:[%s501 + $0x30] sm:$0xff]
        %v623 = vld [vmem:[%s501 + $0x38] sm:$0xff]
        %v624 = vld [vmem:[%s501 + $0x40] sm:$0xff]
        %v625 = vld [vmem:[%s501 + $0x48] sm:$0xff]
        %v626 = vld [vmem:[%s501 + $0x50] sm:$0xff]
        %v627 = vld [vmem:[%s501 + $0x58] sm:$0xff]
        %v628 = vld [vmem:[%s501 + $0x60] sm:$0xff]
        %v629 = vld [vmem:[%s501 + $0x68] sm:$0xff]
        %v630 = vld [vmem:[%s501 + $0x70] sm:$0xff]
        %v631 = vld [vmem:[%s501 + $0x78] sm:$0xff]
        %v632 = vld [vmem:[%s501 + $0x80] sm:$0xff]
        %v633 = vld [vmem:[%s501 + $0x88] sm:$0xff]
        %v634 = vld [vmem:[%s501 + $0x90] sm:$0xff]
        %v635 = vld [vmem:[%s501 + $0x98] sm:$0xff]
        %v636 = vld [vmem:[%s501 + $0xa0] sm:$0xff]
        %v637 = vld [vmem:[%s501 + $0xa8] sm:$0xff]
        %v638 = vld [vmem:[%s501 + $0xb0] sm:$0xff]
        %v639 = vld [vmem:[%s501 + $0xb8] sm:$0xff]
        %v640 = vld [vmem:[%s501 + $0xc0] sm:$0xff]
        %v641 = vld [vmem:[%s501 + $0xc8] sm:$0xff]
        %v642 = vld [vmem:[%s501 + $0xd0] sm:$0xff]
        %v643 = vld [vmem:[%s501 + $0xd8] sm:$0xff]
        %v644 = vld [vmem:[%s501 + $0xe0] sm:$0xff]
        %v645 = vld [vmem:[%s501 + $0xe8] sm:$0xff]
        %v646 = vld [vmem:[%s501 + $0xf0] sm:$0xff]
        %v647 = vld [vmem:[%s501 + $0xf8] sm:$0xff]
        %v648 = vld [vmem:[#allocation5] sm:$0x7f]
        %v649 = vld [vmem:[#allocation5 + $0x8] sm:$0x7f]
        %v650 = vld [vmem:[#allocation5 + $0x10] sm:$0x7f]
        %vm651 = vcmask 56320
        %v653 = vsel %vm651, %v616, 0
        %v656 = vsel %vm651, %v617, 0
        %v659 = vsel %vm651, %v618, 0
        %v662 = vsel %vm651, %v619, 0
        %v665 = vsel %vm651, %v620, 0
        %v668 = vsel %vm651, %v621, 0
        %v671 = vsel %vm651, %v622, 0
        %v674 = vsel %vm651, %v623, 0
        %v677 = vsel %vm651, %v624, 0
        %v680 = vsel %vm651, %v625, 0
        %v683 = vsel %vm651, %v626, 0
        %v686 = vsel %vm651, %v627, 0
        %v689 = vsel %vm651, %v628, 0
        %v692 = vsel %vm651, %v629, 0
        %v695 = vsel %vm651, %v630, 0
        %v698 = vsel %vm651, %v631, 0
        %v701 = vsel %vm651, %v632, 0
        %v704 = vsel %vm651, %v633, 0
        %v707 = vsel %vm651, %v634, 0
        %v710 = vsel %vm651, %v635, 0
        %v713 = vsel %vm651, %v636, 0
        %v716 = vsel %vm651, %v637, 0
        %v719 = vsel %vm651, %v638, 0
        %v722 = vsel %vm651, %v639, 0
        %v725 = vsel %vm651, %v640, 0
        %v728 = vsel %vm651, %v641, 0
        %v731 = vsel %vm651, %v642, 0
        %v734 = vsel %vm651, %v643, 0
        %v737 = vsel %vm651, %v644, 0
        %v740 = vsel %vm651, %v645, 0
        %v743 = vsel %vm651, %v646, 0
        %v746 = vsel %vm651, %v647, 0
        %vm748 = vcmask 1046528
        %v750 = vsel %vm748, %v648, 0
        %v753 = vsel %vm748, %v649, 0
        %v756 = vsel %vm748, %v650, 0
        %758 = vmatpush.msra.mxu0 0.0
        %759 = vmatpush.msra.mxu0 0.0
        %760 = vmatpush.msra.mxu0 0.0
        %761 = vmatpush.msra.mxu0 0.0
        %762 = vmatpush.msra.mxu0 0.0
        %763 = vmatpush.msra.mxu0 0.0
        %764 = vmatpush.msra.mxu0 0.0
        %765 = vmatpush.msra.mxu0 0.0
        %766 = vmatpush.msra.mxu0 0.0
        %767 = vmatpush.msra.mxu0 0.0
        %768 = vmatpush.msra.mxu0 0.0
        %769 = vmatpush.msra.mxu0 0.0
        %770 = vmatpush.msra.mxu0 0.0
        %771 = vmatpush.msra.mxu0 0.0
        %772 = vmatpush.msra.mxu0 0.0
        %773 = vmatpush.msra.mxu0 %v750
        %774 = vmatmul.f32.gmra.mxu0 %v653
        %v775 = vpop.f32.mrf.mxu0
        %v776 = vadd.f32 0.0, %v775
        %777 = vmatmul.f32.gmra.mxu0 %v656
        %v778 = vpop.f32.mrf.mxu0
        %v779 = vadd.f32 0.0, %v778
        %780 = vmatmul.f32.gmra.mxu0 %v659
        %v781 = vpop.f32.mrf.mxu0
        %v782 = vadd.f32 0.0, %v781
        %783 = vmatmul.f32.gmra.mxu0 %v662
        %v784 = vpop.f32.mrf.mxu0
        %v785 = vadd.f32 0.0, %v784
        %786 = vmatmul.f32.gmra.mxu0 %v665
        %v787 = vpop.f32.mrf.mxu0
        %v788 = vadd.f32 0.0, %v787
        %789 = vmatmul.f32.gmra.mxu0 %v668
        %v790 = vpop.f32.mrf.mxu0
        %v791 = vadd.f32 0.0, %v790
        %792 = vmatmul.f32.gmra.mxu0 %v671
        %v793 = vpop.f32.mrf.mxu0
        %v794 = vadd.f32 0.0, %v793
        %795 = vmatmul.f32.gmra.mxu0 %v674
        %v796 = vpop.f32.mrf.mxu0
        %v797 = vadd.f32 0.0, %v796
        %798 = vmatmul.f32.gmra.mxu0 %v677
        %v799 = vpop.f32.mrf.mxu0
        %v800 = vadd.f32 0.0, %v799
        %801 = vmatmul.f32.gmra.mxu0 %v680
        %v802 = vpop.f32.mrf.mxu0
        %v803 = vadd.f32 0.0, %v802
        %804 = vmatmul.f32.gmra.mxu0 %v683
        %v805 = vpop.f32.mrf.mxu0
        %v806 = vadd.f32 0.0, %v805
        %807 = vmatmul.f32.gmra.mxu0 %v686
        %v808 = vpop.f32.mrf.mxu0
        %v809 = vadd.f32 0.0, %v808
        %810 = vmatmul.f32.gmra.mxu0 %v689
        %v811 = vpop.f32.mrf.mxu0
        %v812 = vadd.f32 0.0, %v811
        %813 = vmatmul.f32.gmra.mxu0 %v692
        %v814 = vpop.f32.mrf.mxu0
        %v815 = vadd.f32 0.0, %v814
        %816 = vmatmul.f32.gmra.mxu0 %v695
        %v817 = vpop.f32.mrf.mxu0
        %v818 = vadd.f32 0.0, %v817
        %819 = vmatmul.f32.gmra.mxu0 %v698
        %v820 = vpop.f32.mrf.mxu0
        %v821 = vadd.f32 0.0, %v820
        %822 = vmatmul.f32.gmra.mxu0 %v701
        %v823 = vpop.f32.mrf.mxu0
        %v824 = vadd.f32 0.0, %v823
        %825 = vmatmul.f32.gmra.mxu0 %v704
        %v826 = vpop.f32.mrf.mxu0
        %v827 = vadd.f32 0.0, %v826
        %828 = vmatmul.f32.gmra.mxu0 %v707
        %v829 = vpop.f32.mrf.mxu0
        %v830 = vadd.f32 0.0, %v829
        %831 = vmatmul.f32.gmra.mxu0 %v710
        %v832 = vpop.f32.mrf.mxu0
        %v833 = vadd.f32 0.0, %v832
        %834 = vmatmul.f32.gmra.mxu0 %v713
        %v835 = vpop.f32.mrf.mxu0
        %v836 = vadd.f32 0.0, %v835
        %837 = vmatmul.f32.gmra.mxu0 %v716
        %v838 = vpop.f32.mrf.mxu0
        %v839 = vadd.f32 0.0, %v838
        %840 = vmatmul.f32.gmra.mxu0 %v719
        %v841 = vpop.f32.mrf.mxu0
        %v842 = vadd.f32 0.0, %v841
        %843 = vmatmul.f32.gmra.mxu0 %v722
        %v844 = vpop.f32.mrf.mxu0
        %v845 = vadd.f32 0.0, %v844
        %846 = vmatmul.f32.gmra.mxu0 %v725
        %v847 = vpop.f32.mrf.mxu0
        %v848 = vadd.f32 0.0, %v847
        %849 = vmatmul.f32.gmra.mxu0 %v728
        %v850 = vpop.f32.mrf.mxu0
        %v851 = vadd.f32 0.0, %v850
        %852 = vmatmul.f32.gmra.mxu0 %v731
        %v853 = vpop.f32.mrf.mxu0
        %v854 = vadd.f32 0.0, %v853
        %855 = vmatmul.f32.gmra.mxu0 %v734
        %v856 = vpop.f32.mrf.mxu0
        %v857 = vadd.f32 0.0, %v856
        %858 = vmatmul.f32.gmra.mxu0 %v737
        %v859 = vpop.f32.mrf.mxu0
        %v860 = vadd.f32 0.0, %v859
        %861 = vmatmul.f32.gmra.mxu0 %v740
        %v862 = vpop.f32.mrf.mxu0
        %v863 = vadd.f32 0.0, %v862
        %864 = vmatmul.f32.gmra.mxu0 %v743
        %v865 = vpop.f32.mrf.mxu0
        %v866 = vadd.f32 0.0, %v865
        %867 = vmatmul.f32.gmra.mxu0 %v746
        %v868 = vpop.f32.mrf.mxu0
        %v869 = vadd.f32 0.0, %v868
        %870 = vdwg.mxu0
        %871 = vmatpush.msra.mxu0 0.0
        %872 = vmatpush.msra.mxu0 0.0
        %873 = vmatpush.msra.mxu0 0.0
        %874 = vmatpush.msra.mxu0 0.0
        %875 = vmatpush.msra.mxu0 0.0
        %876 = vmatpush.msra.mxu0 0.0
        %877 = vmatpush.msra.mxu0 0.0
        %878 = vmatpush.msra.mxu0 0.0
        %879 = vmatpush.msra.mxu0 0.0
        %880 = vmatpush.msra.mxu0 0.0
        %881 = vmatpush.msra.mxu0 0.0
        %882 = vmatpush.msra.mxu0 0.0
        %883 = vmatpush.msra.mxu0 0.0
        %884 = vmatpush.msra.mxu0 0.0
        %885 = vmatpush.msra.mxu0 0.0
        %886 = vmatpush.msra.mxu0 %v753
        %887 = vmatmul.f32.gmra.mxu0 %v653
        %v888 = vpop.f32.mrf.mxu0
        %v889 = vadd.f32 0.0, %v888
        %890 = vmatmul.f32.gmra.mxu0 %v656
        %v891 = vpop.f32.mrf.mxu0
        %v892 = vadd.f32 0.0, %v891
        %893 = vmatmul.f32.gmra.mxu0 %v659
        %v894 = vpop.f32.mrf.mxu0
        %v895 = vadd.f32 0.0, %v894
        %896 = vmatmul.f32.gmra.mxu0 %v662
        %v897 = vpop.f32.mrf.mxu0
        %v898 = vadd.f32 0.0, %v897
        %899 = vmatmul.f32.gmra.mxu0 %v665
        %v900 = vpop.f32.mrf.mxu0
        %v901 = vadd.f32 0.0, %v900
        %902 = vmatmul.f32.gmra.mxu0 %v668
        %v903 = vpop.f32.mrf.mxu0
        %v904 = vadd.f32 0.0, %v903
        %905 = vmatmul.f32.gmra.mxu0 %v671
        %v906 = vpop.f32.mrf.mxu0
        %v907 = vadd.f32 0.0, %v906
        %908 = vmatmul.f32.gmra.mxu0 %v674
        %v909 = vpop.f32.mrf.mxu0
        %v910 = vadd.f32 0.0, %v909
        %911 = vmatmul.f32.gmra.mxu0 %v677
        %v912 = vpop.f32.mrf.mxu0
        %v913 = vadd.f32 0.0, %v912
        %914 = vmatmul.f32.gmra.mxu0 %v680
        %v915 = vpop.f32.mrf.mxu0
        %v916 = vadd.f32 0.0, %v915
        %917 = vmatmul.f32.gmra.mxu0 %v683
        %v918 = vpop.f32.mrf.mxu0
        %v919 = vadd.f32 0.0, %v918
        %920 = vmatmul.f32.gmra.mxu0 %v686
        %v921 = vpop.f32.mrf.mxu0
        %v922 = vadd.f32 0.0, %v921
        %923 = vmatmul.f32.gmra.mxu0 %v689
        %v924 = vpop.f32.mrf.mxu0
        %v925 = vadd.f32 0.0, %v924
        %926 = vmatmul.f32.gmra.mxu0 %v692
        %v927 = vpop.f32.mrf.mxu0
        %v928 = vadd.f32 0.0, %v927
        %929 = vmatmul.f32.gmra.mxu0 %v695
        %v930 = vpop.f32.mrf.mxu0
        %v931 = vadd.f32 0.0, %v930
        %932 = vmatmul.f32.gmra.mxu0 %v698
        %v933 = vpop.f32.mrf.mxu0
        %v934 = vadd.f32 0.0, %v933
        %935 = vmatmul.f32.gmra.mxu0 %v701
        %v936 = vpop.f32.mrf.mxu0
        %v937 = vadd.f32 0.0, %v936
        %938 = vmatmul.f32.gmra.mxu0 %v704
        %v939 = vpop.f32.mrf.mxu0
        %v940 = vadd.f32 0.0, %v939
        %941 = vmatmul.f32.gmra.mxu0 %v707
        %v942 = vpop.f32.mrf.mxu0
        %v943 = vadd.f32 0.0, %v942
        %944 = vmatmul.f32.gmra.mxu0 %v710
        %v945 = vpop.f32.mrf.mxu0
        %v946 = vadd.f32 0.0, %v945
        %947 = vmatmul.f32.gmra.mxu0 %v713
        %v948 = vpop.f32.mrf.mxu0
        %v949 = vadd.f32 0.0, %v948
        %950 = vmatmul.f32.gmra.mxu0 %v716
        %v951 = vpop.f32.mrf.mxu0
        %v952 = vadd.f32 0.0, %v951
        %953 = vmatmul.f32.gmra.mxu0 %v719
        %v954 = vpop.f32.mrf.mxu0
        %v955 = vadd.f32 0.0, %v954
        %956 = vmatmul.f32.gmra.mxu0 %v722
        %v957 = vpop.f32.mrf.mxu0
        %v958 = vadd.f32 0.0, %v957
        %959 = vmatmul.f32.gmra.mxu0 %v725
        %v960 = vpop.f32.mrf.mxu0
        %v961 = vadd.f32 0.0, %v960
        %962 = vmatmul.f32.gmra.mxu0 %v728
        %v963 = vpop.f32.mrf.mxu0
        %v964 = vadd.f32 0.0, %v963
        %965 = vmatmul.f32.gmra.mxu0 %v731
        %v966 = vpop.f32.mrf.mxu0
        %v967 = vadd.f32 0.0, %v966
        %968 = vmatmul.f32.gmra.mxu0 %v734
        %v969 = vpop.f32.mrf.mxu0
        %v970 = vadd.f32 0.0, %v969
        %971 = vmatmul.f32.gmra.mxu0 %v737
        %v972 = vpop.f32.mrf.mxu0
        %v973 = vadd.f32 0.0, %v972
        %974 = vmatmul.f32.gmra.mxu0 %v740
        %v975 = vpop.f32.mrf.mxu0
        %v976 = vadd.f32 0.0, %v975
        %977 = vmatmul.f32.gmra.mxu0 %v743
        %v978 = vpop.f32.mrf.mxu0
        %v979 = vadd.f32 0.0, %v978
        %980 = vmatmul.f32.gmra.mxu0 %v746
        %v981 = vpop.f32.mrf.mxu0
        %v982 = vadd.f32 0.0, %v981
        %983 = vdwg.mxu0
        %984 = vmatpush.msra.mxu0 0.0
        %985 = vmatpush.msra.mxu0 0.0
        %986 = vmatpush.msra.mxu0 0.0
        %987 = vmatpush.msra.mxu0 0.0
        %988 = vmatpush.msra.mxu0 0.0
        %989 = vmatpush.msra.mxu0 0.0
        %990 = vmatpush.msra.mxu0 0.0
        %991 = vmatpush.msra.mxu0 0.0
        %992 = vmatpush.msra.mxu0 0.0
        %993 = vmatpush.msra.mxu0 0.0
        %994 = vmatpush.msra.mxu0 0.0
        %995 = vmatpush.msra.mxu0 0.0
        %996 = vmatpush.msra.mxu0 0.0
        %997 = vmatpush.msra.mxu0 0.0
        %998 = vmatpush.msra.mxu0 0.0
        %999 = vmatpush.msra.mxu0 %v756
        %1000 = vmatmul.f32.gmra.mxu0 %v653
        %v1001 = vpop.f32.mrf.mxu0
        %v1002 = vadd.f32 0.0, %v1001
        %1003 = vmatmul.f32.gmra.mxu0 %v656
        %v1004 = vpop.f32.mrf.mxu0
        %v1005 = vadd.f32 0.0, %v1004
        %1006 = vmatmul.f32.gmra.mxu0 %v659
        %v1007 = vpop.f32.mrf.mxu0
        %v1008 = vadd.f32 0.0, %v1007
        %1009 = vmatmul.f32.gmra.mxu0 %v662
        %v1010 = vpop.f32.mrf.mxu0
        %v1011 = vadd.f32 0.0, %v1010
        %1012 = vmatmul.f32.gmra.mxu0 %v665
        %v1013 = vpop.f32.mrf.mxu0
        %v1014 = vadd.f32 0.0, %v1013
        %1015 = vmatmul.f32.gmra.mxu0 %v668
        %v1016 = vpop.f32.mrf.mxu0
        %v1017 = vadd.f32 0.0, %v1016
        %1018 = vmatmul.f32.gmra.mxu0 %v671
        %v1019 = vpop.f32.mrf.mxu0
        %v1020 = vadd.f32 0.0, %v1019
        %1021 = vmatmul.f32.gmra.mxu0 %v674
        %v1022 = vpop.f32.mrf.mxu0
        %v1023 = vadd.f32 0.0, %v1022
        %1024 = vmatmul.f32.gmra.mxu0 %v677
        %v1025 = vpop.f32.mrf.mxu0
        %v1026 = vadd.f32 0.0, %v1025
        %1027 = vmatmul.f32.gmra.mxu0 %v680
        %v1028 = vpop.f32.mrf.mxu0
        %v1029 = vadd.f32 0.0, %v1028
        %1030 = vmatmul.f32.gmra.mxu0 %v683
        %v1031 = vpop.f32.mrf.mxu0
        %v1032 = vadd.f32 0.0, %v1031
        %1033 = vmatmul.f32.gmra.mxu0 %v686
        %v1034 = vpop.f32.mrf.mxu0
        %v1035 = vadd.f32 0.0, %v1034
        %1036 = vmatmul.f32.gmra.mxu0 %v689
        %v1037 = vpop.f32.mrf.mxu0
        %v1038 = vadd.f32 0.0, %v1037
        %1039 = vmatmul.f32.gmra.mxu0 %v692
        %v1040 = vpop.f32.mrf.mxu0
        %v1041 = vadd.f32 0.0, %v1040
        %1042 = vmatmul.f32.gmra.mxu0 %v695
        %v1043 = vpop.f32.mrf.mxu0
        %v1044 = vadd.f32 0.0, %v1043
        %1045 = vmatmul.f32.gmra.mxu0 %v698
        %v1046 = vpop.f32.mrf.mxu0
        %v1047 = vadd.f32 0.0, %v1046
        %1048 = vmatmul.f32.gmra.mxu0 %v701
        %v1049 = vpop.f32.mrf.mxu0
        %v1050 = vadd.f32 0.0, %v1049
        %1051 = vmatmul.f32.gmra.mxu0 %v704
        %v1052 = vpop.f32.mrf.mxu0
        %v1053 = vadd.f32 0.0, %v1052
        %1054 = vmatmul.f32.gmra.mxu0 %v707
        %v1055 = vpop.f32.mrf.mxu0
        %v1056 = vadd.f32 0.0, %v1055
        %1057 = vmatmul.f32.gmra.mxu0 %v710
        %v1058 = vpop.f32.mrf.mxu0
        %v1059 = vadd.f32 0.0, %v1058
        %1060 = vmatmul.f32.gmra.mxu0 %v713
        %v1061 = vpop.f32.mrf.mxu0
        %v1062 = vadd.f32 0.0, %v1061
        %1063 = vmatmul.f32.gmra.mxu0 %v716
        %v1064 = vpop.f32.mrf.mxu0
        %v1065 = vadd.f32 0.0, %v1064
        %1066 = vmatmul.f32.gmra.mxu0 %v719
        %v1067 = vpop.f32.mrf.mxu0
        %v1068 = vadd.f32 0.0, %v1067
        %1069 = vmatmul.f32.gmra.mxu0 %v722
        %v1070 = vpop.f32.mrf.mxu0
        %v1071 = vadd.f32 0.0, %v1070
        %1072 = vmatmul.f32.gmra.mxu0 %v725
        %v1073 = vpop.f32.mrf.mxu0
        %v1074 = vadd.f32 0.0, %v1073
        %1075 = vmatmul.f32.gmra.mxu0 %v728
        %v1076 = vpop.f32.mrf.mxu0
        %v1077 = vadd.f32 0.0, %v1076
        %1078 = vmatmul.f32.gmra.mxu0 %v731
        %v1079 = vpop.f32.mrf.mxu0
        %v1080 = vadd.f32 0.0, %v1079
        %1081 = vmatmul.f32.gmra.mxu0 %v734
        %v1082 = vpop.f32.mrf.mxu0
        %v1083 = vadd.f32 0.0, %v1082
        %1084 = vmatmul.f32.gmra.mxu0 %v737
        %v1085 = vpop.f32.mrf.mxu0
        %v1086 = vadd.f32 0.0, %v1085
        %1087 = vmatmul.f32.gmra.mxu0 %v740
        %v1088 = vpop.f32.mrf.mxu0
        %v1089 = vadd.f32 0.0, %v1088
        %1090 = vmatmul.f32.gmra.mxu0 %v743
        %v1091 = vpop.f32.mrf.mxu0
        %v1092 = vadd.f32 0.0, %v1091
        %1093 = vmatmul.f32.gmra.mxu0 %v746
        %v1094 = vpop.f32.mrf.mxu0
        %v1095 = vadd.f32 0.0, %v1094
        %1096 = vdwg.mxu0
        %1097 = vmatpush.msra.mxu0 %v613
        %1098 = vmatpush.msra.mxu0 %v610
        %1099 = vmatpush.msra.mxu0 %v607
        %1100 = vmatpush.msra.mxu0 %v604
        %1101 = vmatpush.msra.mxu0 %v601
        %1102 = vmatpush.msra.mxu0 %v598
        %1103 = vmatpush.msra.mxu0 %v595
        %1104 = vmatpush.msra.mxu0 %v592
        %1105 = vmatpush.msra.mxu0 %v589
        %1106 = vmatpush.msra.mxu0 %v586
        %1107 = vmatpush.msra.mxu0 %v583
        %1108 = vmatpush.msra.mxu0 %v580
        %1109 = vmatpush.msra.mxu0 %v577
        %1110 = vmatpush.msra.mxu0 %v574
        %1111 = vmatpush.msra.mxu0 %v571
        %1112 = vmatpush.msra.mxu0 %v568
        %1113 = vmatmul.f32.gmra.mxu0 %v504
        %v1114 = vpop.f32.mrf.mxu0
        %v1115 = vadd.f32 %v776, %v1114
        %1116 = vmatmul.f32.gmra.mxu0 %v505
        %v1117 = vpop.f32.mrf.mxu0
        %v1118 = vadd.f32 %v779, %v1117
        %1119 = vmatmul.f32.gmra.mxu0 %v506
        %v1120 = vpop.f32.mrf.mxu0
        %v1121 = vadd.f32 %v782, %v1120
        %1122 = vmatmul.f32.gmra.mxu0 %v507
        %v1123 = vpop.f32.mrf.mxu0
        %v1124 = vadd.f32 %v785, %v1123
        %1125 = vmatmul.f32.gmra.mxu0 %v508
        %v1126 = vpop.f32.mrf.mxu0
        %v1127 = vadd.f32 %v788, %v1126
        %1128 = vmatmul.f32.gmra.mxu0 %v509
        %v1129 = vpop.f32.mrf.mxu0
        %v1130 = vadd.f32 %v791, %v1129
        %1131 = vmatmul.f32.gmra.mxu0 %v510
        %v1132 = vpop.f32.mrf.mxu0
        %v1133 = vadd.f32 %v794, %v1132
        %1134 = vmatmul.f32.gmra.mxu0 %v511
        %v1135 = vpop.f32.mrf.mxu0
        %v1136 = vadd.f32 %v797, %v1135
        %1137 = vmatmul.f32.gmra.mxu0 %v512
        %v1138 = vpop.f32.mrf.mxu0
        %v1139 = vadd.f32 %v800, %v1138
        %1140 = vmatmul.f32.gmra.mxu0 %v513
        %v1141 = vpop.f32.mrf.mxu0
        %v1142 = vadd.f32 %v803, %v1141
        %1143 = vmatmul.f32.gmra.mxu0 %v514
        %v1144 = vpop.f32.mrf.mxu0
        %v1145 = vadd.f32 %v806, %v1144
        %1146 = vmatmul.f32.gmra.mxu0 %v515
        %v1147 = vpop.f32.mrf.mxu0
        %v1148 = vadd.f32 %v809, %v1147
        %1149 = vmatmul.f32.gmra.mxu0 %v516
        %v1150 = vpop.f32.mrf.mxu0
        %v1151 = vadd.f32 %v812, %v1150
        %1152 = vmatmul.f32.gmra.mxu0 %v517
        %v1153 = vpop.f32.mrf.mxu0
        %v1154 = vadd.f32 %v815, %v1153
        %1155 = vmatmul.f32.gmra.mxu0 %v518
        %v1156 = vpop.f32.mrf.mxu0
        %v1157 = vadd.f32 %v818, %v1156
        %1158 = vmatmul.f32.gmra.mxu0 %v519
        %v1159 = vpop.f32.mrf.mxu0
        %v1160 = vadd.f32 %v821, %v1159
        %1161 = vmatmul.f32.gmra.mxu0 %v520
        %v1162 = vpop.f32.mrf.mxu0
        %v1163 = vadd.f32 %v824, %v1162
        %1164 = vmatmul.f32.gmra.mxu0 %v521
        %v1165 = vpop.f32.mrf.mxu0
        %v1166 = vadd.f32 %v827, %v1165
        %1167 = vmatmul.f32.gmra.mxu0 %v522
        %v1168 = vpop.f32.mrf.mxu0
        %v1169 = vadd.f32 %v830, %v1168
        %1170 = vmatmul.f32.gmra.mxu0 %v523
        %v1171 = vpop.f32.mrf.mxu0
        %v1172 = vadd.f32 %v833, %v1171
        %1173 = vmatmul.f32.gmra.mxu0 %v524
        %v1174 = vpop.f32.mrf.mxu0
        %v1175 = vadd.f32 %v836, %v1174
        %1176 = vmatmul.f32.gmra.mxu0 %v525
        %v1177 = vpop.f32.mrf.mxu0
        %v1178 = vadd.f32 %v839, %v1177
        %1179 = vmatmul.f32.gmra.mxu0 %v526
        %v1180 = vpop.f32.mrf.mxu0
        %v1181 = vadd.f32 %v842, %v1180
        %1182 = vmatmul.f32.gmra.mxu0 %v527
        %v1183 = vpop.f32.mrf.mxu0
        %v1184 = vadd.f32 %v845, %v1183
        %1185 = vmatmul.f32.gmra.mxu0 %v528
        %v1186 = vpop.f32.mrf.mxu0
        %v1187 = vadd.f32 %v848, %v1186
        %1188 = vmatmul.f32.gmra.mxu0 %v529
        %v1189 = vpop.f32.mrf.mxu0
        %v1190 = vadd.f32 %v851, %v1189
        %1191 = vmatmul.f32.gmra.mxu0 %v530
        %v1192 = vpop.f32.mrf.mxu0
        %v1193 = vadd.f32 %v854, %v1192
        %1194 = vmatmul.f32.gmra.mxu0 %v531
        %v1195 = vpop.f32.mrf.mxu0
        %v1196 = vadd.f32 %v857, %v1195
        %1197 = vmatmul.f32.gmra.mxu0 %v532
        %v1198 = vpop.f32.mrf.mxu0
        %v1199 = vadd.f32 %v860, %v1198
        %1200 = vmatmul.f32.gmra.mxu0 %v533
        %v1201 = vpop.f32.mrf.mxu0
        %v1202 = vadd.f32 %v863, %v1201
        %1203 = vmatmul.f32.gmra.mxu0 %v534
        %v1204 = vpop.f32.mrf.mxu0
        %v1205 = vadd.f32 %v866, %v1204
        %1206 = vmatmul.f32.gmra.mxu0 %v535
        %v1207 = vpop.f32.mrf.mxu0
        %v1208 = vadd.f32 %v869, %v1207
        %1209 = vdwg.mxu0
        %1210 = vmatpush.msra.mxu0 %v614
        %1211 = vmatpush.msra.mxu0 %v611
        %1212 = vmatpush.msra.mxu0 %v608
        %1213 = vmatpush.msra.mxu0 %v605
        %1214 = vmatpush.msra.mxu0 %v602
        %1215 = vmatpush.msra.mxu0 %v599
        %1216 = vmatpush.msra.mxu0 %v596
        %1217 = vmatpush.msra.mxu0 %v593
        %1218 = vmatpush.msra.mxu0 %v590
        %1219 = vmatpush.msra.mxu0 %v587
        %1220 = vmatpush.msra.mxu0 %v584
        %1221 = vmatpush.msra.mxu0 %v581
        %1222 = vmatpush.msra.mxu0 %v578
        %1223 = vmatpush.msra.mxu0 %v575
        %1224 = vmatpush.msra.mxu0 %v572
        %1225 = vmatpush.msra.mxu0 %v569
        %1226 = vmatmul.f32.gmra.mxu0 %v504
        %v1227 = vpop.f32.mrf.mxu0
        %v1228 = vadd.f32 %v889, %v1227
        %1229 = vmatmul.f32.gmra.mxu0 %v505
        %v1230 = vpop.f32.mrf.mxu0
        %v1231 = vadd.f32 %v892, %v1230
        %1232 = vmatmul.f32.gmra.mxu0 %v506
        %v1233 = vpop.f32.mrf.mxu0
        %v1234 = vadd.f32 %v895, %v1233
        %1235 = vmatmul.f32.gmra.mxu0 %v507
        %v1236 = vpop.f32.mrf.mxu0
        %v1237 = vadd.f32 %v898, %v1236
        %1238 = vmatmul.f32.gmra.mxu0 %v508
        %v1239 = vpop.f32.mrf.mxu0
        %v1240 = vadd.f32 %v901, %v1239
        %1241 = vmatmul.f32.gmra.mxu0 %v509
        %v1242 = vpop.f32.mrf.mxu0
        %v1243 = vadd.f32 %v904, %v1242
        %1244 = vmatmul.f32.gmra.mxu0 %v510
        %v1245 = vpop.f32.mrf.mxu0
        %v1246 = vadd.f32 %v907, %v1245
        %1247 = vmatmul.f32.gmra.mxu0 %v511
        %v1248 = vpop.f32.mrf.mxu0
        %v1249 = vadd.f32 %v910, %v1248
        %1250 = vmatmul.f32.gmra.mxu0 %v512
        %v1251 = vpop.f32.mrf.mxu0
        %v1252 = vadd.f32 %v913, %v1251
        %1253 = vmatmul.f32.gmra.mxu0 %v513
        %v1254 = vpop.f32.mrf.mxu0
        %v1255 = vadd.f32 %v916, %v1254
        %1256 = vmatmul.f32.gmra.mxu0 %v514
        %v1257 = vpop.f32.mrf.mxu0
        %v1258 = vadd.f32 %v919, %v1257
        %1259 = vmatmul.f32.gmra.mxu0 %v515
        %v1260 = vpop.f32.mrf.mxu0
        %v1261 = vadd.f32 %v922, %v1260
        %1262 = vmatmul.f32.gmra.mxu0 %v516
        %v1263 = vpop.f32.mrf.mxu0
        %v1264 = vadd.f32 %v925, %v1263
        %1265 = vmatmul.f32.gmra.mxu0 %v517
        %v1266 = vpop.f32.mrf.mxu0
        %v1267 = vadd.f32 %v928, %v1266
        %1268 = vmatmul.f32.gmra.mxu0 %v518
        %v1269 = vpop.f32.mrf.mxu0
        %v1270 = vadd.f32 %v931, %v1269
        %1271 = vmatmul.f32.gmra.mxu0 %v519
        %v1272 = vpop.f32.mrf.mxu0
        %v1273 = vadd.f32 %v934, %v1272
        %1274 = vmatmul.f32.gmra.mxu0 %v520
        %v1275 = vpop.f32.mrf.mxu0
        %v1276 = vadd.f32 %v937, %v1275
        %1277 = vmatmul.f32.gmra.mxu0 %v521
        %v1278 = vpop.f32.mrf.mxu0
        %v1279 = vadd.f32 %v940, %v1278
        %1280 = vmatmul.f32.gmra.mxu0 %v522
        %v1281 = vpop.f32.mrf.mxu0
        %v1282 = vadd.f32 %v943, %v1281
        %1283 = vmatmul.f32.gmra.mxu0 %v523
        %v1284 = vpop.f32.mrf.mxu0
        %v1285 = vadd.f32 %v946, %v1284
        %1286 = vmatmul.f32.gmra.mxu0 %v524
        %v1287 = vpop.f32.mrf.mxu0
        %v1288 = vadd.f32 %v949, %v1287
        %1289 = vmatmul.f32.gmra.mxu0 %v525
        %v1290 = vpop.f32.mrf.mxu0
        %v1291 = vadd.f32 %v952, %v1290
        %1292 = vmatmul.f32.gmra.mxu0 %v526
        %v1293 = vpop.f32.mrf.mxu0
        %v1294 = vadd.f32 %v955, %v1293
        %1295 = vmatmul.f32.gmra.mxu0 %v527
        %v1296 = vpop.f32.mrf.mxu0
        %v1297 = vadd.f32 %v958, %v1296
        %1298 = vmatmul.f32.gmra.mxu0 %v528
        %v1299 = vpop.f32.mrf.mxu0
        %v1300 = vadd.f32 %v961, %v1299
        %1301 = vmatmul.f32.gmra.mxu0 %v529
        %v1302 = vpop.f32.mrf.mxu0
        %v1303 = vadd.f32 %v964, %v1302
        %1304 = vmatmul.f32.gmra.mxu0 %v530
        %v1305 = vpop.f32.mrf.mxu0
        %v1306 = vadd.f32 %v967, %v1305
        %1307 = vmatmul.f32.gmra.mxu0 %v531
        %v1308 = vpop.f32.mrf.mxu0
        %v1309 = vadd.f32 %v970, %v1308
        %1310 = vmatmul.f32.gmra.mxu0 %v532
        %v1311 = vpop.f32.mrf.mxu0
        %v1312 = vadd.f32 %v973, %v1311
        %1313 = vmatmul.f32.gmra.mxu0 %v533
        %v1314 = vpop.f32.mrf.mxu0
        %v1315 = vadd.f32 %v976, %v1314
        %1316 = vmatmul.f32.gmra.mxu0 %v534
        %v1317 = vpop.f32.mrf.mxu0
        %v1318 = vadd.f32 %v979, %v1317
        %1319 = vmatmul.f32.gmra.mxu0 %v535
        %v1320 = vpop.f32.mrf.mxu0
        %v1321 = vadd.f32 %v982, %v1320
        %1322 = vdwg.mxu0
        %1323 = vmatpush.msra.mxu0 %v615
        %1324 = vmatpush.msra.mxu0 %v612
        %1325 = vmatpush.msra.mxu0 %v609
        %1326 = vmatpush.msra.mxu0 %v606
        %1327 = vmatpush.msra.mxu0 %v603
        %1328 = vmatpush.msra.mxu0 %v600
        %1329 = vmatpush.msra.mxu0 %v597
        %1330 = vmatpush.msra.mxu0 %v594
        %1331 = vmatpush.msra.mxu0 %v591
        %1332 = vmatpush.msra.mxu0 %v588
        %1333 = vmatpush.msra.mxu0 %v585
        %1334 = vmatpush.msra.mxu0 %v582
        %1335 = vmatpush.msra.mxu0 %v579
        %1336 = vmatpush.msra.mxu0 %v576
        %1337 = vmatpush.msra.mxu0 %v573
        %1338 = vmatpush.msra.mxu0 %v570
        %1339 = vmatmul.f32.gmra.mxu0 %v504
        %v1340 = vpop.f32.mrf.mxu0
        %v1341 = vadd.f32 %v1002, %v1340
        %1342 = vmatmul.f32.gmra.mxu0 %v505
        %v1343 = vpop.f32.mrf.mxu0
        %v1344 = vadd.f32 %v1005, %v1343
        %1345 = vmatmul.f32.gmra.mxu0 %v506
        %v1346 = vpop.f32.mrf.mxu0
        %v1347 = vadd.f32 %v1008, %v1346
        %1348 = vmatmul.f32.gmra.mxu0 %v507
        %v1349 = vpop.f32.mrf.mxu0
        %v1350 = vadd.f32 %v1011, %v1349
        %1351 = vmatmul.f32.gmra.mxu0 %v508
        %v1352 = vpop.f32.mrf.mxu0
        %v1353 = vadd.f32 %v1014, %v1352
        %1354 = vmatmul.f32.gmra.mxu0 %v509
        %v1355 = vpop.f32.mrf.mxu0
        %v1356 = vadd.f32 %v1017, %v1355
        %1357 = vmatmul.f32.gmra.mxu0 %v510
        %v1358 = vpop.f32.mrf.mxu0
        %v1359 = vadd.f32 %v1020, %v1358
        %1360 = vmatmul.f32.gmra.mxu0 %v511
        %v1361 = vpop.f32.mrf.mxu0
        %v1362 = vadd.f32 %v1023, %v1361
        %1363 = vmatmul.f32.gmra.mxu0 %v512
        %v1364 = vpop.f32.mrf.mxu0
        %v1365 = vadd.f32 %v1026, %v1364
        %1366 = vmatmul.f32.gmra.mxu0 %v513
        %v1367 = vpop.f32.mrf.mxu0
        %v1368 = vadd.f32 %v1029, %v1367
        %1369 = vmatmul.f32.gmra.mxu0 %v514
        %v1370 = vpop.f32.mrf.mxu0
        %v1371 = vadd.f32 %v1032, %v1370
        %1372 = vmatmul.f32.gmra.mxu0 %v515
        %v1373 = vpop.f32.mrf.mxu0
        %v1374 = vadd.f32 %v1035, %v1373
        %1375 = vmatmul.f32.gmra.mxu0 %v516
        %v1376 = vpop.f32.mrf.mxu0
        %v1377 = vadd.f32 %v1038, %v1376
        %1378 = vmatmul.f32.gmra.mxu0 %v517
        %v1379 = vpop.f32.mrf.mxu0
        %v1380 = vadd.f32 %v1041, %v1379
        %1381 = vmatmul.f32.gmra.mxu0 %v518
        %v1382 = vpop.f32.mrf.mxu0
        %v1383 = vadd.f32 %v1044, %v1382
        %1384 = vmatmul.f32.gmra.mxu0 %v519
        %v1385 = vpop.f32.mrf.mxu0
        %v1386 = vadd.f32 %v1047, %v1385
        %1387 = vmatmul.f32.gmra.mxu0 %v520
        %v1388 = vpop.f32.mrf.mxu0
        %v1389 = vadd.f32 %v1050, %v1388
        %1390 = vmatmul.f32.gmra.mxu0 %v521
        %v1391 = vpop.f32.mrf.mxu0
        %v1392 = vadd.f32 %v1053, %v1391
        %1393 = vmatmul.f32.gmra.mxu0 %v522
        %v1394 = vpop.f32.mrf.mxu0
        %v1395 = vadd.f32 %v1056, %v1394
        %1396 = vmatmul.f32.gmra.mxu0 %v523
        %v1397 = vpop.f32.mrf.mxu0
        %v1398 = vadd.f32 %v1059, %v1397
        %1399 = vmatmul.f32.gmra.mxu0 %v524
        %v1400 = vpop.f32.mrf.mxu0
        %v1401 = vadd.f32 %v1062, %v1400
        %1402 = vmatmul.f32.gmra.mxu0 %v525
        %v1403 = vpop.f32.mrf.mxu0
        %v1404 = vadd.f32 %v1065, %v1403
        %1405 = vmatmul.f32.gmra.mxu0 %v526
        %v1406 = vpop.f32.mrf.mxu0
        %v1407 = vadd.f32 %v1068, %v1406
        %1408 = vmatmul.f32.gmra.mxu0 %v527
        %v1409 = vpop.f32.mrf.mxu0
        %v1410 = vadd.f32 %v1071, %v1409
        %1411 = vmatmul.f32.gmra.mxu0 %v528
        %v1412 = vpop.f32.mrf.mxu0
        %v1413 = vadd.f32 %v1074, %v1412
        %1414 = vmatmul.f32.gmra.mxu0 %v529
        %v1415 = vpop.f32.mrf.mxu0
        %v1416 = vadd.f32 %v1077, %v1415
        %1417 = vmatmul.f32.gmra.mxu0 %v530
        %v1418 = vpop.f32.mrf.mxu0
        %v1419 = vadd.f32 %v1080, %v1418
        %1420 = vmatmul.f32.gmra.mxu0 %v531
        %v1421 = vpop.f32.mrf.mxu0
        %v1422 = vadd.f32 %v1083, %v1421
        %1423 = vmatmul.f32.gmra.mxu0 %v532
        %v1424 = vpop.f32.mrf.mxu0
        %v1425 = vadd.f32 %v1086, %v1424
        %1426 = vmatmul.f32.gmra.mxu0 %v533
        %v1427 = vpop.f32.mrf.mxu0
        %v1428 = vadd.f32 %v1089, %v1427
        %1429 = vmatmul.f32.gmra.mxu0 %v534
        %v1430 = vpop.f32.mrf.mxu0
        %v1431 = vadd.f32 %v1092, %v1430
        %1432 = vmatmul.f32.gmra.mxu0 %v535
        %v1433 = vpop.f32.mrf.mxu0
        %v1434 = vadd.f32 %v1095, %v1433
        %1435 = vdwg.mxu0
        %v1436 = vld [vmem:[%s495] sm:$0xff]
        %v1437 = vld [vmem:[%s495 + $0x8] sm:$0xff]
        %v1438 = vld [vmem:[%s495 + $0x10] sm:$0xff]
        %v1439 = vld [vmem:[%s495 + $0x18] sm:$0xff]
        %v1440 = vld [vmem:[%s495 + $0x20] sm:$0xff]
        %v1441 = vld [vmem:[%s495 + $0x28] sm:$0xff]
        %v1442 = vld [vmem:[%s495 + $0x30] sm:$0xff]
        %v1443 = vld [vmem:[%s495 + $0x38] sm:$0xff]
        %v1444 = vld [vmem:[%s495 + $0x40] sm:$0xff]
        %v1445 = vld [vmem:[%s495 + $0x48] sm:$0xff]
        %v1446 = vld [vmem:[%s495 + $0x50] sm:$0xff]
        %v1447 = vld [vmem:[%s495 + $0x58] sm:$0xff]
        %v1448 = vld [vmem:[%s495 + $0x60] sm:$0xff]
        %v1449 = vld [vmem:[%s495 + $0x68] sm:$0xff]
        %v1450 = vld [vmem:[%s495 + $0x70] sm:$0xff]
        %v1451 = vld [vmem:[%s495 + $0x78] sm:$0xff]
        %v1452 = vld [vmem:[%s495 + $0x80] sm:$0xff]
        %v1453 = vld [vmem:[%s495 + $0x88] sm:$0xff]
        %v1454 = vld [vmem:[%s495 + $0x90] sm:$0xff]
        %v1455 = vld [vmem:[%s495 + $0x98] sm:$0xff]
        %v1456 = vld [vmem:[%s495 + $0xa0] sm:$0xff]
        %v1457 = vld [vmem:[%s495 + $0xa8] sm:$0xff]
        %v1458 = vld [vmem:[%s495 + $0xb0] sm:$0xff]
        %v1459 = vld [vmem:[%s495 + $0xb8] sm:$0xff]
        %v1460 = vld [vmem:[%s495 + $0xc0] sm:$0xff]
        %v1461 = vld [vmem:[%s495 + $0xc8] sm:$0xff]
        %v1462 = vld [vmem:[%s495 + $0xd0] sm:$0xff]
        %v1463 = vld [vmem:[%s495 + $0xd8] sm:$0xff]
        %v1464 = vld [vmem:[%s495 + $0xe0] sm:$0xff]
        %v1465 = vld [vmem:[%s495 + $0xe8] sm:$0xff]
        %v1466 = vld [vmem:[%s495 + $0xf0] sm:$0xff]
        %v1467 = vld [vmem:[%s495 + $0xf8] sm:$0xff]
        %v1468 = vld [vmem:[%s5] sm:$0x7]
        %1470 = vset.pattern.permute.xlu0 0
        %1471 = vperm.xlu0 %1470, %v1436
        %v1472 = vpop.permute.xlu0 %1471
        %1475 = vset.pattern.permute.xlu0 0
        %1476 = vperm.xlu0 %1475, %v1437
        %v1477 = vpop.permute.xlu0 %1476
        %1480 = vset.pattern.permute.xlu0 0
        %1481 = vperm.xlu0 %1480, %v1438
        %v1482 = vpop.permute.xlu0 %1481
        %1485 = vset.pattern.permute.xlu0 0
        %1486 = vperm.xlu0 %1485, %v1439
        %v1487 = vpop.permute.xlu0 %1486
        %1490 = vset.pattern.permute.xlu0 0
        %1491 = vperm.xlu0 %1490, %v1440
        %v1492 = vpop.permute.xlu0 %1491
        %1495 = vset.pattern.permute.xlu0 0
        %1496 = vperm.xlu0 %1495, %v1441
        %v1497 = vpop.permute.xlu0 %1496
        %1500 = vset.pattern.permute.xlu0 0
        %1501 = vperm.xlu0 %1500, %v1442
        %v1502 = vpop.permute.xlu0 %1501
        %1505 = vset.pattern.permute.xlu0 0
        %1506 = vperm.xlu0 %1505, %v1443
        %v1507 = vpop.permute.xlu0 %1506
        %1510 = vset.pattern.permute.xlu0 0
        %1511 = vperm.xlu0 %1510, %v1444
        %v1512 = vpop.permute.xlu0 %1511
        %1515 = vset.pattern.permute.xlu0 0
        %1516 = vperm.xlu0 %1515, %v1445
        %v1517 = vpop.permute.xlu0 %1516
        %1520 = vset.pattern.permute.xlu0 0
        %1521 = vperm.xlu0 %1520, %v1446
        %v1522 = vpop.permute.xlu0 %1521
        %1525 = vset.pattern.permute.xlu0 0
        %1526 = vperm.xlu0 %1525, %v1447
        %v1527 = vpop.permute.xlu0 %1526
        %1530 = vset.pattern.permute.xlu0 0
        %1531 = vperm.xlu0 %1530, %v1448
        %v1532 = vpop.permute.xlu0 %1531
        %1535 = vset.pattern.permute.xlu0 0
        %1536 = vperm.xlu0 %1535, %v1449
        %v1537 = vpop.permute.xlu0 %1536
        %1540 = vset.pattern.permute.xlu0 0
        %1541 = vperm.xlu0 %1540, %v1450
        %v1542 = vpop.permute.xlu0 %1541
        %1545 = vset.pattern.permute.xlu0 0
        %1546 = vperm.xlu0 %1545, %v1451
        %v1547 = vpop.permute.xlu0 %1546
        %1550 = vset.pattern.permute.xlu0 0
        %1551 = vperm.xlu0 %1550, %v1452
        %v1552 = vpop.permute.xlu0 %1551
        %1555 = vset.pattern.permute.xlu0 0
        %1556 = vperm.xlu0 %1555, %v1453
        %v1557 = vpop.permute.xlu0 %1556
        %1560 = vset.pattern.permute.xlu0 0
        %1561 = vperm.xlu0 %1560, %v1454
        %v1562 = vpop.permute.xlu0 %1561
        %1565 = vset.pattern.permute.xlu0 0
        %1566 = vperm.xlu0 %1565, %v1455
        %v1567 = vpop.permute.xlu0 %1566
        %1570 = vset.pattern.permute.xlu0 0
        %1571 = vperm.xlu0 %1570, %v1456
        %v1572 = vpop.permute.xlu0 %1571
        %1575 = vset.pattern.permute.xlu0 0
        %1576 = vperm.xlu0 %1575, %v1457
        %v1577 = vpop.permute.xlu0 %1576
        %1580 = vset.pattern.permute.xlu0 0
        %1581 = vperm.xlu0 %1580, %v1458
        %v1582 = vpop.permute.xlu0 %1581
        %1585 = vset.pattern.permute.xlu0 0
        %1586 = vperm.xlu0 %1585, %v1459
        %v1587 = vpop.permute.xlu0 %1586
        %1590 = vset.pattern.permute.xlu0 0
        %1591 = vperm.xlu0 %1590, %v1460
        %v1592 = vpop.permute.xlu0 %1591
        %1595 = vset.pattern.permute.xlu0 0
        %1596 = vperm.xlu0 %1595, %v1461
        %v1597 = vpop.permute.xlu0 %1596
        %1600 = vset.pattern.permute.xlu0 0
        %1601 = vperm.xlu0 %1600, %v1462
        %v1602 = vpop.permute.xlu0 %1601
        %1605 = vset.pattern.permute.xlu0 0
        %1606 = vperm.xlu0 %1605, %v1463
        %v1607 = vpop.permute.xlu0 %1606
        %1610 = vset.pattern.permute.xlu0 0
        %1611 = vperm.xlu0 %1610, %v1464
        %v1612 = vpop.permute.xlu0 %1611
        %1615 = vset.pattern.permute.xlu0 0
        %1616 = vperm.xlu0 %1615, %v1465
        %v1617 = vpop.permute.xlu0 %1616
        %1620 = vset.pattern.permute.xlu0 0
        %1621 = vperm.xlu0 %1620, %v1466
        %v1622 = vpop.permute.xlu0 %1621
        %1625 = vset.pattern.permute.xlu0 0
        %1626 = vperm.xlu0 %1625, %v1467
        %v1627 = vpop.permute.xlu0 %1626
        %v1630 = vperm.slane %v1468, 0
        %v1631 = vperm.slane %v1468, 1
        %v1632 = vperm.slane %v1468, 2
        %v1636 = vmul.f32 %v1472, %v1630
        %v1637 = vmul.f32 %v1472, %v1631
        %v1638 = vmul.f32 %v1472, %v1632
        %v1639 = vmul.f32 %v1477, %v1630
        %v1640 = vmul.f32 %v1477, %v1631
        %v1641 = vmul.f32 %v1477, %v1632
        %v1642 = vmul.f32 %v1482, %v1630
        %v1643 = vmul.f32 %v1482, %v1631
        %v1644 = vmul.f32 %v1482, %v1632
        %v1645 = vmul.f32 %v1487, %v1630
        %v1646 = vmul.f32 %v1487, %v1631
        %v1647 = vmul.f32 %v1487, %v1632
        %v1648 = vmul.f32 %v1492, %v1630
        %v1649 = vmul.f32 %v1492, %v1631
        %v1650 = vmul.f32 %v1492, %v1632
        %v1651 = vmul.f32 %v1497, %v1630
        %v1652 = vmul.f32 %v1497, %v1631
        %v1653 = vmul.f32 %v1497, %v1632
        %v1654 = vmul.f32 %v1502, %v1630
        %v1655 = vmul.f32 %v1502, %v1631
        %v1656 = vmul.f32 %v1502, %v1632
        %v1657 = vmul.f32 %v1507, %v1630
        %v1658 = vmul.f32 %v1507, %v1631
        %v1659 = vmul.f32 %v1507, %v1632
        %v1660 = vmul.f32 %v1512, %v1630
        %v1661 = vmul.f32 %v1512, %v1631
        %v1662 = vmul.f32 %v1512, %v1632
        %v1663 = vmul.f32 %v1517, %v1630
        %v1664 = vmul.f32 %v1517, %v1631
        %v1665 = vmul.f32 %v1517, %v1632
        %v1666 = vmul.f32 %v1522, %v1630
        %v1667 = vmul.f32 %v1522, %v1631
        %v1668 = vmul.f32 %v1522, %v1632
        %v1669 = vmul.f32 %v1527, %v1630
        %v1670 = vmul.f32 %v1527, %v1631
        %v1671 = vmul.f32 %v1527, %v1632
        %v1672 = vmul.f32 %v1532, %v1630
        %v1673 = vmul.f32 %v1532, %v1631
        %v1674 = vmul.f32 %v1532, %v1632
        %v1675 = vmul.f32 %v1537, %v1630
        %v1676 = vmul.f32 %v1537, %v1631
        %v1677 = vmul.f32 %v1537, %v1632
        %v1678 = vmul.f32 %v1542, %v1630
        %v1679 = vmul.f32 %v1542, %v1631
        %v1680 = vmul.f32 %v1542, %v1632
        %v1681 = vmul.f32 %v1547, %v1630
        %v1682 = vmul.f32 %v1547, %v1631
        %v1683 = vmul.f32 %v1547, %v1632
        %v1684 = vmul.f32 %v1552, %v1630
        %v1685 = vmul.f32 %v1552, %v1631
        %v1686 = vmul.f32 %v1552, %v1632
        %v1687 = vmul.f32 %v1557, %v1630
        %v1688 = vmul.f32 %v1557, %v1631
        %v1689 = vmul.f32 %v1557, %v1632
        %v1690 = vmul.f32 %v1562, %v1630
        %v1691 = vmul.f32 %v1562, %v1631
        %v1692 = vmul.f32 %v1562, %v1632
        %v1693 = vmul.f32 %v1567, %v1630
        %v1694 = vmul.f32 %v1567, %v1631
        %v1695 = vmul.f32 %v1567, %v1632
        %v1696 = vmul.f32 %v1572, %v1630
        %v1697 = vmul.f32 %v1572, %v1631
        %v1698 = vmul.f32 %v1572, %v1632
        %v1699 = vmul.f32 %v1577, %v1630
        %v1700 = vmul.f32 %v1577, %v1631
        %v1701 = vmul.f32 %v1577, %v1632
        %v1702 = vmul.f32 %v1582, %v1630
        %v1703 = vmul.f32 %v1582, %v1631
        %v1704 = vmul.f32 %v1582, %v1632
        %v1705 = vmul.f32 %v1587, %v1630
        %v1706 = vmul.f32 %v1587, %v1631
        %v1707 = vmul.f32 %v1587, %v1632
        %v1708 = vmul.f32 %v1592, %v1630
        %v1709 = vmul.f32 %v1592, %v1631
        %v1710 = vmul.f32 %v1592, %v1632
        %v1711 = vmul.f32 %v1597, %v1630
        %v1712 = vmul.f32 %v1597, %v1631
        %v1713 = vmul.f32 %v1597, %v1632
        %v1714 = vmul.f32 %v1602, %v1630
        %v1715 = vmul.f32 %v1602, %v1631
        %v1716 = vmul.f32 %v1602, %v1632
        %v1717 = vmul.f32 %v1607, %v1630
        %v1718 = vmul.f32 %v1607, %v1631
        %v1719 = vmul.f32 %v1607, %v1632
        %v1720 = vmul.f32 %v1612, %v1630
        %v1721 = vmul.f32 %v1612, %v1631
        %v1722 = vmul.f32 %v1612, %v1632
        %v1723 = vmul.f32 %v1617, %v1630
        %v1724 = vmul.f32 %v1617, %v1631
        %v1725 = vmul.f32 %v1617, %v1632
        %v1726 = vmul.f32 %v1622, %v1630
        %v1727 = vmul.f32 %v1622, %v1631
        %v1728 = vmul.f32 %v1622, %v1632
        %v1729 = vmul.f32 %v1627, %v1630
        %v1730 = vmul.f32 %v1627, %v1631
        %v1731 = vmul.f32 %v1627, %v1632
        %v1732 = vadd.f32 %v1115, %v1636
        %v1733 = vadd.f32 %v1228, %v1637
        %v1734 = vadd.f32 %v1341, %v1638
        %v1735 = vadd.f32 %v1118, %v1639
        %v1736 = vadd.f32 %v1231, %v1640
        %v1737 = vadd.f32 %v1344, %v1641
        %v1738 = vadd.f32 %v1121, %v1642
        %v1739 = vadd.f32 %v1234, %v1643
        %v1740 = vadd.f32 %v1347, %v1644
        %v1741 = vadd.f32 %v1124, %v1645
        %v1742 = vadd.f32 %v1237, %v1646
        %v1743 = vadd.f32 %v1350, %v1647
        %v1744 = vadd.f32 %v1127, %v1648
        %v1745 = vadd.f32 %v1240, %v1649
        %v1746 = vadd.f32 %v1353, %v1650
        %v1747 = vadd.f32 %v1130, %v1651
        %v1748 = vadd.f32 %v1243, %v1652
        %v1749 = vadd.f32 %v1356, %v1653
        %v1750 = vadd.f32 %v1133, %v1654
        %v1751 = vadd.f32 %v1246, %v1655
        %v1752 = vadd.f32 %v1359, %v1656
        %v1753 = vadd.f32 %v1136, %v1657
        %v1754 = vadd.f32 %v1249, %v1658
        %v1755 = vadd.f32 %v1362, %v1659
        %v1756 = vadd.f32 %v1139, %v1660
        %v1757 = vadd.f32 %v1252, %v1661
        %v1758 = vadd.f32 %v1365, %v1662
        %v1759 = vadd.f32 %v1142, %v1663
        %v1760 = vadd.f32 %v1255, %v1664
        %v1761 = vadd.f32 %v1368, %v1665
        %v1762 = vadd.f32 %v1145, %v1666
        %v1763 = vadd.f32 %v1258, %v1667
        %v1764 = vadd.f32 %v1371, %v1668
        %v1765 = vadd.f32 %v1148, %v1669
        %v1766 = vadd.f32 %v1261, %v1670
        %v1767 = vadd.f32 %v1374, %v1671
        %v1768 = vadd.f32 %v1151, %v1672
        %v1769 = vadd.f32 %v1264, %v1673
        %v1770 = vadd.f32 %v1377, %v1674
        %v1771 = vadd.f32 %v1154, %v1675
        %v1772 = vadd.f32 %v1267, %v1676
        %v1773 = vadd.f32 %v1380, %v1677
        %v1774 = vadd.f32 %v1157, %v1678
        %v1775 = vadd.f32 %v1270, %v1679
        %v1776 = vadd.f32 %v1383, %v1680
        %v1777 = vadd.f32 %v1160, %v1681
        %v1778 = vadd.f32 %v1273, %v1682
        %v1779 = vadd.f32 %v1386, %v1683
        %v1780 = vadd.f32 %v1163, %v1684
        %v1781 = vadd.f32 %v1276, %v1685
        %v1782 = vadd.f32 %v1389, %v1686
        %v1783 = vadd.f32 %v1166, %v1687
        %v1784 = vadd.f32 %v1279, %v1688
        %v1785 = vadd.f32 %v1392, %v1689
        %v1786 = vadd.f32 %v1169, %v1690
        %v1787 = vadd.f32 %v1282, %v1691
        %v1788 = vadd.f32 %v1395, %v1692
        %v1789 = vadd.f32 %v1172, %v1693
        %v1790 = vadd.f32 %v1285, %v1694
        %v1791 = vadd.f32 %v1398, %v1695
        %v1792 = vadd.f32 %v1175, %v1696
        %v1793 = vadd.f32 %v1288, %v1697
        %v1794 = vadd.f32 %v1401, %v1698
        %v1795 = vadd.f32 %v1178, %v1699
        %v1796 = vadd.f32 %v1291, %v1700
        %v1797 = vadd.f32 %v1404, %v1701
        %v1798 = vadd.f32 %v1181, %v1702
        %v1799 = vadd.f32 %v1294, %v1703
        %v1800 = vadd.f32 %v1407, %v1704
        %v1801 = vadd.f32 %v1184, %v1705
        %v1802 = vadd.f32 %v1297, %v1706
        %v1803 = vadd.f32 %v1410, %v1707
        %v1804 = vadd.f32 %v1187, %v1708
        %v1805 = vadd.f32 %v1300, %v1709
        %v1806 = vadd.f32 %v1413, %v1710
        %v1807 = vadd.f32 %v1190, %v1711
        %v1808 = vadd.f32 %v1303, %v1712
        %v1809 = vadd.f32 %v1416, %v1713
        %v1810 = vadd.f32 %v1193, %v1714
        %v1811 = vadd.f32 %v1306, %v1715
        %v1812 = vadd.f32 %v1419, %v1716
        %v1813 = vadd.f32 %v1196, %v1717
        %v1814 = vadd.f32 %v1309, %v1718
        %v1815 = vadd.f32 %v1422, %v1719
        %v1816 = vadd.f32 %v1199, %v1720
        %v1817 = vadd.f32 %v1312, %v1721
        %v1818 = vadd.f32 %v1425, %v1722
        %v1819 = vadd.f32 %v1202, %v1723
        %v1820 = vadd.f32 %v1315, %v1724
        %v1821 = vadd.f32 %v1428, %v1725
        %v1822 = vadd.f32 %v1205, %v1726
        %v1823 = vadd.f32 %v1318, %v1727
        %v1824 = vadd.f32 %v1431, %v1728
        %v1825 = vadd.f32 %v1208, %v1729
        %v1826 = vadd.f32 %v1321, %v1730
        %v1827 = vadd.f32 %v1434, %v1731
        %v1828 = vld [vmem:[#allocation8] sm:$0x7]
        %v1830 = vperm.slane %v1828, 0
        %v1831 = vperm.slane %v1828, 1
        %v1832 = vperm.slane %v1828, 2
        %v1836 = vadd.f32 %v1732, %v1830
        %v1837 = vadd.f32 %v1733, %v1831
        %v1838 = vadd.f32 %v1734, %v1832
        %v1839 = vadd.f32 %v1735, %v1830
        %v1840 = vadd.f32 %v1736, %v1831
        %v1841 = vadd.f32 %v1737, %v1832
        %v1842 = vadd.f32 %v1738, %v1830
        %v1843 = vadd.f32 %v1739, %v1831
        %v1844 = vadd.f32 %v1740, %v1832
        %v1845 = vadd.f32 %v1741, %v1830
        %v1846 = vadd.f32 %v1742, %v1831
        %v1847 = vadd.f32 %v1743, %v1832
        %v1848 = vadd.f32 %v1744, %v1830
        %v1849 = vadd.f32 %v1745, %v1831
        %v1850 = vadd.f32 %v1746, %v1832
        %v1851 = vadd.f32 %v1747, %v1830
        %v1852 = vadd.f32 %v1748, %v1831
        %v1853 = vadd.f32 %v1749, %v1832
        %v1854 = vadd.f32 %v1750, %v1830
        %v1855 = vadd.f32 %v1751, %v1831
        %v1856 = vadd.f32 %v1752, %v1832
        %v1857 = vadd.f32 %v1753, %v1830
        %v1858 = vadd.f32 %v1754, %v1831
        %v1859 = vadd.f32 %v1755, %v1832
        %v1860 = vadd.f32 %v1756, %v1830
        %v1861 = vadd.f32 %v1757, %v1831
        %v1862 = vadd.f32 %v1758, %v1832
        %v1863 = vadd.f32 %v1759, %v1830
        %v1864 = vadd.f32 %v1760, %v1831
        %v1865 = vadd.f32 %v1761, %v1832
        %v1866 = vadd.f32 %v1762, %v1830
        %v1867 = vadd.f32 %v1763, %v1831
        %v1868 = vadd.f32 %v1764, %v1832
        %v1869 = vadd.f32 %v1765, %v1830
        %v1870 = vadd.f32 %v1766, %v1831
        %v1871 = vadd.f32 %v1767, %v1832
        %v1872 = vadd.f32 %v1768, %v1830
        %v1873 = vadd.f32 %v1769, %v1831
        %v1874 = vadd.f32 %v1770, %v1832
        %v1875 = vadd.f32 %v1771, %v1830
        %v1876 = vadd.f32 %v1772, %v1831
        %v1877 = vadd.f32 %v1773, %v1832
        %v1878 = vadd.f32 %v1774, %v1830
        %v1879 = vadd.f32 %v1775, %v1831
        %v1880 = vadd.f32 %v1776, %v1832
        %v1881 = vadd.f32 %v1777, %v1830
        %v1882 = vadd.f32 %v1778, %v1831
        %v1883 = vadd.f32 %v1779, %v1832
        %v1884 = vadd.f32 %v1780, %v1830
        %v1885 = vadd.f32 %v1781, %v1831
        %v1886 = vadd.f32 %v1782, %v1832
        %v1887 = vadd.f32 %v1783, %v1830
        %v1888 = vadd.f32 %v1784, %v1831
        %v1889 = vadd.f32 %v1785, %v1832
        %v1890 = vadd.f32 %v1786, %v1830
        %v1891 = vadd.f32 %v1787, %v1831
        %v1892 = vadd.f32 %v1788, %v1832
        %v1893 = vadd.f32 %v1789, %v1830
        %v1894 = vadd.f32 %v1790, %v1831
        %v1895 = vadd.f32 %v1791, %v1832
        %v1896 = vadd.f32 %v1792, %v1830
        %v1897 = vadd.f32 %v1793, %v1831
        %v1898 = vadd.f32 %v1794, %v1832
        %v1899 = vadd.f32 %v1795, %v1830
        %v1900 = vadd.f32 %v1796, %v1831
        %v1901 = vadd.f32 %v1797, %v1832
        %v1902 = vadd.f32 %v1798, %v1830
        %v1903 = vadd.f32 %v1799, %v1831
        %v1904 = vadd.f32 %v1800, %v1832
        %v1905 = vadd.f32 %v1801, %v1830
        %v1906 = vadd.f32 %v1802, %v1831
        %v1907 = vadd.f32 %v1803, %v1832
        %v1908 = vadd.f32 %v1804, %v1830
        %v1909 = vadd.f32 %v1805, %v1831
        %v1910 = vadd.f32 %v1806, %v1832
        %v1911 = vadd.f32 %v1807, %v1830
        %v1912 = vadd.f32 %v1808, %v1831
        %v1913 = vadd.f32 %v1809, %v1832
        %v1914 = vadd.f32 %v1810, %v1830
        %v1915 = vadd.f32 %v1811, %v1831
        %v1916 = vadd.f32 %v1812, %v1832
        %v1917 = vadd.f32 %v1813, %v1830
        %v1918 = vadd.f32 %v1814, %v1831
        %v1919 = vadd.f32 %v1815, %v1832
        %v1920 = vadd.f32 %v1816, %v1830
        %v1921 = vadd.f32 %v1817, %v1831
        %v1922 = vadd.f32 %v1818, %v1832
        %v1923 = vadd.f32 %v1819, %v1830
        %v1924 = vadd.f32 %v1820, %v1831
        %v1925 = vadd.f32 %v1821, %v1832
        %v1926 = vadd.f32 %v1822, %v1830
        %v1927 = vadd.f32 %v1823, %v1831
        %v1928 = vadd.f32 %v1824, %v1832
        %v1929 = vadd.f32 %v1825, %v1830
        %v1930 = vadd.f32 %v1826, %v1831
        %v1931 = vadd.f32 %v1827, %v1832
        %v1932 = vld [vmem:[#allocation7] sm:$0xff]
        %v1933 = vld [vmem:[#allocation7 + $0x8] sm:$0xff]
        %v1934 = vld [vmem:[#allocation7 + $0x10] sm:$0xff]
        %v1935 = vld [vmem:[#allocation7 + $0x18] sm:$0xff]
        %v1936 = vld [vmem:[#allocation7 + $0x20] sm:$0xff]
        %v1937 = vld [vmem:[#allocation7 + $0x28] sm:$0xff]
        %v1938 = vld [vmem:[#allocation7 + $0x30] sm:$0xff]
        %v1939 = vld [vmem:[#allocation7 + $0x38] sm:$0xff]
        %v1940 = vld [vmem:[#allocation7 + $0x40] sm:$0xff]
        %v1941 = vld [vmem:[#allocation7 + $0x48] sm:$0xff]
        %v1942 = vld [vmem:[#allocation7 + $0x50] sm:$0xff]
        %v1943 = vld [vmem:[#allocation7 + $0x58] sm:$0xff]
        %v1944 = vld [vmem:[#allocation7 + $0x60] sm:$0xff]
        %v1945 = vld [vmem:[#allocation7 + $0x68] sm:$0xff]
        %v1946 = vld [vmem:[#allocation7 + $0x70] sm:$0xff]
        %v1947 = vld [vmem:[#allocation7 + $0x78] sm:$0xff]
        %v1948 = vld [vmem:[#allocation7 + $0x80] sm:$0xff]
        %v1949 = vld [vmem:[#allocation7 + $0x88] sm:$0xff]
        %v1950 = vld [vmem:[#allocation7 + $0x90] sm:$0xff]
        %v1951 = vld [vmem:[#allocation7 + $0x98] sm:$0xff]
        %v1952 = vld [vmem:[#allocation7 + $0xa0] sm:$0xff]
        %v1953 = vld [vmem:[#allocation7 + $0xa8] sm:$0xff]
        %v1954 = vld [vmem:[#allocation7 + $0xb0] sm:$0xff]
        %v1955 = vld [vmem:[#allocation7 + $0xb8] sm:$0xff]
        %v1956 = vld [vmem:[#allocation7 + $0xc0] sm:$0xff]
        %v1957 = vld [vmem:[#allocation7 + $0xc8] sm:$0xff]
        %v1958 = vld [vmem:[#allocation7 + $0xd0] sm:$0xff]
        %v1959 = vld [vmem:[#allocation7 + $0xd8] sm:$0xff]
        %v1960 = vld [vmem:[#allocation7 + $0xe0] sm:$0xff]
        %v1961 = vld [vmem:[#allocation7 + $0xe8] sm:$0xff]
        %v1962 = vld [vmem:[#allocation7 + $0xf0] sm:$0xff]
        %v1963 = vld [vmem:[#allocation7 + $0xf8] sm:$0xff]
        %v1964 = vld [vmem:[#allocation7 + $0x100] sm:$0xff]
        %v1965 = vld [vmem:[#allocation7 + $0x108] sm:$0xff]
        %v1966 = vld [vmem:[#allocation7 + $0x110] sm:$0xff]
        %v1967 = vld [vmem:[#allocation7 + $0x118] sm:$0xff]
        %v1968 = vld [vmem:[#allocation7 + $0x120] sm:$0xff]
        %v1969 = vld [vmem:[#allocation7 + $0x128] sm:$0xff]
        %v1970 = vld [vmem:[#allocation7 + $0x130] sm:$0xff]
        %v1971 = vld [vmem:[#allocation7 + $0x138] sm:$0xff]
        %v1972 = vld [vmem:[#allocation7 + $0x140] sm:$0xff]
        %v1973 = vld [vmem:[#allocation7 + $0x148] sm:$0xff]
        %v1974 = vld [vmem:[#allocation7 + $0x150] sm:$0xff]
        %v1975 = vld [vmem:[#allocation7 + $0x158] sm:$0xff]
        %v1976 = vld [vmem:[#allocation7 + $0x160] sm:$0xff]
        %v1977 = vld [vmem:[#allocation7 + $0x168] sm:$0xff]
        %v1978 = vld [vmem:[#allocation7 + $0x170] sm:$0xff]
        %v1979 = vld [vmem:[#allocation7 + $0x178] sm:$0xff]
        %v1980 = vld [vmem:[#allocation10] sm:$0x7]
        %v1982 = vperm.slane %v1980, 0
        %v1983 = vperm.slane %v1980, 1
        %v1984 = vperm.slane %v1980, 2
        %1988 = vmatpush.msra.mxu0 %v1977
        %1989 = vmatpush.msra.mxu0 %v1974
        %1990 = vmatpush.msra.mxu0 %v1971
        %1991 = vmatpush.msra.mxu0 %v1968
        %1992 = vmatpush.msra.mxu0 %v1965
        %1993 = vmatpush.msra.mxu0 %v1962
        %1994 = vmatpush.msra.mxu0 %v1959
        %1995 = vmatpush.msra.mxu0 %v1956
        %1996 = vmatpush.msra.mxu0 %v1953
        %1997 = vmatpush.msra.mxu0 %v1950
        %1998 = vmatpush.msra.mxu0 %v1947
        %1999 = vmatpush.msra.mxu0 %v1944
        %2000 = vmatpush.msra.mxu0 %v1941
        %2001 = vmatpush.msra.mxu0 %v1938
        %2002 = vmatpush.msra.mxu0 %v1935
        %2003 = vmatpush.msra.mxu0 %v1932
        %2004 = vmatmul.f32.gmra.mxu0 %v536
        %v2005 = vpop.f32.mrf.mxu0
        %v2006 = vadd.f32 %v1982, %v2005
        %2007 = vmatmul.f32.gmra.mxu0 %v537
        %v2008 = vpop.f32.mrf.mxu0
        %v2009 = vadd.f32 %v1982, %v2008
        %2010 = vmatmul.f32.gmra.mxu0 %v538
        %v2011 = vpop.f32.mrf.mxu0
        %v2012 = vadd.f32 %v1982, %v2011
        %2013 = vmatmul.f32.gmra.mxu0 %v539
        %v2014 = vpop.f32.mrf.mxu0
        %v2015 = vadd.f32 %v1982, %v2014
        %2016 = vmatmul.f32.gmra.mxu0 %v540
        %v2017 = vpop.f32.mrf.mxu0
        %v2018 = vadd.f32 %v1982, %v2017
        %2019 = vmatmul.f32.gmra.mxu0 %v541
        %v2020 = vpop.f32.mrf.mxu0
        %v2021 = vadd.f32 %v1982, %v2020
        %2022 = vmatmul.f32.gmra.mxu0 %v542
        %v2023 = vpop.f32.mrf.mxu0
        %v2024 = vadd.f32 %v1982, %v2023
        %2025 = vmatmul.f32.gmra.mxu0 %v543
        %v2026 = vpop.f32.mrf.mxu0
        %v2027 = vadd.f32 %v1982, %v2026
        %2028 = vmatmul.f32.gmra.mxu0 %v544
        %v2029 = vpop.f32.mrf.mxu0
        %v2030 = vadd.f32 %v1982, %v2029
        %2031 = vmatmul.f32.gmra.mxu0 %v545
        %v2032 = vpop.f32.mrf.mxu0
        %v2033 = vadd.f32 %v1982, %v2032
        %2034 = vmatmul.f32.gmra.mxu0 %v546
        %v2035 = vpop.f32.mrf.mxu0
        %v2036 = vadd.f32 %v1982, %v2035
        %2037 = vmatmul.f32.gmra.mxu0 %v547
        %v2038 = vpop.f32.mrf.mxu0
        %v2039 = vadd.f32 %v1982, %v2038
        %2040 = vmatmul.f32.gmra.mxu0 %v548
        %v2041 = vpop.f32.mrf.mxu0
        %v2042 = vadd.f32 %v1982, %v2041
        %2043 = vmatmul.f32.gmra.mxu0 %v549
        %v2044 = vpop.f32.mrf.mxu0
        %v2045 = vadd.f32 %v1982, %v2044
        %2046 = vmatmul.f32.gmra.mxu0 %v550
        %v2047 = vpop.f32.mrf.mxu0
        %v2048 = vadd.f32 %v1982, %v2047
        %2049 = vmatmul.f32.gmra.mxu0 %v551
        %v2050 = vpop.f32.mrf.mxu0
        %v2051 = vadd.f32 %v1982, %v2050
        %2052 = vmatmul.f32.gmra.mxu0 %v552
        %v2053 = vpop.f32.mrf.mxu0
        %v2054 = vadd.f32 %v1982, %v2053
        %2055 = vmatmul.f32.gmra.mxu0 %v553
        %v2056 = vpop.f32.mrf.mxu0
        %v2057 = vadd.f32 %v1982, %v2056
        %2058 = vmatmul.f32.gmra.mxu0 %v554
        %v2059 = vpop.f32.mrf.mxu0
        %v2060 = vadd.f32 %v1982, %v2059
        %2061 = vmatmul.f32.gmra.mxu0 %v555
        %v2062 = vpop.f32.mrf.mxu0
        %v2063 = vadd.f32 %v1982, %v2062
        %2064 = vmatmul.f32.gmra.mxu0 %v556
        %v2065 = vpop.f32.mrf.mxu0
        %v2066 = vadd.f32 %v1982, %v2065
        %2067 = vmatmul.f32.gmra.mxu0 %v557
        %v2068 = vpop.f32.mrf.mxu0
        %v2069 = vadd.f32 %v1982, %v2068
        %2070 = vmatmul.f32.gmra.mxu0 %v558
        %v2071 = vpop.f32.mrf.mxu0
        %v2072 = vadd.f32 %v1982, %v2071
        %2073 = vmatmul.f32.gmra.mxu0 %v559
        %v2074 = vpop.f32.mrf.mxu0
        %v2075 = vadd.f32 %v1982, %v2074
        %2076 = vmatmul.f32.gmra.mxu0 %v560
        %v2077 = vpop.f32.mrf.mxu0
        %v2078 = vadd.f32 %v1982, %v2077
        %2079 = vmatmul.f32.gmra.mxu0 %v561
        %v2080 = vpop.f32.mrf.mxu0
        %v2081 = vadd.f32 %v1982, %v2080
        %2082 = vmatmul.f32.gmra.mxu0 %v562
        %v2083 = vpop.f32.mrf.mxu0
        %v2084 = vadd.f32 %v1982, %v2083
        %2085 = vmatmul.f32.gmra.mxu0 %v563
        %v2086 = vpop.f32.mrf.mxu0
        %v2087 = vadd.f32 %v1982, %v2086
        %2088 = vmatmul.f32.gmra.mxu0 %v564
        %v2089 = vpop.f32.mrf.mxu0
        %v2090 = vadd.f32 %v1982, %v2089
        %2091 = vmatmul.f32.gmra.mxu0 %v565
        %v2092 = vpop.f32.mrf.mxu0
        %v2093 = vadd.f32 %v1982, %v2092
        %2094 = vmatmul.f32.gmra.mxu0 %v566
        %v2095 = vpop.f32.mrf.mxu0
        %v2096 = vadd.f32 %v1982, %v2095
        %2097 = vmatmul.f32.gmra.mxu0 %v567
        %v2098 = vpop.f32.mrf.mxu0
        %v2099 = vadd.f32 %v1982, %v2098
        %2100 = vdwg.mxu0
        %2101 = vmatpush.msra.mxu0 %v1978
        %2102 = vmatpush.msra.mxu0 %v1975
        %2103 = vmatpush.msra.mxu0 %v1972
        %2104 = vmatpush.msra.mxu0 %v1969
        %2105 = vmatpush.msra.mxu0 %v1966
        %2106 = vmatpush.msra.mxu0 %v1963
        %2107 = vmatpush.msra.mxu0 %v1960
        %2108 = vmatpush.msra.mxu0 %v1957
        %2109 = vmatpush.msra.mxu0 %v1954
        %2110 = vmatpush.msra.mxu0 %v1951
        %2111 = vmatpush.msra.mxu0 %v1948
        %2112 = vmatpush.msra.mxu0 %v1945
        %2113 = vmatpush.msra.mxu0 %v1942
        %2114 = vmatpush.msra.mxu0 %v1939
        %2115 = vmatpush.msra.mxu0 %v1936
        %2116 = vmatpush.msra.mxu0 %v1933
        %2117 = vmatmul.f32.gmra.mxu0 %v536
        %v2118 = vpop.f32.mrf.mxu0
        %v2119 = vadd.f32 %v1983, %v2118
        %2120 = vmatmul.f32.gmra.mxu0 %v537
        %v2121 = vpop.f32.mrf.mxu0
        %v2122 = vadd.f32 %v1983, %v2121
        %2123 = vmatmul.f32.gmra.mxu0 %v538
        %v2124 = vpop.f32.mrf.mxu0
        %v2125 = vadd.f32 %v1983, %v2124
        %2126 = vmatmul.f32.gmra.mxu0 %v539
        %v2127 = vpop.f32.mrf.mxu0
        %v2128 = vadd.f32 %v1983, %v2127
        %2129 = vmatmul.f32.gmra.mxu0 %v540
        %v2130 = vpop.f32.mrf.mxu0
        %v2131 = vadd.f32 %v1983, %v2130
        %2132 = vmatmul.f32.gmra.mxu0 %v541
        %v2133 = vpop.f32.mrf.mxu0
        %v2134 = vadd.f32 %v1983, %v2133
        %2135 = vmatmul.f32.gmra.mxu0 %v542
        %v2136 = vpop.f32.mrf.mxu0
        %v2137 = vadd.f32 %v1983, %v2136
        %2138 = vmatmul.f32.gmra.mxu0 %v543
        %v2139 = vpop.f32.mrf.mxu0
        %v2140 = vadd.f32 %v1983, %v2139
        %2141 = vmatmul.f32.gmra.mxu0 %v544
        %v2142 = vpop.f32.mrf.mxu0
        %v2143 = vadd.f32 %v1983, %v2142
        %2144 = vmatmul.f32.gmra.mxu0 %v545
        %v2145 = vpop.f32.mrf.mxu0
        %v2146 = vadd.f32 %v1983, %v2145
        %2147 = vmatmul.f32.gmra.mxu0 %v546
        %v2148 = vpop.f32.mrf.mxu0
        %v2149 = vadd.f32 %v1983, %v2148
        %2150 = vmatmul.f32.gmra.mxu0 %v547
        %v2151 = vpop.f32.mrf.mxu0
        %v2152 = vadd.f32 %v1983, %v2151
        %2153 = vmatmul.f32.gmra.mxu0 %v548
        %v2154 = vpop.f32.mrf.mxu0
        %v2155 = vadd.f32 %v1983, %v2154
        %2156 = vmatmul.f32.gmra.mxu0 %v549
        %v2157 = vpop.f32.mrf.mxu0
        %v2158 = vadd.f32 %v1983, %v2157
        %2159 = vmatmul.f32.gmra.mxu0 %v550
        %v2160 = vpop.f32.mrf.mxu0
        %v2161 = vadd.f32 %v1983, %v2160
        %2162 = vmatmul.f32.gmra.mxu0 %v551
        %v2163 = vpop.f32.mrf.mxu0
        %v2164 = vadd.f32 %v1983, %v2163
        %2165 = vmatmul.f32.gmra.mxu0 %v552
        %v2166 = vpop.f32.mrf.mxu0
        %v2167 = vadd.f32 %v1983, %v2166
        %2168 = vmatmul.f32.gmra.mxu0 %v553
        %v2169 = vpop.f32.mrf.mxu0
        %v2170 = vadd.f32 %v1983, %v2169
        %2171 = vmatmul.f32.gmra.mxu0 %v554
        %v2172 = vpop.f32.mrf.mxu0
        %v2173 = vadd.f32 %v1983, %v2172
        %2174 = vmatmul.f32.gmra.mxu0 %v555
        %v2175 = vpop.f32.mrf.mxu0
        %v2176 = vadd.f32 %v1983, %v2175
        %2177 = vmatmul.f32.gmra.mxu0 %v556
        %v2178 = vpop.f32.mrf.mxu0
        %v2179 = vadd.f32 %v1983, %v2178
        %2180 = vmatmul.f32.gmra.mxu0 %v557
        %v2181 = vpop.f32.mrf.mxu0
        %v2182 = vadd.f32 %v1983, %v2181
        %2183 = vmatmul.f32.gmra.mxu0 %v558
        %v2184 = vpop.f32.mrf.mxu0
        %v2185 = vadd.f32 %v1983, %v2184
        %2186 = vmatmul.f32.gmra.mxu0 %v559
        %v2187 = vpop.f32.mrf.mxu0
        %v2188 = vadd.f32 %v1983, %v2187
        %2189 = vmatmul.f32.gmra.mxu0 %v560
        %v2190 = vpop.f32.mrf.mxu0
        %v2191 = vadd.f32 %v1983, %v2190
        %2192 = vmatmul.f32.gmra.mxu0 %v561
        %v2193 = vpop.f32.mrf.mxu0
        %v2194 = vadd.f32 %v1983, %v2193
        %2195 = vmatmul.f32.gmra.mxu0 %v562
        %v2196 = vpop.f32.mrf.mxu0
        %v2197 = vadd.f32 %v1983, %v2196
        %2198 = vmatmul.f32.gmra.mxu0 %v563
        %v2199 = vpop.f32.mrf.mxu0
        %v2200 = vadd.f32 %v1983, %v2199
        %2201 = vmatmul.f32.gmra.mxu0 %v564
        %v2202 = vpop.f32.mrf.mxu0
        %v2203 = vadd.f32 %v1983, %v2202
        %2204 = vmatmul.f32.gmra.mxu0 %v565
        %v2205 = vpop.f32.mrf.mxu0
        %v2206 = vadd.f32 %v1983, %v2205
        %2207 = vmatmul.f32.gmra.mxu0 %v566
        %v2208 = vpop.f32.mrf.mxu0
        %v2209 = vadd.f32 %v1983, %v2208
        %2210 = vmatmul.f32.gmra.mxu0 %v567
        %v2211 = vpop.f32.mrf.mxu0
        %v2212 = vadd.f32 %v1983, %v2211
        %2213 = vdwg.mxu0
        %2214 = vmatpush.msra.mxu0 %v1979
        %2215 = vmatpush.msra.mxu0 %v1976
        %2216 = vmatpush.msra.mxu0 %v1973
        %2217 = vmatpush.msra.mxu0 %v1970
        %2218 = vmatpush.msra.mxu0 %v1967
        %2219 = vmatpush.msra.mxu0 %v1964
        %2220 = vmatpush.msra.mxu0 %v1961
        %2221 = vmatpush.msra.mxu0 %v1958
        %2222 = vmatpush.msra.mxu0 %v1955
        %2223 = vmatpush.msra.mxu0 %v1952
        %2224 = vmatpush.msra.mxu0 %v1949
        %2225 = vmatpush.msra.mxu0 %v1946
        %2226 = vmatpush.msra.mxu0 %v1943
        %2227 = vmatpush.msra.mxu0 %v1940
        %2228 = vmatpush.msra.mxu0 %v1937
        %2229 = vmatpush.msra.mxu0 %v1934
        %2230 = vmatmul.f32.gmra.mxu0 %v536
        %v2231 = vpop.f32.mrf.mxu0
        %v2232 = vadd.f32 %v1984, %v2231
        %2233 = vmatmul.f32.gmra.mxu0 %v537
        %v2234 = vpop.f32.mrf.mxu0
        %v2235 = vadd.f32 %v1984, %v2234
        %2236 = vmatmul.f32.gmra.mxu0 %v538
        %v2237 = vpop.f32.mrf.mxu0
        %v2238 = vadd.f32 %v1984, %v2237
        %2239 = vmatmul.f32.gmra.mxu0 %v539
        %v2240 = vpop.f32.mrf.mxu0
        %v2241 = vadd.f32 %v1984, %v2240
        %2242 = vmatmul.f32.gmra.mxu0 %v540
        %v2243 = vpop.f32.mrf.mxu0
        %v2244 = vadd.f32 %v1984, %v2243
        %2245 = vmatmul.f32.gmra.mxu0 %v541
        %v2246 = vpop.f32.mrf.mxu0
        %v2247 = vadd.f32 %v1984, %v2246
        %2248 = vmatmul.f32.gmra.mxu0 %v542
        %v2249 = vpop.f32.mrf.mxu0
        %v2250 = vadd.f32 %v1984, %v2249
        %2251 = vmatmul.f32.gmra.mxu0 %v543
        %v2252 = vpop.f32.mrf.mxu0
        %v2253 = vadd.f32 %v1984, %v2252
        %2254 = vmatmul.f32.gmra.mxu0 %v544
        %v2255 = vpop.f32.mrf.mxu0
        %v2256 = vadd.f32 %v1984, %v2255
        %2257 = vmatmul.f32.gmra.mxu0 %v545
        %v2258 = vpop.f32.mrf.mxu0
        %v2259 = vadd.f32 %v1984, %v2258
        %2260 = vmatmul.f32.gmra.mxu0 %v546
        %v2261 = vpop.f32.mrf.mxu0
        %v2262 = vadd.f32 %v1984, %v2261
        %2263 = vmatmul.f32.gmra.mxu0 %v547
        %v2264 = vpop.f32.mrf.mxu0
        %v2265 = vadd.f32 %v1984, %v2264
        %2266 = vmatmul.f32.gmra.mxu0 %v548
        %v2267 = vpop.f32.mrf.mxu0
        %v2268 = vadd.f32 %v1984, %v2267
        %2269 = vmatmul.f32.gmra.mxu0 %v549
        %v2270 = vpop.f32.mrf.mxu0
        %v2271 = vadd.f32 %v1984, %v2270
        %2272 = vmatmul.f32.gmra.mxu0 %v550
        %v2273 = vpop.f32.mrf.mxu0
        %v2274 = vadd.f32 %v1984, %v2273
        %2275 = vmatmul.f32.gmra.mxu0 %v551
        %v2276 = vpop.f32.mrf.mxu0
        %v2277 = vadd.f32 %v1984, %v2276
        %2278 = vmatmul.f32.gmra.mxu0 %v552
        %v2279 = vpop.f32.mrf.mxu0
        %v2280 = vadd.f32 %v1984, %v2279
        %2281 = vmatmul.f32.gmra.mxu0 %v553
        %v2282 = vpop.f32.mrf.mxu0
        %v2283 = vadd.f32 %v1984, %v2282
        %2284 = vmatmul.f32.gmra.mxu0 %v554
        %v2285 = vpop.f32.mrf.mxu0
        %v2286 = vadd.f32 %v1984, %v2285
        %2287 = vmatmul.f32.gmra.mxu0 %v555
        %v2288 = vpop.f32.mrf.mxu0
        %v2289 = vadd.f32 %v1984, %v2288
        %2290 = vmatmul.f32.gmra.mxu0 %v556
        %v2291 = vpop.f32.mrf.mxu0
        %v2292 = vadd.f32 %v1984, %v2291
        %2293 = vmatmul.f32.gmra.mxu0 %v557
        %v2294 = vpop.f32.mrf.mxu0
        %v2295 = vadd.f32 %v1984, %v2294
        %2296 = vmatmul.f32.gmra.mxu0 %v558
        %v2297 = vpop.f32.mrf.mxu0
        %v2298 = vadd.f32 %v1984, %v2297
        %2299 = vmatmul.f32.gmra.mxu0 %v559
        %v2300 = vpop.f32.mrf.mxu0
        %v2301 = vadd.f32 %v1984, %v2300
        %2302 = vmatmul.f32.gmra.mxu0 %v560
        %v2303 = vpop.f32.mrf.mxu0
        %v2304 = vadd.f32 %v1984, %v2303
        %2305 = vmatmul.f32.gmra.mxu0 %v561
        %v2306 = vpop.f32.mrf.mxu0
        %v2307 = vadd.f32 %v1984, %v2306
        %2308 = vmatmul.f32.gmra.mxu0 %v562
        %v2309 = vpop.f32.mrf.mxu0
        %v2310 = vadd.f32 %v1984, %v2309
        %2311 = vmatmul.f32.gmra.mxu0 %v563
        %v2312 = vpop.f32.mrf.mxu0
        %v2313 = vadd.f32 %v1984, %v2312
        %2314 = vmatmul.f32.gmra.mxu0 %v564
        %v2315 = vpop.f32.mrf.mxu0
        %v2316 = vadd.f32 %v1984, %v2315
        %2317 = vmatmul.f32.gmra.mxu0 %v565
        %v2318 = vpop.f32.mrf.mxu0
        %v2319 = vadd.f32 %v1984, %v2318
        %2320 = vmatmul.f32.gmra.mxu0 %v566
        %v2321 = vpop.f32.mrf.mxu0
        %v2322 = vadd.f32 %v1984, %v2321
        %2323 = vmatmul.f32.gmra.mxu0 %v567
        %v2324 = vpop.f32.mrf.mxu0
        %v2325 = vadd.f32 %v1984, %v2324
        %2326 = vdwg.mxu0
        %v2327 = vadd.f32 %v1836, %v2006
        %v2328 = vadd.f32 %v1839, %v2009
        %v2329 = vadd.f32 %v1842, %v2012
        %v2330 = vadd.f32 %v1845, %v2015
        %v2331 = vadd.f32 %v1848, %v2018
        %v2332 = vadd.f32 %v1851, %v2021
        %v2333 = vadd.f32 %v1854, %v2024
        %v2334 = vadd.f32 %v1857, %v2027
        %v2335 = vadd.f32 %v1860, %v2030
        %v2336 = vadd.f32 %v1863, %v2033
        %v2337 = vadd.f32 %v1866, %v2036
        %v2338 = vadd.f32 %v1869, %v2039
        %v2339 = vadd.f32 %v1872, %v2042
        %v2340 = vadd.f32 %v1875, %v2045
        %v2341 = vadd.f32 %v1878, %v2048
        %v2342 = vadd.f32 %v1881, %v2051
        %v2343 = vadd.f32 %v1884, %v2054
        %v2344 = vadd.f32 %v1887, %v2057
        %v2345 = vadd.f32 %v1890, %v2060
        %v2346 = vadd.f32 %v1893, %v2063
        %v2347 = vadd.f32 %v1896, %v2066
        %v2348 = vadd.f32 %v1899, %v2069
        %v2349 = vadd.f32 %v1902, %v2072
        %v2350 = vadd.f32 %v1905, %v2075
        %v2351 = vadd.f32 %v1908, %v2078
        %v2352 = vadd.f32 %v1911, %v2081
        %v2353 = vadd.f32 %v1914, %v2084
        %v2354 = vadd.f32 %v1917, %v2087
        %v2355 = vadd.f32 %v1920, %v2090
        %v2356 = vadd.f32 %v1923, %v2093
        %v2357 = vadd.f32 %v1926, %v2096
        %v2358 = vadd.f32 %v1929, %v2099
        %v2359 = vxor.u32 %v2327, 2147483648
        %v2360 = vxor.u32 %v2328, 2147483648
        %v2361 = vxor.u32 %v2329, 2147483648
        %v2362 = vxor.u32 %v2330, 2147483648
        %v2363 = vxor.u32 %v2331, 2147483648
        %v2364 = vxor.u32 %v2332, 2147483648
        %v2365 = vxor.u32 %v2333, 2147483648
        %v2366 = vxor.u32 %v2334, 2147483648
        %v2367 = vxor.u32 %v2335, 2147483648
        %v2368 = vxor.u32 %v2336, 2147483648
        %v2369 = vxor.u32 %v2337, 2147483648
        %v2370 = vxor.u32 %v2338, 2147483648
        %v2371 = vxor.u32 %v2339, 2147483648
        %v2372 = vxor.u32 %v2340, 2147483648
        %v2373 = vxor.u32 %v2341, 2147483648
        %v2374 = vxor.u32 %v2342, 2147483648
        %v2375 = vxor.u32 %v2343, 2147483648
        %v2376 = vxor.u32 %v2344, 2147483648
        %v2377 = vxor.u32 %v2345, 2147483648
        %v2378 = vxor.u32 %v2346, 2147483648
        %v2379 = vxor.u32 %v2347, 2147483648
        %v2380 = vxor.u32 %v2348, 2147483648
        %v2381 = vxor.u32 %v2349, 2147483648
        %v2382 = vxor.u32 %v2350, 2147483648
        %v2383 = vxor.u32 %v2351, 2147483648
        %v2384 = vxor.u32 %v2352, 2147483648
        %v2385 = vxor.u32 %v2353, 2147483648
        %v2386 = vxor.u32 %v2354, 2147483648
        %v2387 = vxor.u32 %v2355, 2147483648
        %v2388 = vxor.u32 %v2356, 2147483648
        %v2389 = vxor.u32 %v2357, 2147483648
        %v2390 = vxor.u32 %v2358, 2147483648
        %v2391 = vmul.f32 %v2359, 1.442695
        %v2392 = vpow.pop %v2391
        %v2393 = vmul.f32 %v2360, 1.442695
        %v2394 = vpow.pop %v2393
        %v2395 = vmul.f32 %v2361, 1.442695
        %v2396 = vpow.pop %v2395
        %v2397 = vmul.f32 %v2362, 1.442695
        %v2398 = vpow.pop %v2397
        %v2399 = vmul.f32 %v2363, 1.442695
        %v2400 = vpow.pop %v2399
        %v2401 = vmul.f32 %v2364, 1.442695
        %v2402 = vpow.pop %v2401
        %v2403 = vmul.f32 %v2365, 1.442695
        %v2404 = vpow.pop %v2403
        %v2405 = vmul.f32 %v2366, 1.442695
        %v2406 = vpow.pop %v2405
        %v2407 = vmul.f32 %v2367, 1.442695
        %v2408 = vpow.pop %v2407
        %v2409 = vmul.f32 %v2368, 1.442695
        %v2410 = vpow.pop %v2409
        %v2411 = vmul.f32 %v2369, 1.442695
        %v2412 = vpow.pop %v2411
        %v2413 = vmul.f32 %v2370, 1.442695
        %v2414 = vpow.pop %v2413
        %v2415 = vmul.f32 %v2371, 1.442695
        %v2416 = vpow.pop %v2415
        %v2417 = vmul.f32 %v2372, 1.442695
        %v2418 = vpow.pop %v2417
        %v2419 = vmul.f32 %v2373, 1.442695
        %v2420 = vpow.pop %v2419
        %v2421 = vmul.f32 %v2374, 1.442695
        %v2422 = vpow.pop %v2421
        %v2423 = vmul.f32 %v2375, 1.442695
        %v2424 = vpow.pop %v2423
        %v2425 = vmul.f32 %v2376, 1.442695
        %v2426 = vpow.pop %v2425
        %v2427 = vmul.f32 %v2377, 1.442695
        %v2428 = vpow.pop %v2427
        %v2429 = vmul.f32 %v2378, 1.442695
        %v2430 = vpow.pop %v2429
        %v2431 = vmul.f32 %v2379, 1.442695
        %v2432 = vpow.pop %v2431
        %v2433 = vmul.f32 %v2380, 1.442695
        %v2434 = vpow.pop %v2433
        %v2435 = vmul.f32 %v2381, 1.442695
        %v2436 = vpow.pop %v2435
        %v2437 = vmul.f32 %v2382, 1.442695
        %v2438 = vpow.pop %v2437
        %v2439 = vmul.f32 %v2383, 1.442695
        %v2440 = vpow.pop %v2439
        %v2441 = vmul.f32 %v2384, 1.442695
        %v2442 = vpow.pop %v2441
        %v2443 = vmul.f32 %v2385, 1.442695
        %v2444 = vpow.pop %v2443
        %v2445 = vmul.f32 %v2386, 1.442695
        %v2446 = vpow.pop %v2445
        %v2447 = vmul.f32 %v2387, 1.442695
        %v2448 = vpow.pop %v2447
        %v2449 = vmul.f32 %v2388, 1.442695
        %v2450 = vpow.pop %v2449
        %v2451 = vmul.f32 %v2389, 1.442695
        %v2452 = vpow.pop %v2451
        %v2453 = vmul.f32 %v2390, 1.442695
        %v2454 = vpow.pop %v2453
        %v2455 = vadd.f32 %v2392, 1.0
        %v2456 = vadd.f32 %v2394, 1.0
        %v2457 = vadd.f32 %v2396, 1.0
        %v2458 = vadd.f32 %v2398, 1.0
        %v2459 = vadd.f32 %v2400, 1.0
        %v2460 = vadd.f32 %v2402, 1.0
        %v2461 = vadd.f32 %v2404, 1.0
        %v2462 = vadd.f32 %v2406, 1.0
        %v2463 = vadd.f32 %v2408, 1.0
        %v2464 = vadd.f32 %v2410, 1.0
        %v2465 = vadd.f32 %v2412, 1.0
        %v2466 = vadd.f32 %v2414, 1.0
        %v2467 = vadd.f32 %v2416, 1.0
        %v2468 = vadd.f32 %v2418, 1.0
        %v2469 = vadd.f32 %v2420, 1.0
        %v2470 = vadd.f32 %v2422, 1.0
        %v2471 = vadd.f32 %v2424, 1.0
        %v2472 = vadd.f32 %v2426, 1.0
        %v2473 = vadd.f32 %v2428, 1.0
        %v2474 = vadd.f32 %v2430, 1.0
        %v2475 = vadd.f32 %v2432, 1.0
        %v2476 = vadd.f32 %v2434, 1.0
        %v2477 = vadd.f32 %v2436, 1.0
        %v2478 = vadd.f32 %v2438, 1.0
        %v2479 = vadd.f32 %v2440, 1.0
        %v2480 = vadd.f32 %v2442, 1.0
        %v2481 = vadd.f32 %v2444, 1.0
        %v2482 = vadd.f32 %v2446, 1.0
        %v2483 = vadd.f32 %v2448, 1.0
        %v2484 = vadd.f32 %v2450, 1.0
        %v2485 = vadd.f32 %v2452, 1.0
        %v2486 = vadd.f32 %v2454, 1.0
        %v2487 = vrcp.pop %v2455
        %v2488 = vmul.f32 %v2455, %v2487
        %v2489 = vsub.f32 1.0, %v2488
        %v2490 = vmul.f32 %v2487, %v2489
        %v2491 = vadd.f32 %v2487, %v2490
        %vm2492 = vweird.f32 %v2455
        %vm2493 = vweird.f32 %v2487
        %vm2494 = vmor %vm2492, %vm2493
        %v2495 = vsel %vm2494, %v2487, %v2491
        %v2496 = vand.u32 2147483647, %v2455
        %vm2497 = vcmp.eq.f32.partialorder %v2496, 8.507059e+37
        %v2498 = vand.u32 %v2455, 2147483648
        %v2499 = vor.u32 1.1754944e-38, %v2498
        %v2500 = vsel %vm2497, %v2499, %v2495
        %v2501 = vmul.f32 1.0, %v2500
        %v2502 = vrcp.pop %v2456
        %v2503 = vmul.f32 %v2456, %v2502
        %v2504 = vsub.f32 1.0, %v2503
        %v2505 = vmul.f32 %v2502, %v2504
        %v2506 = vadd.f32 %v2502, %v2505
        %vm2507 = vweird.f32 %v2456
        %vm2508 = vweird.f32 %v2502
        %vm2509 = vmor %vm2507, %vm2508
        %v2510 = vsel %vm2509, %v2502, %v2506
        %v2511 = vand.u32 2147483647, %v2456
        %vm2512 = vcmp.eq.f32.partialorder %v2511, 8.507059e+37
        %v2513 = vand.u32 %v2456, 2147483648
        %v2514 = vor.u32 1.1754944e-38, %v2513
        %v2515 = vsel %vm2512, %v2514, %v2510
        %v2516 = vmul.f32 1.0, %v2515
        %v2517 = vrcp.pop %v2457
        %v2518 = vmul.f32 %v2457, %v2517
        %v2519 = vsub.f32 1.0, %v2518
        %v2520 = vmul.f32 %v2517, %v2519
        %v2521 = vadd.f32 %v2517, %v2520
        %vm2522 = vweird.f32 %v2457
        %vm2523 = vweird.f32 %v2517
        %vm2524 = vmor %vm2522, %vm2523
        %v2525 = vsel %vm2524, %v2517, %v2521
        %v2526 = vand.u32 2147483647, %v2457
        %vm2527 = vcmp.eq.f32.partialorder %v2526, 8.507059e+37
        %v2528 = vand.u32 %v2457, 2147483648
        %v2529 = vor.u32 1.1754944e-38, %v2528
        %v2530 = vsel %vm2527, %v2529, %v2525
        %v2531 = vmul.f32 1.0, %v2530
        %v2532 = vrcp.pop %v2458
        %v2533 = vmul.f32 %v2458, %v2532
        %v2534 = vsub.f32 1.0, %v2533
        %v2535 = vmul.f32 %v2532, %v2534
        %v2536 = vadd.f32 %v2532, %v2535
        %vm2537 = vweird.f32 %v2458
        %vm2538 = vweird.f32 %v2532
        %vm2539 = vmor %vm2537, %vm2538
        %v2540 = vsel %vm2539, %v2532, %v2536
        %v2541 = vand.u32 2147483647, %v2458
        %vm2542 = vcmp.eq.f32.partialorder %v2541, 8.507059e+37
        %v2543 = vand.u32 %v2458, 2147483648
        %v2544 = vor.u32 1.1754944e-38, %v2543
        %v2545 = vsel %vm2542, %v2544, %v2540
        %v2546 = vmul.f32 1.0, %v2545
        %v2547 = vrcp.pop %v2459
        %v2548 = vmul.f32 %v2459, %v2547
        %v2549 = vsub.f32 1.0, %v2548
        %v2550 = vmul.f32 %v2547, %v2549
        %v2551 = vadd.f32 %v2547, %v2550
        %vm2552 = vweird.f32 %v2459
        %vm2553 = vweird.f32 %v2547
        %vm2554 = vmor %vm2552, %vm2553
        %v2555 = vsel %vm2554, %v2547, %v2551
        %v2556 = vand.u32 2147483647, %v2459
        %vm2557 = vcmp.eq.f32.partialorder %v2556, 8.507059e+37
        %v2558 = vand.u32 %v2459, 2147483648
        %v2559 = vor.u32 1.1754944e-38, %v2558
        %v2560 = vsel %vm2557, %v2559, %v2555
        %v2561 = vmul.f32 1.0, %v2560
        %v2562 = vrcp.pop %v2460
        %v2563 = vmul.f32 %v2460, %v2562
        %v2564 = vsub.f32 1.0, %v2563
        %v2565 = vmul.f32 %v2562, %v2564
        %v2566 = vadd.f32 %v2562, %v2565
        %vm2567 = vweird.f32 %v2460
        %vm2568 = vweird.f32 %v2562
        %vm2569 = vmor %vm2567, %vm2568
        %v2570 = vsel %vm2569, %v2562, %v2566
        %v2571 = vand.u32 2147483647, %v2460
        %vm2572 = vcmp.eq.f32.partialorder %v2571, 8.507059e+37
        %v2573 = vand.u32 %v2460, 2147483648
        %v2574 = vor.u32 1.1754944e-38, %v2573
        %v2575 = vsel %vm2572, %v2574, %v2570
        %v2576 = vmul.f32 1.0, %v2575
        %v2577 = vrcp.pop %v2461
        %v2578 = vmul.f32 %v2461, %v2577
        %v2579 = vsub.f32 1.0, %v2578
        %v2580 = vmul.f32 %v2577, %v2579
        %v2581 = vadd.f32 %v2577, %v2580
        %vm2582 = vweird.f32 %v2461
        %vm2583 = vweird.f32 %v2577
        %vm2584 = vmor %vm2582, %vm2583
        %v2585 = vsel %vm2584, %v2577, %v2581
        %v2586 = vand.u32 2147483647, %v2461
        %vm2587 = vcmp.eq.f32.partialorder %v2586, 8.507059e+37
        %v2588 = vand.u32 %v2461, 2147483648
        %v2589 = vor.u32 1.1754944e-38, %v2588
        %v2590 = vsel %vm2587, %v2589, %v2585
        %v2591 = vmul.f32 1.0, %v2590
        %v2592 = vrcp.pop %v2462
        %v2593 = vmul.f32 %v2462, %v2592
        %v2594 = vsub.f32 1.0, %v2593
        %v2595 = vmul.f32 %v2592, %v2594
        %v2596 = vadd.f32 %v2592, %v2595
        %vm2597 = vweird.f32 %v2462
        %vm2598 = vweird.f32 %v2592
        %vm2599 = vmor %vm2597, %vm2598
        %v2600 = vsel %vm2599, %v2592, %v2596
        %v2601 = vand.u32 2147483647, %v2462
        %vm2602 = vcmp.eq.f32.partialorder %v2601, 8.507059e+37
        %v2603 = vand.u32 %v2462, 2147483648
        %v2604 = vor.u32 1.1754944e-38, %v2603
        %v2605 = vsel %vm2602, %v2604, %v2600
        %v2606 = vmul.f32 1.0, %v2605
        %v2607 = vrcp.pop %v2463
        %v2608 = vmul.f32 %v2463, %v2607
        %v2609 = vsub.f32 1.0, %v2608
        %v2610 = vmul.f32 %v2607, %v2609
        %v2611 = vadd.f32 %v2607, %v2610
        %vm2612 = vweird.f32 %v2463
        %vm2613 = vweird.f32 %v2607
        %vm2614 = vmor %vm2612, %vm2613
        %v2615 = vsel %vm2614, %v2607, %v2611
        %v2616 = vand.u32 2147483647, %v2463
        %vm2617 = vcmp.eq.f32.partialorder %v2616, 8.507059e+37
        %v2618 = vand.u32 %v2463, 2147483648
        %v2619 = vor.u32 1.1754944e-38, %v2618
        %v2620 = vsel %vm2617, %v2619, %v2615
        %v2621 = vmul.f32 1.0, %v2620
        %v2622 = vrcp.pop %v2464
        %v2623 = vmul.f32 %v2464, %v2622
        %v2624 = vsub.f32 1.0, %v2623
        %v2625 = vmul.f32 %v2622, %v2624
        %v2626 = vadd.f32 %v2622, %v2625
        %vm2627 = vweird.f32 %v2464
        %vm2628 = vweird.f32 %v2622
        %vm2629 = vmor %vm2627, %vm2628
        %v2630 = vsel %vm2629, %v2622, %v2626
        %v2631 = vand.u32 2147483647, %v2464
        %vm2632 = vcmp.eq.f32.partialorder %v2631, 8.507059e+37
        %v2633 = vand.u32 %v2464, 2147483648
        %v2634 = vor.u32 1.1754944e-38, %v2633
        %v2635 = vsel %vm2632, %v2634, %v2630
        %v2636 = vmul.f32 1.0, %v2635
        %v2637 = vrcp.pop %v2465
        %v2638 = vmul.f32 %v2465, %v2637
        %v2639 = vsub.f32 1.0, %v2638
        %v2640 = vmul.f32 %v2637, %v2639
        %v2641 = vadd.f32 %v2637, %v2640
        %vm2642 = vweird.f32 %v2465
        %vm2643 = vweird.f32 %v2637
        %vm2644 = vmor %vm2642, %vm2643
        %v2645 = vsel %vm2644, %v2637, %v2641
        %v2646 = vand.u32 2147483647, %v2465
        %vm2647 = vcmp.eq.f32.partialorder %v2646, 8.507059e+37
        %v2648 = vand.u32 %v2465, 2147483648
        %v2649 = vor.u32 1.1754944e-38, %v2648
        %v2650 = vsel %vm2647, %v2649, %v2645
        %v2651 = vmul.f32 1.0, %v2650
        %v2652 = vrcp.pop %v2466
        %v2653 = vmul.f32 %v2466, %v2652
        %v2654 = vsub.f32 1.0, %v2653
        %v2655 = vmul.f32 %v2652, %v2654
        %v2656 = vadd.f32 %v2652, %v2655
        %vm2657 = vweird.f32 %v2466
        %vm2658 = vweird.f32 %v2652
        %vm2659 = vmor %vm2657, %vm2658
        %v2660 = vsel %vm2659, %v2652, %v2656
        %v2661 = vand.u32 2147483647, %v2466
        %vm2662 = vcmp.eq.f32.partialorder %v2661, 8.507059e+37
        %v2663 = vand.u32 %v2466, 2147483648
        %v2664 = vor.u32 1.1754944e-38, %v2663
        %v2665 = vsel %vm2662, %v2664, %v2660
        %v2666 = vmul.f32 1.0, %v2665
        %v2667 = vrcp.pop %v2467
        %v2668 = vmul.f32 %v2467, %v2667
        %v2669 = vsub.f32 1.0, %v2668
        %v2670 = vmul.f32 %v2667, %v2669
        %v2671 = vadd.f32 %v2667, %v2670
        %vm2672 = vweird.f32 %v2467
        %vm2673 = vweird.f32 %v2667
        %vm2674 = vmor %vm2672, %vm2673
        %v2675 = vsel %vm2674, %v2667, %v2671
        %v2676 = vand.u32 2147483647, %v2467
        %vm2677 = vcmp.eq.f32.partialorder %v2676, 8.507059e+37
        %v2678 = vand.u32 %v2467, 2147483648
        %v2679 = vor.u32 1.1754944e-38, %v2678
        %v2680 = vsel %vm2677, %v2679, %v2675
        %v2681 = vmul.f32 1.0, %v2680
        %v2682 = vrcp.pop %v2468
        %v2683 = vmul.f32 %v2468, %v2682
        %v2684 = vsub.f32 1.0, %v2683
        %v2685 = vmul.f32 %v2682, %v2684
        %v2686 = vadd.f32 %v2682, %v2685
        %vm2687 = vweird.f32 %v2468
        %vm2688 = vweird.f32 %v2682
        %vm2689 = vmor %vm2687, %vm2688
        %v2690 = vsel %vm2689, %v2682, %v2686
        %v2691 = vand.u32 2147483647, %v2468
        %vm2692 = vcmp.eq.f32.partialorder %v2691, 8.507059e+37
        %v2693 = vand.u32 %v2468, 2147483648
        %v2694 = vor.u32 1.1754944e-38, %v2693
        %v2695 = vsel %vm2692, %v2694, %v2690
        %v2696 = vmul.f32 1.0, %v2695
        %v2697 = vrcp.pop %v2469
        %v2698 = vmul.f32 %v2469, %v2697
        %v2699 = vsub.f32 1.0, %v2698
        %v2700 = vmul.f32 %v2697, %v2699
        %v2701 = vadd.f32 %v2697, %v2700
        %vm2702 = vweird.f32 %v2469
        %vm2703 = vweird.f32 %v2697
        %vm2704 = vmor %vm2702, %vm2703
        %v2705 = vsel %vm2704, %v2697, %v2701
        %v2706 = vand.u32 2147483647, %v2469
        %vm2707 = vcmp.eq.f32.partialorder %v2706, 8.507059e+37
        %v2708 = vand.u32 %v2469, 2147483648
        %v2709 = vor.u32 1.1754944e-38, %v2708
        %v2710 = vsel %vm2707, %v2709, %v2705
        %v2711 = vmul.f32 1.0, %v2710
        %v2712 = vrcp.pop %v2470
        %v2713 = vmul.f32 %v2470, %v2712
        %v2714 = vsub.f32 1.0, %v2713
        %v2715 = vmul.f32 %v2712, %v2714
        %v2716 = vadd.f32 %v2712, %v2715
        %vm2717 = vweird.f32 %v2470
        %vm2718 = vweird.f32 %v2712
        %vm2719 = vmor %vm2717, %vm2718
        %v2720 = vsel %vm2719, %v2712, %v2716
        %v2721 = vand.u32 2147483647, %v2470
        %vm2722 = vcmp.eq.f32.partialorder %v2721, 8.507059e+37
        %v2723 = vand.u32 %v2470, 2147483648
        %v2724 = vor.u32 1.1754944e-38, %v2723
        %v2725 = vsel %vm2722, %v2724, %v2720
        %v2726 = vmul.f32 1.0, %v2725
        %v2727 = vrcp.pop %v2471
        %v2728 = vmul.f32 %v2471, %v2727
        %v2729 = vsub.f32 1.0, %v2728
        %v2730 = vmul.f32 %v2727, %v2729
        %v2731 = vadd.f32 %v2727, %v2730
        %vm2732 = vweird.f32 %v2471
        %vm2733 = vweird.f32 %v2727
        %vm2734 = vmor %vm2732, %vm2733
        %v2735 = vsel %vm2734, %v2727, %v2731
        %v2736 = vand.u32 2147483647, %v2471
        %vm2737 = vcmp.eq.f32.partialorder %v2736, 8.507059e+37
        %v2738 = vand.u32 %v2471, 2147483648
        %v2739 = vor.u32 1.1754944e-38, %v2738
        %v2740 = vsel %vm2737, %v2739, %v2735
        %v2741 = vmul.f32 1.0, %v2740
        %v2742 = vrcp.pop %v2472
        %v2743 = vmul.f32 %v2472, %v2742
        %v2744 = vsub.f32 1.0, %v2743
        %v2745 = vmul.f32 %v2742, %v2744
        %v2746 = vadd.f32 %v2742, %v2745
        %vm2747 = vweird.f32 %v2472
        %vm2748 = vweird.f32 %v2742
        %vm2749 = vmor %vm2747, %vm2748
        %v2750 = vsel %vm2749, %v2742, %v2746
        %v2751 = vand.u32 2147483647, %v2472
        %vm2752 = vcmp.eq.f32.partialorder %v2751, 8.507059e+37
        %v2753 = vand.u32 %v2472, 2147483648
        %v2754 = vor.u32 1.1754944e-38, %v2753
        %v2755 = vsel %vm2752, %v2754, %v2750
        %v2756 = vmul.f32 1.0, %v2755
        %v2757 = vrcp.pop %v2473
        %v2758 = vmul.f32 %v2473, %v2757
        %v2759 = vsub.f32 1.0, %v2758
        %v2760 = vmul.f32 %v2757, %v2759
        %v2761 = vadd.f32 %v2757, %v2760
        %vm2762 = vweird.f32 %v2473
        %vm2763 = vweird.f32 %v2757
        %vm2764 = vmor %vm2762, %vm2763
        %v2765 = vsel %vm2764, %v2757, %v2761
        %v2766 = vand.u32 2147483647, %v2473
        %vm2767 = vcmp.eq.f32.partialorder %v2766, 8.507059e+37
        %v2768 = vand.u32 %v2473, 2147483648
        %v2769 = vor.u32 1.1754944e-38, %v2768
        %v2770 = vsel %vm2767, %v2769, %v2765
        %v2771 = vmul.f32 1.0, %v2770
        %v2772 = vrcp.pop %v2474
        %v2773 = vmul.f32 %v2474, %v2772
        %v2774 = vsub.f32 1.0, %v2773
        %v2775 = vmul.f32 %v2772, %v2774
        %v2776 = vadd.f32 %v2772, %v2775
        %vm2777 = vweird.f32 %v2474
        %vm2778 = vweird.f32 %v2772
        %vm2779 = vmor %vm2777, %vm2778
        %v2780 = vsel %vm2779, %v2772, %v2776
        %v2781 = vand.u32 2147483647, %v2474
        %vm2782 = vcmp.eq.f32.partialorder %v2781, 8.507059e+37
        %v2783 = vand.u32 %v2474, 2147483648
        %v2784 = vor.u32 1.1754944e-38, %v2783
        %v2785 = vsel %vm2782, %v2784, %v2780
        %v2786 = vmul.f32 1.0, %v2785
        %v2787 = vrcp.pop %v2475
        %v2788 = vmul.f32 %v2475, %v2787
        %v2789 = vsub.f32 1.0, %v2788
        %v2790 = vmul.f32 %v2787, %v2789
        %v2791 = vadd.f32 %v2787, %v2790
        %vm2792 = vweird.f32 %v2475
        %vm2793 = vweird.f32 %v2787
        %vm2794 = vmor %vm2792, %vm2793
        %v2795 = vsel %vm2794, %v2787, %v2791
        %v2796 = vand.u32 2147483647, %v2475
        %vm2797 = vcmp.eq.f32.partialorder %v2796, 8.507059e+37
        %v2798 = vand.u32 %v2475, 2147483648
        %v2799 = vor.u32 1.1754944e-38, %v2798
        %v2800 = vsel %vm2797, %v2799, %v2795
        %v2801 = vmul.f32 1.0, %v2800
        %v2802 = vrcp.pop %v2476
        %v2803 = vmul.f32 %v2476, %v2802
        %v2804 = vsub.f32 1.0, %v2803
        %v2805 = vmul.f32 %v2802, %v2804
        %v2806 = vadd.f32 %v2802, %v2805
        %vm2807 = vweird.f32 %v2476
        %vm2808 = vweird.f32 %v2802
        %vm2809 = vmor %vm2807, %vm2808
        %v2810 = vsel %vm2809, %v2802, %v2806
        %v2811 = vand.u32 2147483647, %v2476
        %vm2812 = vcmp.eq.f32.partialorder %v2811, 8.507059e+37
        %v2813 = vand.u32 %v2476, 2147483648
        %v2814 = vor.u32 1.1754944e-38, %v2813
        %v2815 = vsel %vm2812, %v2814, %v2810
        %v2816 = vmul.f32 1.0, %v2815
        %v2817 = vrcp.pop %v2477
        %v2818 = vmul.f32 %v2477, %v2817
        %v2819 = vsub.f32 1.0, %v2818
        %v2820 = vmul.f32 %v2817, %v2819
        %v2821 = vadd.f32 %v2817, %v2820
        %vm2822 = vweird.f32 %v2477
        %vm2823 = vweird.f32 %v2817
        %vm2824 = vmor %vm2822, %vm2823
        %v2825 = vsel %vm2824, %v2817, %v2821
        %v2826 = vand.u32 2147483647, %v2477
        %vm2827 = vcmp.eq.f32.partialorder %v2826, 8.507059e+37
        %v2828 = vand.u32 %v2477, 2147483648
        %v2829 = vor.u32 1.1754944e-38, %v2828
        %v2830 = vsel %vm2827, %v2829, %v2825
        %v2831 = vmul.f32 1.0, %v2830
        %v2832 = vrcp.pop %v2478
        %v2833 = vmul.f32 %v2478, %v2832
        %v2834 = vsub.f32 1.0, %v2833
        %v2835 = vmul.f32 %v2832, %v2834
        %v2836 = vadd.f32 %v2832, %v2835
        %vm2837 = vweird.f32 %v2478
        %vm2838 = vweird.f32 %v2832
        %vm2839 = vmor %vm2837, %vm2838
        %v2840 = vsel %vm2839, %v2832, %v2836
        %v2841 = vand.u32 2147483647, %v2478
        %vm2842 = vcmp.eq.f32.partialorder %v2841, 8.507059e+37
        %v2843 = vand.u32 %v2478, 2147483648
        %v2844 = vor.u32 1.1754944e-38, %v2843
        %v2845 = vsel %vm2842, %v2844, %v2840
        %v2846 = vmul.f32 1.0, %v2845
        %v2847 = vrcp.pop %v2479
        %v2848 = vmul.f32 %v2479, %v2847
        %v2849 = vsub.f32 1.0, %v2848
        %v2850 = vmul.f32 %v2847, %v2849
        %v2851 = vadd.f32 %v2847, %v2850
        %vm2852 = vweird.f32 %v2479
        %vm2853 = vweird.f32 %v2847
        %vm2854 = vmor %vm2852, %vm2853
        %v2855 = vsel %vm2854, %v2847, %v2851
        %v2856 = vand.u32 2147483647, %v2479
        %vm2857 = vcmp.eq.f32.partialorder %v2856, 8.507059e+37
        %v2858 = vand.u32 %v2479, 2147483648
        %v2859 = vor.u32 1.1754944e-38, %v2858
        %v2860 = vsel %vm2857, %v2859, %v2855
        %v2861 = vmul.f32 1.0, %v2860
        %v2862 = vrcp.pop %v2480
        %v2863 = vmul.f32 %v2480, %v2862
        %v2864 = vsub.f32 1.0, %v2863
        %v2865 = vmul.f32 %v2862, %v2864
        %v2866 = vadd.f32 %v2862, %v2865
        %vm2867 = vweird.f32 %v2480
        %vm2868 = vweird.f32 %v2862
        %vm2869 = vmor %vm2867, %vm2868
        %v2870 = vsel %vm2869, %v2862, %v2866
        %v2871 = vand.u32 2147483647, %v2480
        %vm2872 = vcmp.eq.f32.partialorder %v2871, 8.507059e+37
        %v2873 = vand.u32 %v2480, 2147483648
        %v2874 = vor.u32 1.1754944e-38, %v2873
        %v2875 = vsel %vm2872, %v2874, %v2870
        %v2876 = vmul.f32 1.0, %v2875
        %v2877 = vrcp.pop %v2481
        %v2878 = vmul.f32 %v2481, %v2877
        %v2879 = vsub.f32 1.0, %v2878
        %v2880 = vmul.f32 %v2877, %v2879
        %v2881 = vadd.f32 %v2877, %v2880
        %vm2882 = vweird.f32 %v2481
        %vm2883 = vweird.f32 %v2877
        %vm2884 = vmor %vm2882, %vm2883
        %v2885 = vsel %vm2884, %v2877, %v2881
        %v2886 = vand.u32 2147483647, %v2481
        %vm2887 = vcmp.eq.f32.partialorder %v2886, 8.507059e+37
        %v2888 = vand.u32 %v2481, 2147483648
        %v2889 = vor.u32 1.1754944e-38, %v2888
        %v2890 = vsel %vm2887, %v2889, %v2885
        %v2891 = vmul.f32 1.0, %v2890
        %v2892 = vrcp.pop %v2482
        %v2893 = vmul.f32 %v2482, %v2892
        %v2894 = vsub.f32 1.0, %v2893
        %v2895 = vmul.f32 %v2892, %v2894
        %v2896 = vadd.f32 %v2892, %v2895
        %vm2897 = vweird.f32 %v2482
        %vm2898 = vweird.f32 %v2892
        %vm2899 = vmor %vm2897, %vm2898
        %v2900 = vsel %vm2899, %v2892, %v2896
        %v2901 = vand.u32 2147483647, %v2482
        %vm2902 = vcmp.eq.f32.partialorder %v2901, 8.507059e+37
        %v2903 = vand.u32 %v2482, 2147483648
        %v2904 = vor.u32 1.1754944e-38, %v2903
        %v2905 = vsel %vm2902, %v2904, %v2900
        %v2906 = vmul.f32 1.0, %v2905
        %v2907 = vrcp.pop %v2483
        %v2908 = vmul.f32 %v2483, %v2907
        %v2909 = vsub.f32 1.0, %v2908
        %v2910 = vmul.f32 %v2907, %v2909
        %v2911 = vadd.f32 %v2907, %v2910
        %vm2912 = vweird.f32 %v2483
        %vm2913 = vweird.f32 %v2907
        %vm2914 = vmor %vm2912, %vm2913
        %v2915 = vsel %vm2914, %v2907, %v2911
        %v2916 = vand.u32 2147483647, %v2483
        %vm2917 = vcmp.eq.f32.partialorder %v2916, 8.507059e+37
        %v2918 = vand.u32 %v2483, 2147483648
        %v2919 = vor.u32 1.1754944e-38, %v2918
        %v2920 = vsel %vm2917, %v2919, %v2915
        %v2921 = vmul.f32 1.0, %v2920
        %v2922 = vrcp.pop %v2484
        %v2923 = vmul.f32 %v2484, %v2922
        %v2924 = vsub.f32 1.0, %v2923
        %v2925 = vmul.f32 %v2922, %v2924
        %v2926 = vadd.f32 %v2922, %v2925
        %vm2927 = vweird.f32 %v2484
        %vm2928 = vweird.f32 %v2922
        %vm2929 = vmor %vm2927, %vm2928
        %v2930 = vsel %vm2929, %v2922, %v2926
        %v2931 = vand.u32 2147483647, %v2484
        %vm2932 = vcmp.eq.f32.partialorder %v2931, 8.507059e+37
        %v2933 = vand.u32 %v2484, 2147483648
        %v2934 = vor.u32 1.1754944e-38, %v2933
        %v2935 = vsel %vm2932, %v2934, %v2930
        %v2936 = vmul.f32 1.0, %v2935
        %v2937 = vrcp.pop %v2485
        %v2938 = vmul.f32 %v2485, %v2937
        %v2939 = vsub.f32 1.0, %v2938
        %v2940 = vmul.f32 %v2937, %v2939
        %v2941 = vadd.f32 %v2937, %v2940
        %vm2942 = vweird.f32 %v2485
        %vm2943 = vweird.f32 %v2937
        %vm2944 = vmor %vm2942, %vm2943
        %v2945 = vsel %vm2944, %v2937, %v2941
        %v2946 = vand.u32 2147483647, %v2485
        %vm2947 = vcmp.eq.f32.partialorder %v2946, 8.507059e+37
        %v2948 = vand.u32 %v2485, 2147483648
        %v2949 = vor.u32 1.1754944e-38, %v2948
        %v2950 = vsel %vm2947, %v2949, %v2945
        %v2951 = vmul.f32 1.0, %v2950
        %v2952 = vrcp.pop %v2486
        %v2953 = vmul.f32 %v2486, %v2952
        %v2954 = vsub.f32 1.0, %v2953
        %v2955 = vmul.f32 %v2952, %v2954
        %v2956 = vadd.f32 %v2952, %v2955
        %vm2957 = vweird.f32 %v2486
        %vm2958 = vweird.f32 %v2952
        %vm2959 = vmor %vm2957, %vm2958
        %v2960 = vsel %vm2959, %v2952, %v2956
        %v2961 = vand.u32 2147483647, %v2486
        %vm2962 = vcmp.eq.f32.partialorder %v2961, 8.507059e+37
        %v2963 = vand.u32 %v2486, 2147483648
        %v2964 = vor.u32 1.1754944e-38, %v2963
        %v2965 = vsel %vm2962, %v2964, %v2960
        %v2966 = vmul.f32 1.0, %v2965
        %v2967 = vadd.f32 %v1837, %v2119
        %v2968 = vadd.f32 %v1840, %v2122
        %v2969 = vadd.f32 %v1843, %v2125
        %v2970 = vadd.f32 %v1846, %v2128
        %v2971 = vadd.f32 %v1849, %v2131
        %v2972 = vadd.f32 %v1852, %v2134
        %v2973 = vadd.f32 %v1855, %v2137
        %v2974 = vadd.f32 %v1858, %v2140
        %v2975 = vadd.f32 %v1861, %v2143
        %v2976 = vadd.f32 %v1864, %v2146
        %v2977 = vadd.f32 %v1867, %v2149
        %v2978 = vadd.f32 %v1870, %v2152
        %v2979 = vadd.f32 %v1873, %v2155
        %v2980 = vadd.f32 %v1876, %v2158
        %v2981 = vadd.f32 %v1879, %v2161
        %v2982 = vadd.f32 %v1882, %v2164
        %v2983 = vadd.f32 %v1885, %v2167
        %v2984 = vadd.f32 %v1888, %v2170
        %v2985 = vadd.f32 %v1891, %v2173
        %v2986 = vadd.f32 %v1894, %v2176
        %v2987 = vadd.f32 %v1897, %v2179
        %v2988 = vadd.f32 %v1900, %v2182
        %v2989 = vadd.f32 %v1903, %v2185
        %v2990 = vadd.f32 %v1906, %v2188
        %v2991 = vadd.f32 %v1909, %v2191
        %v2992 = vadd.f32 %v1912, %v2194
        %v2993 = vadd.f32 %v1915, %v2197
        %v2994 = vadd.f32 %v1918, %v2200
        %v2995 = vadd.f32 %v1921, %v2203
        %v2996 = vadd.f32 %v1924, %v2206
        %v2997 = vadd.f32 %v1927, %v2209
        %v2998 = vadd.f32 %v1930, %v2212
        %v2999 = vxor.u32 %v2967, 2147483648
        %v3000 = vxor.u32 %v2968, 2147483648
        %v3001 = vxor.u32 %v2969, 2147483648
        %v3002 = vxor.u32 %v2970, 2147483648
        %v3003 = vxor.u32 %v2971, 2147483648
        %v3004 = vxor.u32 %v2972, 2147483648
        %v3005 = vxor.u32 %v2973, 2147483648
        %v3006 = vxor.u32 %v2974, 2147483648
        %v3007 = vxor.u32 %v2975, 2147483648
        %v3008 = vxor.u32 %v2976, 2147483648
        %v3009 = vxor.u32 %v2977, 2147483648
        %v3010 = vxor.u32 %v2978, 2147483648
        %v3011 = vxor.u32 %v2979, 2147483648
        %v3012 = vxor.u32 %v2980, 2147483648
        %v3013 = vxor.u32 %v2981, 2147483648
        %v3014 = vxor.u32 %v2982, 2147483648
        %v3015 = vxor.u32 %v2983, 2147483648
        %v3016 = vxor.u32 %v2984, 2147483648
        %v3017 = vxor.u32 %v2985, 2147483648
        %v3018 = vxor.u32 %v2986, 2147483648
        %v3019 = vxor.u32 %v2987, 2147483648
        %v3020 = vxor.u32 %v2988, 2147483648
        %v3021 = vxor.u32 %v2989, 2147483648
        %v3022 = vxor.u32 %v2990, 2147483648
        %v3023 = vxor.u32 %v2991, 2147483648
        %v3024 = vxor.u32 %v2992, 2147483648
        %v3025 = vxor.u32 %v2993, 2147483648
        %v3026 = vxor.u32 %v2994, 2147483648
        %v3027 = vxor.u32 %v2995, 2147483648
        %v3028 = vxor.u32 %v2996, 2147483648
        %v3029 = vxor.u32 %v2997, 2147483648
        %v3030 = vxor.u32 %v2998, 2147483648
        %v3031 = vmul.f32 %v2999, 1.442695
        %v3032 = vpow.pop %v3031
        %v3033 = vmul.f32 %v3000, 1.442695
        %v3034 = vpow.pop %v3033
        %v3035 = vmul.f32 %v3001, 1.442695
        %v3036 = vpow.pop %v3035
        %v3037 = vmul.f32 %v3002, 1.442695
        %v3038 = vpow.pop %v3037
        %v3039 = vmul.f32 %v3003, 1.442695
        %v3040 = vpow.pop %v3039
        %v3041 = vmul.f32 %v3004, 1.442695
        %v3042 = vpow.pop %v3041
        %v3043 = vmul.f32 %v3005, 1.442695
        %v3044 = vpow.pop %v3043
        %v3045 = vmul.f32 %v3006, 1.442695
        %v3046 = vpow.pop %v3045
        %v3047 = vmul.f32 %v3007, 1.442695
        %v3048 = vpow.pop %v3047
        %v3049 = vmul.f32 %v3008, 1.442695
        %v3050 = vpow.pop %v3049
        %v3051 = vmul.f32 %v3009, 1.442695
        %v3052 = vpow.pop %v3051
        %v3053 = vmul.f32 %v3010, 1.442695
        %v3054 = vpow.pop %v3053
        %v3055 = vmul.f32 %v3011, 1.442695
        %v3056 = vpow.pop %v3055
        %v3057 = vmul.f32 %v3012, 1.442695
        %v3058 = vpow.pop %v3057
        %v3059 = vmul.f32 %v3013, 1.442695
        %v3060 = vpow.pop %v3059
        %v3061 = vmul.f32 %v3014, 1.442695
        %v3062 = vpow.pop %v3061
        %v3063 = vmul.f32 %v3015, 1.442695
        %v3064 = vpow.pop %v3063
        %v3065 = vmul.f32 %v3016, 1.442695
        %v3066 = vpow.pop %v3065
        %v3067 = vmul.f32 %v3017, 1.442695
        %v3068 = vpow.pop %v3067
        %v3069 = vmul.f32 %v3018, 1.442695
        %v3070 = vpow.pop %v3069
        %v3071 = vmul.f32 %v3019, 1.442695
        %v3072 = vpow.pop %v3071
        %v3073 = vmul.f32 %v3020, 1.442695
        %v3074 = vpow.pop %v3073
        %v3075 = vmul.f32 %v3021, 1.442695
        %v3076 = vpow.pop %v3075
        %v3077 = vmul.f32 %v3022, 1.442695
        %v3078 = vpow.pop %v3077
        %v3079 = vmul.f32 %v3023, 1.442695
        %v3080 = vpow.pop %v3079
        %v3081 = vmul.f32 %v3024, 1.442695
        %v3082 = vpow.pop %v3081
        %v3083 = vmul.f32 %v3025, 1.442695
        %v3084 = vpow.pop %v3083
        %v3085 = vmul.f32 %v3026, 1.442695
        %v3086 = vpow.pop %v3085
        %v3087 = vmul.f32 %v3027, 1.442695
        %v3088 = vpow.pop %v3087
        %v3089 = vmul.f32 %v3028, 1.442695
        %v3090 = vpow.pop %v3089
        %v3091 = vmul.f32 %v3029, 1.442695
        %v3092 = vpow.pop %v3091
        %v3093 = vmul.f32 %v3030, 1.442695
        %v3094 = vpow.pop %v3093
        %v3095 = vadd.f32 %v3032, 1.0
        %v3096 = vadd.f32 %v3034, 1.0
        %v3097 = vadd.f32 %v3036, 1.0
        %v3098 = vadd.f32 %v3038, 1.0
        %v3099 = vadd.f32 %v3040, 1.0
        %v3100 = vadd.f32 %v3042, 1.0
        %v3101 = vadd.f32 %v3044, 1.0
        %v3102 = vadd.f32 %v3046, 1.0
        %v3103 = vadd.f32 %v3048, 1.0
        %v3104 = vadd.f32 %v3050, 1.0
        %v3105 = vadd.f32 %v3052, 1.0
        %v3106 = vadd.f32 %v3054, 1.0
        %v3107 = vadd.f32 %v3056, 1.0
        %v3108 = vadd.f32 %v3058, 1.0
        %v3109 = vadd.f32 %v3060, 1.0
        %v3110 = vadd.f32 %v3062, 1.0
        %v3111 = vadd.f32 %v3064, 1.0
        %v3112 = vadd.f32 %v3066, 1.0
        %v3113 = vadd.f32 %v3068, 1.0
        %v3114 = vadd.f32 %v3070, 1.0
        %v3115 = vadd.f32 %v3072, 1.0
        %v3116 = vadd.f32 %v3074, 1.0
        %v3117 = vadd.f32 %v3076, 1.0
        %v3118 = vadd.f32 %v3078, 1.0
        %v3119 = vadd.f32 %v3080, 1.0
        %v3120 = vadd.f32 %v3082, 1.0
        %v3121 = vadd.f32 %v3084, 1.0
        %v3122 = vadd.f32 %v3086, 1.0
        %v3123 = vadd.f32 %v3088, 1.0
        %v3124 = vadd.f32 %v3090, 1.0
        %v3125 = vadd.f32 %v3092, 1.0
        %v3126 = vadd.f32 %v3094, 1.0
        %v3127 = vrcp.pop %v3095
        %v3128 = vmul.f32 %v3095, %v3127
        %v3129 = vsub.f32 1.0, %v3128
        %v3130 = vmul.f32 %v3127, %v3129
        %v3131 = vadd.f32 %v3127, %v3130
        %vm3132 = vweird.f32 %v3095
        %vm3133 = vweird.f32 %v3127
        %vm3134 = vmor %vm3132, %vm3133
        %v3135 = vsel %vm3134, %v3127, %v3131
        %v3136 = vand.u32 2147483647, %v3095
        %vm3137 = vcmp.eq.f32.partialorder %v3136, 8.507059e+37
        %v3138 = vand.u32 %v3095, 2147483648
        %v3139 = vor.u32 1.1754944e-38, %v3138
        %v3140 = vsel %vm3137, %v3139, %v3135
        %v3141 = vmul.f32 1.0, %v3140
        %v3142 = vrcp.pop %v3096
        %v3143 = vmul.f32 %v3096, %v3142
        %v3144 = vsub.f32 1.0, %v3143
        %v3145 = vmul.f32 %v3142, %v3144
        %v3146 = vadd.f32 %v3142, %v3145
        %vm3147 = vweird.f32 %v3096
        %vm3148 = vweird.f32 %v3142
        %vm3149 = vmor %vm3147, %vm3148
        %v3150 = vsel %vm3149, %v3142, %v3146
        %v3151 = vand.u32 2147483647, %v3096
        %vm3152 = vcmp.eq.f32.partialorder %v3151, 8.507059e+37
        %v3153 = vand.u32 %v3096, 2147483648
        %v3154 = vor.u32 1.1754944e-38, %v3153
        %v3155 = vsel %vm3152, %v3154, %v3150
        %v3156 = vmul.f32 1.0, %v3155
        %v3157 = vrcp.pop %v3097
        %v3158 = vmul.f32 %v3097, %v3157
        %v3159 = vsub.f32 1.0, %v3158
        %v3160 = vmul.f32 %v3157, %v3159
        %v3161 = vadd.f32 %v3157, %v3160
        %vm3162 = vweird.f32 %v3097
        %vm3163 = vweird.f32 %v3157
        %vm3164 = vmor %vm3162, %vm3163
        %v3165 = vsel %vm3164, %v3157, %v3161
        %v3166 = vand.u32 2147483647, %v3097
        %vm3167 = vcmp.eq.f32.partialorder %v3166, 8.507059e+37
        %v3168 = vand.u32 %v3097, 2147483648
        %v3169 = vor.u32 1.1754944e-38, %v3168
        %v3170 = vsel %vm3167, %v3169, %v3165
        %v3171 = vmul.f32 1.0, %v3170
        %v3172 = vrcp.pop %v3098
        %v3173 = vmul.f32 %v3098, %v3172
        %v3174 = vsub.f32 1.0, %v3173
        %v3175 = vmul.f32 %v3172, %v3174
        %v3176 = vadd.f32 %v3172, %v3175
        %vm3177 = vweird.f32 %v3098
        %vm3178 = vweird.f32 %v3172
        %vm3179 = vmor %vm3177, %vm3178
        %v3180 = vsel %vm3179, %v3172, %v3176
        %v3181 = vand.u32 2147483647, %v3098
        %vm3182 = vcmp.eq.f32.partialorder %v3181, 8.507059e+37
        %v3183 = vand.u32 %v3098, 2147483648
        %v3184 = vor.u32 1.1754944e-38, %v3183
        %v3185 = vsel %vm3182, %v3184, %v3180
        %v3186 = vmul.f32 1.0, %v3185
        %v3187 = vrcp.pop %v3099
        %v3188 = vmul.f32 %v3099, %v3187
        %v3189 = vsub.f32 1.0, %v3188
        %v3190 = vmul.f32 %v3187, %v3189
        %v3191 = vadd.f32 %v3187, %v3190
        %vm3192 = vweird.f32 %v3099
        %vm3193 = vweird.f32 %v3187
        %vm3194 = vmor %vm3192, %vm3193
        %v3195 = vsel %vm3194, %v3187, %v3191
        %v3196 = vand.u32 2147483647, %v3099
        %vm3197 = vcmp.eq.f32.partialorder %v3196, 8.507059e+37
        %v3198 = vand.u32 %v3099, 2147483648
        %v3199 = vor.u32 1.1754944e-38, %v3198
        %v3200 = vsel %vm3197, %v3199, %v3195
        %v3201 = vmul.f32 1.0, %v3200
        %v3202 = vrcp.pop %v3100
        %v3203 = vmul.f32 %v3100, %v3202
        %v3204 = vsub.f32 1.0, %v3203
        %v3205 = vmul.f32 %v3202, %v3204
        %v3206 = vadd.f32 %v3202, %v3205
        %vm3207 = vweird.f32 %v3100
        %vm3208 = vweird.f32 %v3202
        %vm3209 = vmor %vm3207, %vm3208
        %v3210 = vsel %vm3209, %v3202, %v3206
        %v3211 = vand.u32 2147483647, %v3100
        %vm3212 = vcmp.eq.f32.partialorder %v3211, 8.507059e+37
        %v3213 = vand.u32 %v3100, 2147483648
        %v3214 = vor.u32 1.1754944e-38, %v3213
        %v3215 = vsel %vm3212, %v3214, %v3210
        %v3216 = vmul.f32 1.0, %v3215
        %v3217 = vrcp.pop %v3101
        %v3218 = vmul.f32 %v3101, %v3217
        %v3219 = vsub.f32 1.0, %v3218
        %v3220 = vmul.f32 %v3217, %v3219
        %v3221 = vadd.f32 %v3217, %v3220
        %vm3222 = vweird.f32 %v3101
        %vm3223 = vweird.f32 %v3217
        %vm3224 = vmor %vm3222, %vm3223
        %v3225 = vsel %vm3224, %v3217, %v3221
        %v3226 = vand.u32 2147483647, %v3101
        %vm3227 = vcmp.eq.f32.partialorder %v3226, 8.507059e+37
        %v3228 = vand.u32 %v3101, 2147483648
        %v3229 = vor.u32 1.1754944e-38, %v3228
        %v3230 = vsel %vm3227, %v3229, %v3225
        %v3231 = vmul.f32 1.0, %v3230
        %v3232 = vrcp.pop %v3102
        %v3233 = vmul.f32 %v3102, %v3232
        %v3234 = vsub.f32 1.0, %v3233
        %v3235 = vmul.f32 %v3232, %v3234
        %v3236 = vadd.f32 %v3232, %v3235
        %vm3237 = vweird.f32 %v3102
        %vm3238 = vweird.f32 %v3232
        %vm3239 = vmor %vm3237, %vm3238
        %v3240 = vsel %vm3239, %v3232, %v3236
        %v3241 = vand.u32 2147483647, %v3102
        %vm3242 = vcmp.eq.f32.partialorder %v3241, 8.507059e+37
        %v3243 = vand.u32 %v3102, 2147483648
        %v3244 = vor.u32 1.1754944e-38, %v3243
        %v3245 = vsel %vm3242, %v3244, %v3240
        %v3246 = vmul.f32 1.0, %v3245
        %v3247 = vrcp.pop %v3103
        %v3248 = vmul.f32 %v3103, %v3247
        %v3249 = vsub.f32 1.0, %v3248
        %v3250 = vmul.f32 %v3247, %v3249
        %v3251 = vadd.f32 %v3247, %v3250
        %vm3252 = vweird.f32 %v3103
        %vm3253 = vweird.f32 %v3247
        %vm3254 = vmor %vm3252, %vm3253
        %v3255 = vsel %vm3254, %v3247, %v3251
        %v3256 = vand.u32 2147483647, %v3103
        %vm3257 = vcmp.eq.f32.partialorder %v3256, 8.507059e+37
        %v3258 = vand.u32 %v3103, 2147483648
        %v3259 = vor.u32 1.1754944e-38, %v3258
        %v3260 = vsel %vm3257, %v3259, %v3255
        %v3261 = vmul.f32 1.0, %v3260
        %v3262 = vrcp.pop %v3104
        %v3263 = vmul.f32 %v3104, %v3262
        %v3264 = vsub.f32 1.0, %v3263
        %v3265 = vmul.f32 %v3262, %v3264
        %v3266 = vadd.f32 %v3262, %v3265
        %vm3267 = vweird.f32 %v3104
        %vm3268 = vweird.f32 %v3262
        %vm3269 = vmor %vm3267, %vm3268
        %v3270 = vsel %vm3269, %v3262, %v3266
        %v3271 = vand.u32 2147483647, %v3104
        %vm3272 = vcmp.eq.f32.partialorder %v3271, 8.507059e+37
        %v3273 = vand.u32 %v3104, 2147483648
        %v3274 = vor.u32 1.1754944e-38, %v3273
        %v3275 = vsel %vm3272, %v3274, %v3270
        %v3276 = vmul.f32 1.0, %v3275
        %v3277 = vrcp.pop %v3105
        %v3278 = vmul.f32 %v3105, %v3277
        %v3279 = vsub.f32 1.0, %v3278
        %v3280 = vmul.f32 %v3277, %v3279
        %v3281 = vadd.f32 %v3277, %v3280
        %vm3282 = vweird.f32 %v3105
        %vm3283 = vweird.f32 %v3277
        %vm3284 = vmor %vm3282, %vm3283
        %v3285 = vsel %vm3284, %v3277, %v3281
        %v3286 = vand.u32 2147483647, %v3105
        %vm3287 = vcmp.eq.f32.partialorder %v3286, 8.507059e+37
        %v3288 = vand.u32 %v3105, 2147483648
        %v3289 = vor.u32 1.1754944e-38, %v3288
        %v3290 = vsel %vm3287, %v3289, %v3285
        %v3291 = vmul.f32 1.0, %v3290
        %v3292 = vrcp.pop %v3106
        %v3293 = vmul.f32 %v3106, %v3292
        %v3294 = vsub.f32 1.0, %v3293
        %v3295 = vmul.f32 %v3292, %v3294
        %v3296 = vadd.f32 %v3292, %v3295
        %vm3297 = vweird.f32 %v3106
        %vm3298 = vweird.f32 %v3292
        %vm3299 = vmor %vm3297, %vm3298
        %v3300 = vsel %vm3299, %v3292, %v3296
        %v3301 = vand.u32 2147483647, %v3106
        %vm3302 = vcmp.eq.f32.partialorder %v3301, 8.507059e+37
        %v3303 = vand.u32 %v3106, 2147483648
        %v3304 = vor.u32 1.1754944e-38, %v3303
        %v3305 = vsel %vm3302, %v3304, %v3300
        %v3306 = vmul.f32 1.0, %v3305
        %v3307 = vrcp.pop %v3107
        %v3308 = vmul.f32 %v3107, %v3307
        %v3309 = vsub.f32 1.0, %v3308
        %v3310 = vmul.f32 %v3307, %v3309
        %v3311 = vadd.f32 %v3307, %v3310
        %vm3312 = vweird.f32 %v3107
        %vm3313 = vweird.f32 %v3307
        %vm3314 = vmor %vm3312, %vm3313
        %v3315 = vsel %vm3314, %v3307, %v3311
        %v3316 = vand.u32 2147483647, %v3107
        %vm3317 = vcmp.eq.f32.partialorder %v3316, 8.507059e+37
        %v3318 = vand.u32 %v3107, 2147483648
        %v3319 = vor.u32 1.1754944e-38, %v3318
        %v3320 = vsel %vm3317, %v3319, %v3315
        %v3321 = vmul.f32 1.0, %v3320
        %v3322 = vrcp.pop %v3108
        %v3323 = vmul.f32 %v3108, %v3322
        %v3324 = vsub.f32 1.0, %v3323
        %v3325 = vmul.f32 %v3322, %v3324
        %v3326 = vadd.f32 %v3322, %v3325
        %vm3327 = vweird.f32 %v3108
        %vm3328 = vweird.f32 %v3322
        %vm3329 = vmor %vm3327, %vm3328
        %v3330 = vsel %vm3329, %v3322, %v3326
        %v3331 = vand.u32 2147483647, %v3108
        %vm3332 = vcmp.eq.f32.partialorder %v3331, 8.507059e+37
        %v3333 = vand.u32 %v3108, 2147483648
        %v3334 = vor.u32 1.1754944e-38, %v3333
        %v3335 = vsel %vm3332, %v3334, %v3330
        %v3336 = vmul.f32 1.0, %v3335
        %v3337 = vrcp.pop %v3109
        %v3338 = vmul.f32 %v3109, %v3337
        %v3339 = vsub.f32 1.0, %v3338
        %v3340 = vmul.f32 %v3337, %v3339
        %v3341 = vadd.f32 %v3337, %v3340
        %vm3342 = vweird.f32 %v3109
        %vm3343 = vweird.f32 %v3337
        %vm3344 = vmor %vm3342, %vm3343
        %v3345 = vsel %vm3344, %v3337, %v3341
        %v3346 = vand.u32 2147483647, %v3109
        %vm3347 = vcmp.eq.f32.partialorder %v3346, 8.507059e+37
        %v3348 = vand.u32 %v3109, 2147483648
        %v3349 = vor.u32 1.1754944e-38, %v3348
        %v3350 = vsel %vm3347, %v3349, %v3345
        %v3351 = vmul.f32 1.0, %v3350
        %v3352 = vrcp.pop %v3110
        %v3353 = vmul.f32 %v3110, %v3352
        %v3354 = vsub.f32 1.0, %v3353
        %v3355 = vmul.f32 %v3352, %v3354
        %v3356 = vadd.f32 %v3352, %v3355
        %vm3357 = vweird.f32 %v3110
        %vm3358 = vweird.f32 %v3352
        %vm3359 = vmor %vm3357, %vm3358
        %v3360 = vsel %vm3359, %v3352, %v3356
        %v3361 = vand.u32 2147483647, %v3110
        %vm3362 = vcmp.eq.f32.partialorder %v3361, 8.507059e+37
        %v3363 = vand.u32 %v3110, 2147483648
        %v3364 = vor.u32 1.1754944e-38, %v3363
        %v3365 = vsel %vm3362, %v3364, %v3360
        %v3366 = vmul.f32 1.0, %v3365
        %v3367 = vrcp.pop %v3111
        %v3368 = vmul.f32 %v3111, %v3367
        %v3369 = vsub.f32 1.0, %v3368
        %v3370 = vmul.f32 %v3367, %v3369
        %v3371 = vadd.f32 %v3367, %v3370
        %vm3372 = vweird.f32 %v3111
        %vm3373 = vweird.f32 %v3367
        %vm3374 = vmor %vm3372, %vm3373
        %v3375 = vsel %vm3374, %v3367, %v3371
        %v3376 = vand.u32 2147483647, %v3111
        %vm3377 = vcmp.eq.f32.partialorder %v3376, 8.507059e+37
        %v3378 = vand.u32 %v3111, 2147483648
        %v3379 = vor.u32 1.1754944e-38, %v3378
        %v3380 = vsel %vm3377, %v3379, %v3375
        %v3381 = vmul.f32 1.0, %v3380
        %v3382 = vrcp.pop %v3112
        %v3383 = vmul.f32 %v3112, %v3382
        %v3384 = vsub.f32 1.0, %v3383
        %v3385 = vmul.f32 %v3382, %v3384
        %v3386 = vadd.f32 %v3382, %v3385
        %vm3387 = vweird.f32 %v3112
        %vm3388 = vweird.f32 %v3382
        %vm3389 = vmor %vm3387, %vm3388
        %v3390 = vsel %vm3389, %v3382, %v3386
        %v3391 = vand.u32 2147483647, %v3112
        %vm3392 = vcmp.eq.f32.partialorder %v3391, 8.507059e+37
        %v3393 = vand.u32 %v3112, 2147483648
        %v3394 = vor.u32 1.1754944e-38, %v3393
        %v3395 = vsel %vm3392, %v3394, %v3390
        %v3396 = vmul.f32 1.0, %v3395
        %v3397 = vrcp.pop %v3113
        %v3398 = vmul.f32 %v3113, %v3397
        %v3399 = vsub.f32 1.0, %v3398
        %v3400 = vmul.f32 %v3397, %v3399
        %v3401 = vadd.f32 %v3397, %v3400
        %vm3402 = vweird.f32 %v3113
        %vm3403 = vweird.f32 %v3397
        %vm3404 = vmor %vm3402, %vm3403
        %v3405 = vsel %vm3404, %v3397, %v3401
        %v3406 = vand.u32 2147483647, %v3113
        %vm3407 = vcmp.eq.f32.partialorder %v3406, 8.507059e+37
        %v3408 = vand.u32 %v3113, 2147483648
        %v3409 = vor.u32 1.1754944e-38, %v3408
        %v3410 = vsel %vm3407, %v3409, %v3405
        %v3411 = vmul.f32 1.0, %v3410
        %v3412 = vrcp.pop %v3114
        %v3413 = vmul.f32 %v3114, %v3412
        %v3414 = vsub.f32 1.0, %v3413
        %v3415 = vmul.f32 %v3412, %v3414
        %v3416 = vadd.f32 %v3412, %v3415
        %vm3417 = vweird.f32 %v3114
        %vm3418 = vweird.f32 %v3412
        %vm3419 = vmor %vm3417, %vm3418
        %v3420 = vsel %vm3419, %v3412, %v3416
        %v3421 = vand.u32 2147483647, %v3114
        %vm3422 = vcmp.eq.f32.partialorder %v3421, 8.507059e+37
        %v3423 = vand.u32 %v3114, 2147483648
        %v3424 = vor.u32 1.1754944e-38, %v3423
        %v3425 = vsel %vm3422, %v3424, %v3420
        %v3426 = vmul.f32 1.0, %v3425
        %v3427 = vrcp.pop %v3115
        %v3428 = vmul.f32 %v3115, %v3427
        %v3429 = vsub.f32 1.0, %v3428
        %v3430 = vmul.f32 %v3427, %v3429
        %v3431 = vadd.f32 %v3427, %v3430
        %vm3432 = vweird.f32 %v3115
        %vm3433 = vweird.f32 %v3427
        %vm3434 = vmor %vm3432, %vm3433
        %v3435 = vsel %vm3434, %v3427, %v3431
        %v3436 = vand.u32 2147483647, %v3115
        %vm3437 = vcmp.eq.f32.partialorder %v3436, 8.507059e+37
        %v3438 = vand.u32 %v3115, 2147483648
        %v3439 = vor.u32 1.1754944e-38, %v3438
        %v3440 = vsel %vm3437, %v3439, %v3435
        %v3441 = vmul.f32 1.0, %v3440
        %v3442 = vrcp.pop %v3116
        %v3443 = vmul.f32 %v3116, %v3442
        %v3444 = vsub.f32 1.0, %v3443
        %v3445 = vmul.f32 %v3442, %v3444
        %v3446 = vadd.f32 %v3442, %v3445
        %vm3447 = vweird.f32 %v3116
        %vm3448 = vweird.f32 %v3442
        %vm3449 = vmor %vm3447, %vm3448
        %v3450 = vsel %vm3449, %v3442, %v3446
        %v3451 = vand.u32 2147483647, %v3116
        %vm3452 = vcmp.eq.f32.partialorder %v3451, 8.507059e+37
        %v3453 = vand.u32 %v3116, 2147483648
        %v3454 = vor.u32 1.1754944e-38, %v3453
        %v3455 = vsel %vm3452, %v3454, %v3450
        %v3456 = vmul.f32 1.0, %v3455
        %v3457 = vrcp.pop %v3117
        %v3458 = vmul.f32 %v3117, %v3457
        %v3459 = vsub.f32 1.0, %v3458
        %v3460 = vmul.f32 %v3457, %v3459
        %v3461 = vadd.f32 %v3457, %v3460
        %vm3462 = vweird.f32 %v3117
        %vm3463 = vweird.f32 %v3457
        %vm3464 = vmor %vm3462, %vm3463
        %v3465 = vsel %vm3464, %v3457, %v3461
        %v3466 = vand.u32 2147483647, %v3117
        %vm3467 = vcmp.eq.f32.partialorder %v3466, 8.507059e+37
        %v3468 = vand.u32 %v3117, 2147483648
        %v3469 = vor.u32 1.1754944e-38, %v3468
        %v3470 = vsel %vm3467, %v3469, %v3465
        %v3471 = vmul.f32 1.0, %v3470
        %v3472 = vrcp.pop %v3118
        %v3473 = vmul.f32 %v3118, %v3472
        %v3474 = vsub.f32 1.0, %v3473
        %v3475 = vmul.f32 %v3472, %v3474
        %v3476 = vadd.f32 %v3472, %v3475
        %vm3477 = vweird.f32 %v3118
        %vm3478 = vweird.f32 %v3472
        %vm3479 = vmor %vm3477, %vm3478
        %v3480 = vsel %vm3479, %v3472, %v3476
        %v3481 = vand.u32 2147483647, %v3118
        %vm3482 = vcmp.eq.f32.partialorder %v3481, 8.507059e+37
        %v3483 = vand.u32 %v3118, 2147483648
        %v3484 = vor.u32 1.1754944e-38, %v3483
        %v3485 = vsel %vm3482, %v3484, %v3480
        %v3486 = vmul.f32 1.0, %v3485
        %v3487 = vrcp.pop %v3119
        %v3488 = vmul.f32 %v3119, %v3487
        %v3489 = vsub.f32 1.0, %v3488
        %v3490 = vmul.f32 %v3487, %v3489
        %v3491 = vadd.f32 %v3487, %v3490
        %vm3492 = vweird.f32 %v3119
        %vm3493 = vweird.f32 %v3487
        %vm3494 = vmor %vm3492, %vm3493
        %v3495 = vsel %vm3494, %v3487, %v3491
        %v3496 = vand.u32 2147483647, %v3119
        %vm3497 = vcmp.eq.f32.partialorder %v3496, 8.507059e+37
        %v3498 = vand.u32 %v3119, 2147483648
        %v3499 = vor.u32 1.1754944e-38, %v3498
        %v3500 = vsel %vm3497, %v3499, %v3495
        %v3501 = vmul.f32 1.0, %v3500
        %v3502 = vrcp.pop %v3120
        %v3503 = vmul.f32 %v3120, %v3502
        %v3504 = vsub.f32 1.0, %v3503
        %v3505 = vmul.f32 %v3502, %v3504
        %v3506 = vadd.f32 %v3502, %v3505
        %vm3507 = vweird.f32 %v3120
        %vm3508 = vweird.f32 %v3502
        %vm3509 = vmor %vm3507, %vm3508
        %v3510 = vsel %vm3509, %v3502, %v3506
        %v3511 = vand.u32 2147483647, %v3120
        %vm3512 = vcmp.eq.f32.partialorder %v3511, 8.507059e+37
        %v3513 = vand.u32 %v3120, 2147483648
        %v3514 = vor.u32 1.1754944e-38, %v3513
        %v3515 = vsel %vm3512, %v3514, %v3510
        %v3516 = vmul.f32 1.0, %v3515
        %v3517 = vrcp.pop %v3121
        %v3518 = vmul.f32 %v3121, %v3517
        %v3519 = vsub.f32 1.0, %v3518
        %v3520 = vmul.f32 %v3517, %v3519
        %v3521 = vadd.f32 %v3517, %v3520
        %vm3522 = vweird.f32 %v3121
        %vm3523 = vweird.f32 %v3517
        %vm3524 = vmor %vm3522, %vm3523
        %v3525 = vsel %vm3524, %v3517, %v3521
        %v3526 = vand.u32 2147483647, %v3121
        %vm3527 = vcmp.eq.f32.partialorder %v3526, 8.507059e+37
        %v3528 = vand.u32 %v3121, 2147483648
        %v3529 = vor.u32 1.1754944e-38, %v3528
        %v3530 = vsel %vm3527, %v3529, %v3525
        %v3531 = vmul.f32 1.0, %v3530
        %v3532 = vrcp.pop %v3122
        %v3533 = vmul.f32 %v3122, %v3532
        %v3534 = vsub.f32 1.0, %v3533
        %v3535 = vmul.f32 %v3532, %v3534
        %v3536 = vadd.f32 %v3532, %v3535
        %vm3537 = vweird.f32 %v3122
        %vm3538 = vweird.f32 %v3532
        %vm3539 = vmor %vm3537, %vm3538
        %v3540 = vsel %vm3539, %v3532, %v3536
        %v3541 = vand.u32 2147483647, %v3122
        %vm3542 = vcmp.eq.f32.partialorder %v3541, 8.507059e+37
        %v3543 = vand.u32 %v3122, 2147483648
        %v3544 = vor.u32 1.1754944e-38, %v3543
        %v3545 = vsel %vm3542, %v3544, %v3540
        %v3546 = vmul.f32 1.0, %v3545
        %v3547 = vrcp.pop %v3123
        %v3548 = vmul.f32 %v3123, %v3547
        %v3549 = vsub.f32 1.0, %v3548
        %v3550 = vmul.f32 %v3547, %v3549
        %v3551 = vadd.f32 %v3547, %v3550
        %vm3552 = vweird.f32 %v3123
        %vm3553 = vweird.f32 %v3547
        %vm3554 = vmor %vm3552, %vm3553
        %v3555 = vsel %vm3554, %v3547, %v3551
        %v3556 = vand.u32 2147483647, %v3123
        %vm3557 = vcmp.eq.f32.partialorder %v3556, 8.507059e+37
        %v3558 = vand.u32 %v3123, 2147483648
        %v3559 = vor.u32 1.1754944e-38, %v3558
        %v3560 = vsel %vm3557, %v3559, %v3555
        %v3561 = vmul.f32 1.0, %v3560
        %v3562 = vrcp.pop %v3124
        %v3563 = vmul.f32 %v3124, %v3562
        %v3564 = vsub.f32 1.0, %v3563
        %v3565 = vmul.f32 %v3562, %v3564
        %v3566 = vadd.f32 %v3562, %v3565
        %vm3567 = vweird.f32 %v3124
        %vm3568 = vweird.f32 %v3562
        %vm3569 = vmor %vm3567, %vm3568
        %v3570 = vsel %vm3569, %v3562, %v3566
        %v3571 = vand.u32 2147483647, %v3124
        %vm3572 = vcmp.eq.f32.partialorder %v3571, 8.507059e+37
        %v3573 = vand.u32 %v3124, 2147483648
        %v3574 = vor.u32 1.1754944e-38, %v3573
        %v3575 = vsel %vm3572, %v3574, %v3570
        %v3576 = vmul.f32 1.0, %v3575
        %v3577 = vrcp.pop %v3125
        %v3578 = vmul.f32 %v3125, %v3577
        %v3579 = vsub.f32 1.0, %v3578
        %v3580 = vmul.f32 %v3577, %v3579
        %v3581 = vadd.f32 %v3577, %v3580
        %vm3582 = vweird.f32 %v3125
        %vm3583 = vweird.f32 %v3577
        %vm3584 = vmor %vm3582, %vm3583
        %v3585 = vsel %vm3584, %v3577, %v3581
        %v3586 = vand.u32 2147483647, %v3125
        %vm3587 = vcmp.eq.f32.partialorder %v3586, 8.507059e+37
        %v3588 = vand.u32 %v3125, 2147483648
        %v3589 = vor.u32 1.1754944e-38, %v3588
        %v3590 = vsel %vm3587, %v3589, %v3585
        %v3591 = vmul.f32 1.0, %v3590
        %v3592 = vrcp.pop %v3126
        %v3593 = vmul.f32 %v3126, %v3592
        %v3594 = vsub.f32 1.0, %v3593
        %v3595 = vmul.f32 %v3592, %v3594
        %v3596 = vadd.f32 %v3592, %v3595
        %vm3597 = vweird.f32 %v3126
        %vm3598 = vweird.f32 %v3592
        %vm3599 = vmor %vm3597, %vm3598
        %v3600 = vsel %vm3599, %v3592, %v3596
        %v3601 = vand.u32 2147483647, %v3126
        %vm3602 = vcmp.eq.f32.partialorder %v3601, 8.507059e+37
        %v3603 = vand.u32 %v3126, 2147483648
        %v3604 = vor.u32 1.1754944e-38, %v3603
        %v3605 = vsel %vm3602, %v3604, %v3600
        %v3606 = vmul.f32 1.0, %v3605
        %v3607 = vmul.f32 %v2501, %v2232
        %v3608 = vmul.f32 %v2516, %v2235
        %v3609 = vmul.f32 %v2531, %v2238
        %v3610 = vmul.f32 %v2546, %v2241
        %v3611 = vmul.f32 %v2561, %v2244
        %v3612 = vmul.f32 %v2576, %v2247
        %v3613 = vmul.f32 %v2591, %v2250
        %v3614 = vmul.f32 %v2606, %v2253
        %v3615 = vmul.f32 %v2621, %v2256
        %v3616 = vmul.f32 %v2636, %v2259
        %v3617 = vmul.f32 %v2651, %v2262
        %v3618 = vmul.f32 %v2666, %v2265
        %v3619 = vmul.f32 %v2681, %v2268
        %v3620 = vmul.f32 %v2696, %v2271
        %v3621 = vmul.f32 %v2711, %v2274
        %v3622 = vmul.f32 %v2726, %v2277
        %v3623 = vmul.f32 %v2741, %v2280
        %v3624 = vmul.f32 %v2756, %v2283
        %v3625 = vmul.f32 %v2771, %v2286
        %v3626 = vmul.f32 %v2786, %v2289
        %v3627 = vmul.f32 %v2801, %v2292
        %v3628 = vmul.f32 %v2816, %v2295
        %v3629 = vmul.f32 %v2831, %v2298
        %v3630 = vmul.f32 %v2846, %v2301
        %v3631 = vmul.f32 %v2861, %v2304
        %v3632 = vmul.f32 %v2876, %v2307
        %v3633 = vmul.f32 %v2891, %v2310
        %v3634 = vmul.f32 %v2906, %v2313
        %v3635 = vmul.f32 %v2921, %v2316
        %v3636 = vmul.f32 %v2936, %v2319
        %v3637 = vmul.f32 %v2951, %v2322
        %v3638 = vmul.f32 %v2966, %v2325
        %v3639 = vadd.f32 %v1838, %v3607
        %v3640 = vadd.f32 %v1841, %v3608
        %v3641 = vadd.f32 %v1844, %v3609
        %v3642 = vadd.f32 %v1847, %v3610
        %v3643 = vadd.f32 %v1850, %v3611
        %v3644 = vadd.f32 %v1853, %v3612
        %v3645 = vadd.f32 %v1856, %v3613
        %v3646 = vadd.f32 %v1859, %v3614
        %v3647 = vadd.f32 %v1862, %v3615
        %v3648 = vadd.f32 %v1865, %v3616
        %v3649 = vadd.f32 %v1868, %v3617
        %v3650 = vadd.f32 %v1871, %v3618
        %v3651 = vadd.f32 %v1874, %v3619
        %v3652 = vadd.f32 %v1877, %v3620
        %v3653 = vadd.f32 %v1880, %v3621
        %v3654 = vadd.f32 %v1883, %v3622
        %v3655 = vadd.f32 %v1886, %v3623
        %v3656 = vadd.f32 %v1889, %v3624
        %v3657 = vadd.f32 %v1892, %v3625
        %v3658 = vadd.f32 %v1895, %v3626
        %v3659 = vadd.f32 %v1898, %v3627
        %v3660 = vadd.f32 %v1901, %v3628
        %v3661 = vadd.f32 %v1904, %v3629
        %v3662 = vadd.f32 %v1907, %v3630
        %v3663 = vadd.f32 %v1910, %v3631
        %v3664 = vadd.f32 %v1913, %v3632
        %v3665 = vadd.f32 %v1916, %v3633
        %v3666 = vadd.f32 %v1919, %v3634
        %v3667 = vadd.f32 %v1922, %v3635
        %v3668 = vadd.f32 %v1925, %v3636
        %v3669 = vadd.f32 %v1928, %v3637
        %v3670 = vadd.f32 %v1931, %v3638
        %v3671 = vtanh.pop %v3639
        %v3672 = vtanh.pop %v3640
        %v3673 = vtanh.pop %v3641
        %v3674 = vtanh.pop %v3642
        %v3675 = vtanh.pop %v3643
        %v3676 = vtanh.pop %v3644
        %v3677 = vtanh.pop %v3645
        %v3678 = vtanh.pop %v3646
        %v3679 = vtanh.pop %v3647
        %v3680 = vtanh.pop %v3648
        %v3681 = vtanh.pop %v3649
        %v3682 = vtanh.pop %v3650
        %v3683 = vtanh.pop %v3651
        %v3684 = vtanh.pop %v3652
        %v3685 = vtanh.pop %v3653
        %v3686 = vtanh.pop %v3654
        %v3687 = vtanh.pop %v3655
        %v3688 = vtanh.pop %v3656
        %v3689 = vtanh.pop %v3657
        %v3690 = vtanh.pop %v3658
        %v3691 = vtanh.pop %v3659
        %v3692 = vtanh.pop %v3660
        %v3693 = vtanh.pop %v3661
        %v3694 = vtanh.pop %v3662
        %v3695 = vtanh.pop %v3663
        %v3696 = vtanh.pop %v3664
        %v3697 = vtanh.pop %v3665
        %v3698 = vtanh.pop %v3666
        %v3699 = vtanh.pop %v3667
        %v3700 = vtanh.pop %v3668
        %v3701 = vtanh.pop %v3669
        %v3702 = vtanh.pop %v3670
        %v3703 = vsub.f32 1.0, %v3141
        %v3704 = vsub.f32 1.0, %v3156
        %v3705 = vsub.f32 1.0, %v3171
        %v3706 = vsub.f32 1.0, %v3186
        %v3707 = vsub.f32 1.0, %v3201
        %v3708 = vsub.f32 1.0, %v3216
        %v3709 = vsub.f32 1.0, %v3231
        %v3710 = vsub.f32 1.0, %v3246
        %v3711 = vsub.f32 1.0, %v3261
        %v3712 = vsub.f32 1.0, %v3276
        %v3713 = vsub.f32 1.0, %v3291
        %v3714 = vsub.f32 1.0, %v3306
        %v3715 = vsub.f32 1.0, %v3321
        %v3716 = vsub.f32 1.0, %v3336
        %v3717 = vsub.f32 1.0, %v3351
        %v3718 = vsub.f32 1.0, %v3366
        %v3719 = vsub.f32 1.0, %v3381
        %v3720 = vsub.f32 1.0, %v3396
        %v3721 = vsub.f32 1.0, %v3411
        %v3722 = vsub.f32 1.0, %v3426
        %v3723 = vsub.f32 1.0, %v3441
        %v3724 = vsub.f32 1.0, %v3456
        %v3725 = vsub.f32 1.0, %v3471
        %v3726 = vsub.f32 1.0, %v3486
        %v3727 = vsub.f32 1.0, %v3501
        %v3728 = vsub.f32 1.0, %v3516
        %v3729 = vsub.f32 1.0, %v3531
        %v3730 = vsub.f32 1.0, %v3546
        %v3731 = vsub.f32 1.0, %v3561
        %v3732 = vsub.f32 1.0, %v3576
        %v3733 = vsub.f32 1.0, %v3591
        %v3734 = vsub.f32 1.0, %v3606
        %v3735 = vmul.f32 %v3703, %v3671
        %v3736 = vmul.f32 %v3704, %v3672
        %v3737 = vmul.f32 %v3705, %v3673
        %v3738 = vmul.f32 %v3706, %v3674
        %v3739 = vmul.f32 %v3707, %v3675
        %v3740 = vmul.f32 %v3708, %v3676
        %v3741 = vmul.f32 %v3709, %v3677
        %v3742 = vmul.f32 %v3710, %v3678
        %v3743 = vmul.f32 %v3711, %v3679
        %v3744 = vmul.f32 %v3712, %v3680
        %v3745 = vmul.f32 %v3713, %v3681
        %v3746 = vmul.f32 %v3714, %v3682
        %v3747 = vmul.f32 %v3715, %v3683
        %v3748 = vmul.f32 %v3716, %v3684
        %v3749 = vmul.f32 %v3717, %v3685
        %v3750 = vmul.f32 %v3718, %v3686
        %v3751 = vmul.f32 %v3719, %v3687
        %v3752 = vmul.f32 %v3720, %v3688
        %v3753 = vmul.f32 %v3721, %v3689
        %v3754 = vmul.f32 %v3722, %v3690
        %v3755 = vmul.f32 %v3723, %v3691
        %v3756 = vmul.f32 %v3724, %v3692
        %v3757 = vmul.f32 %v3725, %v3693
        %v3758 = vmul.f32 %v3726, %v3694
        %v3759 = vmul.f32 %v3727, %v3695
        %v3760 = vmul.f32 %v3728, %v3696
        %v3761 = vmul.f32 %v3729, %v3697
        %v3762 = vmul.f32 %v3730, %v3698
        %v3763 = vmul.f32 %v3731, %v3699
        %v3764 = vmul.f32 %v3732, %v3700
        %v3765 = vmul.f32 %v3733, %v3701
        %v3766 = vmul.f32 %v3734, %v3702
        %v3767 = vmul.f32 %v3141, %v536
        %v3768 = vmul.f32 %v3156, %v537
        %v3769 = vmul.f32 %v3171, %v538
        %v3770 = vmul.f32 %v3186, %v539
        %v3771 = vmul.f32 %v3201, %v540
        %v3772 = vmul.f32 %v3216, %v541
        %v3773 = vmul.f32 %v3231, %v542
        %v3774 = vmul.f32 %v3246, %v543
        %v3775 = vmul.f32 %v3261, %v544
        %v3776 = vmul.f32 %v3276, %v545
        %v3777 = vmul.f32 %v3291, %v546
        %v3778 = vmul.f32 %v3306, %v547
        %v3779 = vmul.f32 %v3321, %v548
        %v3780 = vmul.f32 %v3336, %v549
        %v3781 = vmul.f32 %v3351, %v550
        %v3782 = vmul.f32 %v3366, %v551
        %v3783 = vmul.f32 %v3381, %v552
        %v3784 = vmul.f32 %v3396, %v553
        %v3785 = vmul.f32 %v3411, %v554
        %v3786 = vmul.f32 %v3426, %v555
        %v3787 = vmul.f32 %v3441, %v556
        %v3788 = vmul.f32 %v3456, %v557
        %v3789 = vmul.f32 %v3471, %v558
        %v3790 = vmul.f32 %v3486, %v559
        %v3791 = vmul.f32 %v3501, %v560
        %v3792 = vmul.f32 %v3516, %v561
        %v3793 = vmul.f32 %v3531, %v562
        %v3794 = vmul.f32 %v3546, %v563
        %v3795 = vmul.f32 %v3561, %v564
        %v3796 = vmul.f32 %v3576, %v565
        %v3797 = vmul.f32 %v3591, %v566
        %v3798 = vmul.f32 %v3606, %v567
        %v3799 = vadd.f32 %v3735, %v3767
        %v3800 = vadd.f32 %v3736, %v3768
        %v3801 = vadd.f32 %v3737, %v3769
        %v3802 = vadd.f32 %v3738, %v3770
        %v3803 = vadd.f32 %v3739, %v3771
        %v3804 = vadd.f32 %v3740, %v3772
        %v3805 = vadd.f32 %v3741, %v3773
        %v3806 = vadd.f32 %v3742, %v3774
        %v3807 = vadd.f32 %v3743, %v3775
        %v3808 = vadd.f32 %v3744, %v3776
        %v3809 = vadd.f32 %v3745, %v3777
        %v3810 = vadd.f32 %v3746, %v3778
        %v3811 = vadd.f32 %v3747, %v3779
        %v3812 = vadd.f32 %v3748, %v3780
        %v3813 = vadd.f32 %v3749, %v3781
        %v3814 = vadd.f32 %v3750, %v3782
        %v3815 = vadd.f32 %v3751, %v3783
        %v3816 = vadd.f32 %v3752, %v3784
        %v3817 = vadd.f32 %v3753, %v3785
        %v3818 = vadd.f32 %v3754, %v3786
        %v3819 = vadd.f32 %v3755, %v3787
        %v3820 = vadd.f32 %v3756, %v3788
        %v3821 = vadd.f32 %v3757, %v3789
        %v3822 = vadd.f32 %v3758, %v3790
        %v3823 = vadd.f32 %v3759, %v3791
        %v3824 = vadd.f32 %v3760, %v3792
        %v3825 = vadd.f32 %v3761, %v3793
        %v3826 = vadd.f32 %v3762, %v3794
        %v3827 = vadd.f32 %v3763, %v3795
        %v3828 = vadd.f32 %v3764, %v3796
        %v3829 = vadd.f32 %v3765, %v3797
        %v3830 = vadd.f32 %v3766, %v3798
        %v3831 = vmul.f32 %v3799, %v3799
        %v3832 = vmul.f32 %v3800, %v3800
        %v3833 = vmul.f32 %v3801, %v3801
        %v3834 = vmul.f32 %v3802, %v3802
        %v3835 = vmul.f32 %v3803, %v3803
        %v3836 = vmul.f32 %v3804, %v3804
        %v3837 = vmul.f32 %v3805, %v3805
        %v3838 = vmul.f32 %v3806, %v3806
        %v3839 = vmul.f32 %v3807, %v3807
        %v3840 = vmul.f32 %v3808, %v3808
        %v3841 = vmul.f32 %v3809, %v3809
        %v3842 = vmul.f32 %v3810, %v3810
        %v3843 = vmul.f32 %v3811, %v3811
        %v3844 = vmul.f32 %v3812, %v3812
        %v3845 = vmul.f32 %v3813, %v3813
        %v3846 = vmul.f32 %v3814, %v3814
        %v3847 = vmul.f32 %v3815, %v3815
        %v3848 = vmul.f32 %v3816, %v3816
        %v3849 = vmul.f32 %v3817, %v3817
        %v3850 = vmul.f32 %v3818, %v3818
        %v3851 = vmul.f32 %v3819, %v3819
        %v3852 = vmul.f32 %v3820, %v3820
        %v3853 = vmul.f32 %v3821, %v3821
        %v3854 = vmul.f32 %v3822, %v3822
        %v3855 = vmul.f32 %v3823, %v3823
        %v3856 = vmul.f32 %v3824, %v3824
        %v3857 = vmul.f32 %v3825, %v3825
        %v3858 = vmul.f32 %v3826, %v3826
        %v3859 = vmul.f32 %v3827, %v3827
        %v3860 = vmul.f32 %v3828, %v3828
        %v3861 = vmul.f32 %v3829, %v3829
        %v3862 = vmul.f32 %v3830, %v3830
        %3863 = vadd.xlane.f32.xlu0 %v3831
        %v3864 = vpop.xlane.xlu0 %3863
        %3865 = vadd.xlane.f32.xlu0 %v3832
        %v3866 = vpop.xlane.xlu0 %3865
        %3867 = vadd.xlane.f32.xlu0 %v3833
        %v3868 = vpop.xlane.xlu0 %3867
        %3869 = vadd.xlane.f32.xlu0 %v3834
        %v3870 = vpop.xlane.xlu0 %3869
        %3871 = vadd.xlane.f32.xlu0 %v3835
        %v3872 = vpop.xlane.xlu0 %3871
        %3873 = vadd.xlane.f32.xlu0 %v3836
        %v3874 = vpop.xlane.xlu0 %3873
        %3875 = vadd.xlane.f32.xlu0 %v3837
        %v3876 = vpop.xlane.xlu0 %3875
        %3877 = vadd.xlane.f32.xlu0 %v3838
        %v3878 = vpop.xlane.xlu0 %3877
        %3879 = vadd.xlane.f32.xlu0 %v3839
        %v3880 = vpop.xlane.xlu0 %3879
        %3881 = vadd.xlane.f32.xlu0 %v3840
        %v3882 = vpop.xlane.xlu0 %3881
        %3883 = vadd.xlane.f32.xlu0 %v3841
        %v3884 = vpop.xlane.xlu0 %3883
        %3885 = vadd.xlane.f32.xlu0 %v3842
        %v3886 = vpop.xlane.xlu0 %3885
        %3887 = vadd.xlane.f32.xlu0 %v3843
        %v3888 = vpop.xlane.xlu0 %3887
        %3889 = vadd.xlane.f32.xlu0 %v3844
        %v3890 = vpop.xlane.xlu0 %3889
        %3891 = vadd.xlane.f32.xlu0 %v3845
        %v3892 = vpop.xlane.xlu0 %3891
        %3893 = vadd.xlane.f32.xlu0 %v3846
        %v3894 = vpop.xlane.xlu0 %3893
        %3895 = vadd.xlane.f32.xlu0 %v3847
        %v3896 = vpop.xlane.xlu0 %3895
        %3897 = vadd.xlane.f32.xlu0 %v3848
        %v3898 = vpop.xlane.xlu0 %3897
        %3899 = vadd.xlane.f32.xlu0 %v3849
        %v3900 = vpop.xlane.xlu0 %3899
        %3901 = vadd.xlane.f32.xlu0 %v3850
        %v3902 = vpop.xlane.xlu0 %3901
        %3903 = vadd.xlane.f32.xlu0 %v3851
        %v3904 = vpop.xlane.xlu0 %3903
        %3905 = vadd.xlane.f32.xlu0 %v3852
        %v3906 = vpop.xlane.xlu0 %3905
        %3907 = vadd.xlane.f32.xlu0 %v3853
        %v3908 = vpop.xlane.xlu0 %3907
        %3909 = vadd.xlane.f32.xlu0 %v3854
        %v3910 = vpop.xlane.xlu0 %3909
        %3911 = vadd.xlane.f32.xlu0 %v3855
        %v3912 = vpop.xlane.xlu0 %3911
        %3913 = vadd.xlane.f32.xlu0 %v3856
        %v3914 = vpop.xlane.xlu0 %3913
        %3915 = vadd.xlane.f32.xlu0 %v3857
        %v3916 = vpop.xlane.xlu0 %3915
        %3917 = vadd.xlane.f32.xlu0 %v3858
        %v3918 = vpop.xlane.xlu0 %3917
        %3919 = vadd.xlane.f32.xlu0 %v3859
        %v3920 = vpop.xlane.xlu0 %3919
        %3921 = vadd.xlane.f32.xlu0 %v3860
        %v3922 = vpop.xlane.xlu0 %3921
        %3923 = vadd.xlane.f32.xlu0 %v3861
        %v3924 = vpop.xlane.xlu0 %3923
        %3925 = vadd.xlane.f32.xlu0 %v3862
        %v3926 = vpop.xlane.xlu0 %3925
        %v3927 = vmax.f32 %v3864, 1e-24
        %v3928 = vmax.f32 %v3866, 1e-24
        %v3929 = vmax.f32 %v3868, 1e-24
        %v3930 = vmax.f32 %v3870, 1e-24
        %v3931 = vmax.f32 %v3872, 1e-24
        %v3932 = vmax.f32 %v3874, 1e-24
        %v3933 = vmax.f32 %v3876, 1e-24
        %v3934 = vmax.f32 %v3878, 1e-24
        %v3935 = vmax.f32 %v3880, 1e-24
        %v3936 = vmax.f32 %v3882, 1e-24
        %v3937 = vmax.f32 %v3884, 1e-24
        %v3938 = vmax.f32 %v3886, 1e-24
        %v3939 = vmax.f32 %v3888, 1e-24
        %v3940 = vmax.f32 %v3890, 1e-24
        %v3941 = vmax.f32 %v3892, 1e-24
        %v3942 = vmax.f32 %v3894, 1e-24
        %v3943 = vmax.f32 %v3896, 1e-24
        %v3944 = vmax.f32 %v3898, 1e-24
        %v3945 = vmax.f32 %v3900, 1e-24
        %v3946 = vmax.f32 %v3902, 1e-24
        %v3947 = vmax.f32 %v3904, 1e-24
        %v3948 = vmax.f32 %v3906, 1e-24
        %v3949 = vmax.f32 %v3908, 1e-24
        %v3950 = vmax.f32 %v3910, 1e-24
        %v3951 = vmax.f32 %v3912, 1e-24
        %v3952 = vmax.f32 %v3914, 1e-24
        %v3953 = vmax.f32 %v3916, 1e-24
        %v3954 = vmax.f32 %v3918, 1e-24
        %v3955 = vmax.f32 %v3920, 1e-24
        %v3956 = vmax.f32 %v3922, 1e-24
        %v3957 = vmax.f32 %v3924, 1e-24
        %v3958 = vmax.f32 %v3926, 1e-24
        %v3959 = vrsqrt.pop %v3927
        %v3960 = vmul.f32 %v3959, %v3927
        %v3961 = vmul.f32 %v3960, %v3959
        %v3962 = vmul.f32 0.5, %v3961
        %v3963 = vsub.f32 1.5, %v3962
        %v3964 = vmul.f32 %v3959, %v3963
        %vm3965 = vweird.f32 %v3927
        %vm3966 = vweird.f32 %v3959
        %vm3967 = vmor %vm3965, %vm3966
        %v3968 = vsel %vm3967, %v3959, %v3964
        %v3969 = vrsqrt.pop %v3928
        %v3970 = vmul.f32 %v3969, %v3928
        %v3971 = vmul.f32 %v3970, %v3969
        %v3972 = vmul.f32 0.5, %v3971
        %v3973 = vsub.f32 1.5, %v3972
        %v3974 = vmul.f32 %v3969, %v3973
        %vm3975 = vweird.f32 %v3928
        %vm3976 = vweird.f32 %v3969
        %vm3977 = vmor %vm3975, %vm3976
        %v3978 = vsel %vm3977, %v3969, %v3974
        %v3979 = vrsqrt.pop %v3929
        %v3980 = vmul.f32 %v3979, %v3929
        %v3981 = vmul.f32 %v3980, %v3979
        %v3982 = vmul.f32 0.5, %v3981
        %v3983 = vsub.f32 1.5, %v3982
        %v3984 = vmul.f32 %v3979, %v3983
        %vm3985 = vweird.f32 %v3929
        %vm3986 = vweird.f32 %v3979
        %vm3987 = vmor %vm3985, %vm3986
        %v3988 = vsel %vm3987, %v3979, %v3984
        %v3989 = vrsqrt.pop %v3930
        %v3990 = vmul.f32 %v3989, %v3930
        %v3991 = vmul.f32 %v3990, %v3989
        %v3992 = vmul.f32 0.5, %v3991
        %v3993 = vsub.f32 1.5, %v3992
        %v3994 = vmul.f32 %v3989, %v3993
        %vm3995 = vweird.f32 %v3930
        %vm3996 = vweird.f32 %v3989
        %vm3997 = vmor %vm3995, %vm3996
        %v3998 = vsel %vm3997, %v3989, %v3994
        %v3999 = vrsqrt.pop %v3931
        %v4000 = vmul.f32 %v3999, %v3931
        %v4001 = vmul.f32 %v4000, %v3999
        %v4002 = vmul.f32 0.5, %v4001
        %v4003 = vsub.f32 1.5, %v4002
        %v4004 = vmul.f32 %v3999, %v4003
        %vm4005 = vweird.f32 %v3931
        %vm4006 = vweird.f32 %v3999
        %vm4007 = vmor %vm4005, %vm4006
        %v4008 = vsel %vm4007, %v3999, %v4004
        %v4009 = vrsqrt.pop %v3932
        %v4010 = vmul.f32 %v4009, %v3932
        %v4011 = vmul.f32 %v4010, %v4009
        %v4012 = vmul.f32 0.5, %v4011
        %v4013 = vsub.f32 1.5, %v4012
        %v4014 = vmul.f32 %v4009, %v4013
        %vm4015 = vweird.f32 %v3932
        %vm4016 = vweird.f32 %v4009
        %vm4017 = vmor %vm4015, %vm4016
        %v4018 = vsel %vm4017, %v4009, %v4014
        %v4019 = vrsqrt.pop %v3933
        %v4020 = vmul.f32 %v4019, %v3933
        %v4021 = vmul.f32 %v4020, %v4019
        %v4022 = vmul.f32 0.5, %v4021
        %v4023 = vsub.f32 1.5, %v4022
        %v4024 = vmul.f32 %v4019, %v4023
        %vm4025 = vweird.f32 %v3933
        %vm4026 = vweird.f32 %v4019
        %vm4027 = vmor %vm4025, %vm4026
        %v4028 = vsel %vm4027, %v4019, %v4024
        %v4029 = vrsqrt.pop %v3934
        %v4030 = vmul.f32 %v4029, %v3934
        %v4031 = vmul.f32 %v4030, %v4029
        %v4032 = vmul.f32 0.5, %v4031
        %v4033 = vsub.f32 1.5, %v4032
        %v4034 = vmul.f32 %v4029, %v4033
        %vm4035 = vweird.f32 %v3934
        %vm4036 = vweird.f32 %v4029
        %vm4037 = vmor %vm4035, %vm4036
        %v4038 = vsel %vm4037, %v4029, %v4034
        %v4039 = vrsqrt.pop %v3935
        %v4040 = vmul.f32 %v4039, %v3935
        %v4041 = vmul.f32 %v4040, %v4039
        %v4042 = vmul.f32 0.5, %v4041
        %v4043 = vsub.f32 1.5, %v4042
        %v4044 = vmul.f32 %v4039, %v4043
        %vm4045 = vweird.f32 %v3935
        %vm4046 = vweird.f32 %v4039
        %vm4047 = vmor %vm4045, %vm4046
        %v4048 = vsel %vm4047, %v4039, %v4044
        %v4049 = vrsqrt.pop %v3936
        %v4050 = vmul.f32 %v4049, %v3936
        %v4051 = vmul.f32 %v4050, %v4049
        %v4052 = vmul.f32 0.5, %v4051
        %v4053 = vsub.f32 1.5, %v4052
        %v4054 = vmul.f32 %v4049, %v4053
        %vm4055 = vweird.f32 %v3936
        %vm4056 = vweird.f32 %v4049
        %vm4057 = vmor %vm4055, %vm4056
        %v4058 = vsel %vm4057, %v4049, %v4054
        %v4059 = vrsqrt.pop %v3937
        %v4060 = vmul.f32 %v4059, %v3937
        %v4061 = vmul.f32 %v4060, %v4059
        %v4062 = vmul.f32 0.5, %v4061
        %v4063 = vsub.f32 1.5, %v4062
        %v4064 = vmul.f32 %v4059, %v4063
        %vm4065 = vweird.f32 %v3937
        %vm4066 = vweird.f32 %v4059
        %vm4067 = vmor %vm4065, %vm4066
        %v4068 = vsel %vm4067, %v4059, %v4064
        %v4069 = vrsqrt.pop %v3938
        %v4070 = vmul.f32 %v4069, %v3938
        %v4071 = vmul.f32 %v4070, %v4069
        %v4072 = vmul.f32 0.5, %v4071
        %v4073 = vsub.f32 1.5, %v4072
        %v4074 = vmul.f32 %v4069, %v4073
        %vm4075 = vweird.f32 %v3938
        %vm4076 = vweird.f32 %v4069
        %vm4077 = vmor %vm4075, %vm4076
        %v4078 = vsel %vm4077, %v4069, %v4074
        %v4079 = vrsqrt.pop %v3939
        %v4080 = vmul.f32 %v4079, %v3939
        %v4081 = vmul.f32 %v4080, %v4079
        %v4082 = vmul.f32 0.5, %v4081
        %v4083 = vsub.f32 1.5, %v4082
        %v4084 = vmul.f32 %v4079, %v4083
        %vm4085 = vweird.f32 %v3939
        %vm4086 = vweird.f32 %v4079
        %vm4087 = vmor %vm4085, %vm4086
        %v4088 = vsel %vm4087, %v4079, %v4084
        %v4089 = vrsqrt.pop %v3940
        %v4090 = vmul.f32 %v4089, %v3940
        %v4091 = vmul.f32 %v4090, %v4089
        %v4092 = vmul.f32 0.5, %v4091
        %v4093 = vsub.f32 1.5, %v4092
        %v4094 = vmul.f32 %v4089, %v4093
        %vm4095 = vweird.f32 %v3940
        %vm4096 = vweird.f32 %v4089
        %vm4097 = vmor %vm4095, %vm4096
        %v4098 = vsel %vm4097, %v4089, %v4094
        %v4099 = vrsqrt.pop %v3941
        %v4100 = vmul.f32 %v4099, %v3941
        %v4101 = vmul.f32 %v4100, %v4099
        %v4102 = vmul.f32 0.5, %v4101
        %v4103 = vsub.f32 1.5, %v4102
        %v4104 = vmul.f32 %v4099, %v4103
        %vm4105 = vweird.f32 %v3941
        %vm4106 = vweird.f32 %v4099
        %vm4107 = vmor %vm4105, %vm4106
        %v4108 = vsel %vm4107, %v4099, %v4104
        %v4109 = vrsqrt.pop %v3942
        %v4110 = vmul.f32 %v4109, %v3942
        %v4111 = vmul.f32 %v4110, %v4109
        %v4112 = vmul.f32 0.5, %v4111
        %v4113 = vsub.f32 1.5, %v4112
        %v4114 = vmul.f32 %v4109, %v4113
        %vm4115 = vweird.f32 %v3942
        %vm4116 = vweird.f32 %v4109
        %vm4117 = vmor %vm4115, %vm4116
        %v4118 = vsel %vm4117, %v4109, %v4114
        %v4119 = vrsqrt.pop %v3943
        %v4120 = vmul.f32 %v4119, %v3943
        %v4121 = vmul.f32 %v4120, %v4119
        %v4122 = vmul.f32 0.5, %v4121
        %v4123 = vsub.f32 1.5, %v4122
        %v4124 = vmul.f32 %v4119, %v4123
        %vm4125 = vweird.f32 %v3943
        %vm4126 = vweird.f32 %v4119
        %vm4127 = vmor %vm4125, %vm4126
        %v4128 = vsel %vm4127, %v4119, %v4124
        %v4129 = vrsqrt.pop %v3944
        %v4130 = vmul.f32 %v4129, %v3944
        %v4131 = vmul.f32 %v4130, %v4129
        %v4132 = vmul.f32 0.5, %v4131
        %v4133 = vsub.f32 1.5, %v4132
        %v4134 = vmul.f32 %v4129, %v4133
        %vm4135 = vweird.f32 %v3944
        %vm4136 = vweird.f32 %v4129
        %vm4137 = vmor %vm4135, %vm4136
        %v4138 = vsel %vm4137, %v4129, %v4134
        %v4139 = vrsqrt.pop %v3945
        %v4140 = vmul.f32 %v4139, %v3945
        %v4141 = vmul.f32 %v4140, %v4139
        %v4142 = vmul.f32 0.5, %v4141
        %v4143 = vsub.f32 1.5, %v4142
        %v4144 = vmul.f32 %v4139, %v4143
        %vm4145 = vweird.f32 %v3945
        %vm4146 = vweird.f32 %v4139
        %vm4147 = vmor %vm4145, %vm4146
        %v4148 = vsel %vm4147, %v4139, %v4144
        %v4149 = vrsqrt.pop %v3946
        %v4150 = vmul.f32 %v4149, %v3946
        %v4151 = vmul.f32 %v4150, %v4149
        %v4152 = vmul.f32 0.5, %v4151
        %v4153 = vsub.f32 1.5, %v4152
        %v4154 = vmul.f32 %v4149, %v4153
        %vm4155 = vweird.f32 %v3946
        %vm4156 = vweird.f32 %v4149
        %vm4157 = vmor %vm4155, %vm4156
        %v4158 = vsel %vm4157, %v4149, %v4154
        %v4159 = vrsqrt.pop %v3947
        %v4160 = vmul.f32 %v4159, %v3947
        %v4161 = vmul.f32 %v4160, %v4159
        %v4162 = vmul.f32 0.5, %v4161
        %v4163 = vsub.f32 1.5, %v4162
        %v4164 = vmul.f32 %v4159, %v4163
        %vm4165 = vweird.f32 %v3947
        %vm4166 = vweird.f32 %v4159
        %vm4167 = vmor %vm4165, %vm4166
        %v4168 = vsel %vm4167, %v4159, %v4164
        %v4169 = vrsqrt.pop %v3948
        %v4170 = vmul.f32 %v4169, %v3948
        %v4171 = vmul.f32 %v4170, %v4169
        %v4172 = vmul.f32 0.5, %v4171
        %v4173 = vsub.f32 1.5, %v4172
        %v4174 = vmul.f32 %v4169, %v4173
        %vm4175 = vweird.f32 %v3948
        %vm4176 = vweird.f32 %v4169
        %vm4177 = vmor %vm4175, %vm4176
        %v4178 = vsel %vm4177, %v4169, %v4174
        %v4179 = vrsqrt.pop %v3949
        %v4180 = vmul.f32 %v4179, %v3949
        %v4181 = vmul.f32 %v4180, %v4179
        %v4182 = vmul.f32 0.5, %v4181
        %v4183 = vsub.f32 1.5, %v4182
        %v4184 = vmul.f32 %v4179, %v4183
        %vm4185 = vweird.f32 %v3949
        %vm4186 = vweird.f32 %v4179
        %vm4187 = vmor %vm4185, %vm4186
        %v4188 = vsel %vm4187, %v4179, %v4184
        %v4189 = vrsqrt.pop %v3950
        %v4190 = vmul.f32 %v4189, %v3950
        %v4191 = vmul.f32 %v4190, %v4189
        %v4192 = vmul.f32 0.5, %v4191
        %v4193 = vsub.f32 1.5, %v4192
        %v4194 = vmul.f32 %v4189, %v4193
        %vm4195 = vweird.f32 %v3950
        %vm4196 = vweird.f32 %v4189
        %vm4197 = vmor %vm4195, %vm4196
        %v4198 = vsel %vm4197, %v4189, %v4194
        %v4199 = vrsqrt.pop %v3951
        %v4200 = vmul.f32 %v4199, %v3951
        %v4201 = vmul.f32 %v4200, %v4199
        %v4202 = vmul.f32 0.5, %v4201
        %v4203 = vsub.f32 1.5, %v4202
        %v4204 = vmul.f32 %v4199, %v4203
        %vm4205 = vweird.f32 %v3951
        %vm4206 = vweird.f32 %v4199
        %vm4207 = vmor %vm4205, %vm4206
        %v4208 = vsel %vm4207, %v4199, %v4204
        %v4209 = vrsqrt.pop %v3952
        %v4210 = vmul.f32 %v4209, %v3952
        %v4211 = vmul.f32 %v4210, %v4209
        %v4212 = vmul.f32 0.5, %v4211
        %v4213 = vsub.f32 1.5, %v4212
        %v4214 = vmul.f32 %v4209, %v4213
        %vm4215 = vweird.f32 %v3952
        %vm4216 = vweird.f32 %v4209
        %vm4217 = vmor %vm4215, %vm4216
        %v4218 = vsel %vm4217, %v4209, %v4214
        %v4219 = vrsqrt.pop %v3953
        %v4220 = vmul.f32 %v4219, %v3953
        %v4221 = vmul.f32 %v4220, %v4219
        %v4222 = vmul.f32 0.5, %v4221
        %v4223 = vsub.f32 1.5, %v4222
        %v4224 = vmul.f32 %v4219, %v4223
        %vm4225 = vweird.f32 %v3953
        %vm4226 = vweird.f32 %v4219
        %vm4227 = vmor %vm4225, %vm4226
        %v4228 = vsel %vm4227, %v4219, %v4224
        %v4229 = vrsqrt.pop %v3954
        %v4230 = vmul.f32 %v4229, %v3954
        %v4231 = vmul.f32 %v4230, %v4229
        %v4232 = vmul.f32 0.5, %v4231
        %v4233 = vsub.f32 1.5, %v4232
        %v4234 = vmul.f32 %v4229, %v4233
        %vm4235 = vweird.f32 %v3954
        %vm4236 = vweird.f32 %v4229
        %vm4237 = vmor %vm4235, %vm4236
        %v4238 = vsel %vm4237, %v4229, %v4234
        %v4239 = vrsqrt.pop %v3955
        %v4240 = vmul.f32 %v4239, %v3955
        %v4241 = vmul.f32 %v4240, %v4239
        %v4242 = vmul.f32 0.5, %v4241
        %v4243 = vsub.f32 1.5, %v4242
        %v4244 = vmul.f32 %v4239, %v4243
        %vm4245 = vweird.f32 %v3955
        %vm4246 = vweird.f32 %v4239
        %vm4247 = vmor %vm4245, %vm4246
        %v4248 = vsel %vm4247, %v4239, %v4244
        %v4249 = vrsqrt.pop %v3956
        %v4250 = vmul.f32 %v4249, %v3956
        %v4251 = vmul.f32 %v4250, %v4249
        %v4252 = vmul.f32 0.5, %v4251
        %v4253 = vsub.f32 1.5, %v4252
        %v4254 = vmul.f32 %v4249, %v4253
        %vm4255 = vweird.f32 %v3956
        %vm4256 = vweird.f32 %v4249
        %vm4257 = vmor %vm4255, %vm4256
        %v4258 = vsel %vm4257, %v4249, %v4254
        %v4259 = vrsqrt.pop %v3957
        %v4260 = vmul.f32 %v4259, %v3957
        %v4261 = vmul.f32 %v4260, %v4259
        %v4262 = vmul.f32 0.5, %v4261
        %v4263 = vsub.f32 1.5, %v4262
        %v4264 = vmul.f32 %v4259, %v4263
        %vm4265 = vweird.f32 %v3957
        %vm4266 = vweird.f32 %v4259
        %vm4267 = vmor %vm4265, %vm4266
        %v4268 = vsel %vm4267, %v4259, %v4264
        %v4269 = vrsqrt.pop %v3958
        %v4270 = vmul.f32 %v4269, %v3958
        %v4271 = vmul.f32 %v4270, %v4269
        %v4272 = vmul.f32 0.5, %v4271
        %v4273 = vsub.f32 1.5, %v4272
        %v4274 = vmul.f32 %v4269, %v4273
        %vm4275 = vweird.f32 %v3958
        %vm4276 = vweird.f32 %v4269
        %vm4277 = vmor %vm4275, %vm4276
        %v4278 = vsel %vm4277, %v4269, %v4274
        %v4279 = vmul.f32 %v3799, %v3968
        %v4280 = vmul.f32 %v3800, %v3978
        %v4281 = vmul.f32 %v3801, %v3988
        %v4282 = vmul.f32 %v3802, %v3998
        %v4283 = vmul.f32 %v3803, %v4008
        %v4284 = vmul.f32 %v3804, %v4018
        %v4285 = vmul.f32 %v3805, %v4028
        %v4286 = vmul.f32 %v3806, %v4038
        %v4287 = vmul.f32 %v3807, %v4048
        %v4288 = vmul.f32 %v3808, %v4058
        %v4289 = vmul.f32 %v3809, %v4068
        %v4290 = vmul.f32 %v3810, %v4078
        %v4291 = vmul.f32 %v3811, %v4088
        %v4292 = vmul.f32 %v3812, %v4098
        %v4293 = vmul.f32 %v3813, %v4108
        %v4294 = vmul.f32 %v3814, %v4118
        %v4295 = vmul.f32 %v3815, %v4128
        %v4296 = vmul.f32 %v3816, %v4138
        %v4297 = vmul.f32 %v3817, %v4148
        %v4298 = vmul.f32 %v3818, %v4158
        %v4299 = vmul.f32 %v3819, %v4168
        %v4300 = vmul.f32 %v3820, %v4178
        %v4301 = vmul.f32 %v3821, %v4188
        %v4302 = vmul.f32 %v3822, %v4198
        %v4303 = vmul.f32 %v3823, %v4208
        %v4304 = vmul.f32 %v3824, %v4218
        %v4305 = vmul.f32 %v3825, %v4228
        %v4306 = vmul.f32 %v3826, %v4238
        %v4307 = vmul.f32 %v3827, %v4248
        %v4308 = vmul.f32 %v3828, %v4258
        %v4309 = vmul.f32 %v3829, %v4268
        %v4310 = vmul.f32 %v3830, %v4278
        %4311 = vst [vmem:[%s478] sm:$0xff] %v4279
        %4312 = vst [vmem:[%s478 + $0x8] sm:$0xff] %v4280
        %4313 = vst [vmem:[%s478 + $0x10] sm:$0xff] %v4281
        %4314 = vst [vmem:[%s478 + $0x18] sm:$0xff] %v4282
        %4315 = vst [vmem:[%s478 + $0x20] sm:$0xff] %v4283
        %4316 = vst [vmem:[%s478 + $0x28] sm:$0xff] %v4284
        %4317 = vst [vmem:[%s478 + $0x30] sm:$0xff] %v4285
        %4318 = vst [vmem:[%s478 + $0x38] sm:$0xff] %v4286
        %4319 = vst [vmem:[%s478 + $0x40] sm:$0xff] %v4287
        %4320 = vst [vmem:[%s478 + $0x48] sm:$0xff] %v4288
        %4321 = vst [vmem:[%s478 + $0x50] sm:$0xff] %v4289
        %4322 = vst [vmem:[%s478 + $0x58] sm:$0xff] %v4290
        %4323 = vst [vmem:[%s478 + $0x60] sm:$0xff] %v4291
        %4324 = vst [vmem:[%s478 + $0x68] sm:$0xff] %v4292
        %4325 = vst [vmem:[%s478 + $0x70] sm:$0xff] %v4293
        %4326 = vst [vmem:[%s478 + $0x78] sm:$0xff] %v4294
        %4327 = vst [vmem:[%s478 + $0x80] sm:$0xff] %v4295
        %4328 = vst [vmem:[%s478 + $0x88] sm:$0xff] %v4296
        %4329 = vst [vmem:[%s478 + $0x90] sm:$0xff] %v4297
        %4330 = vst [vmem:[%s478 + $0x98] sm:$0xff] %v4298
        %4331 = vst [vmem:[%s478 + $0xa0] sm:$0xff] %v4299
        %4332 = vst [vmem:[%s478 + $0xa8] sm:$0xff] %v4300
        %4333 = vst [vmem:[%s478 + $0xb0] sm:$0xff] %v4301
        %4334 = vst [vmem:[%s478 + $0xb8] sm:$0xff] %v4302
        %4335 = vst [vmem:[%s478 + $0xc0] sm:$0xff] %v4303
        %4336 = vst [vmem:[%s478 + $0xc8] sm:$0xff] %v4304
        %4337 = vst [vmem:[%s478 + $0xd0] sm:$0xff] %v4305
        %4338 = vst [vmem:[%s478 + $0xd8] sm:$0xff] %v4306
        %4339 = vst [vmem:[%s478 + $0xe0] sm:$0xff] %v4307
        %4340 = vst [vmem:[%s478 + $0xe8] sm:$0xff] %v4308
        %4341 = vst [vmem:[%s478 + $0xf0] sm:$0xff] %v4309
        %4342 = vst [vmem:[%s478 + $0xf8] sm:$0xff] %v4310
        %s4343 = sand.u32 %s265, 1
        %s4344 = scalar_lea.sflag [#allocation4], %s4343
        %s4345 = sand.u32 %s265, 1
        %s4346 = smul.addr %s4345, 256
        %s4347 = scalar_lea.vmem [#allocation11], %s4346
        // Predicated region
        $region81: #{tpu_custom_call.1} parent=59 // pred_check
          %p4348 = pneg %p275
        $region82: #{tpu_custom_call.1} parent=59 // pred_check_branch
          %4350 = sbr.rel (%p4348) target = $region84
        $region83: #{tpu_custom_call.1} parent=59 // pred_region
          %s4351 = smul.u32 32, %s27
          %4353 = vsyncadd %s4344, 0
          %s4354 = smul.addr %s4351, 8
          %s4355 = scalar_lea.hbm %s10, %s4354
          %s4356 = sshll.u32 %s4347, 4
          %s4357 = int_to_ptr.vmem [resolvable:$true] %s4356
          %s4358 = sshll.u32 %s4355, 4
          %s4359 = int_to_ptr.hbm [resolvable:$true] %s4358
          %4364 = dma.vmem_to_hbm [thread:$0]  %s4357, 4096, %s4359, %s4344, 128, 128, 8
        $region84: #{tpu_custom_call.1} parent=59 // pred_fallthru
          _
      $region60: #{tpu_custom_call.1} parent=5 // pred_fallthru
        _
      %p4365 = scmp.le.s32.totalorder 2, %s22
      // Predicated region
      $region85: #{tpu_custom_call.1} parent=5 // pred_check
        %p4366 = pneg %p4365
      $region86: #{tpu_custom_call.1} parent=5 // pred_check_branch
        %4368 = sbr.rel (%p4366) target = $region88
      $region87: #{tpu_custom_call.1} parent=5 // pred_region
        %s4369 = ssub.s32 %s22, 2
        // Predicated region
        $region89: #{tpu_custom_call.1} parent=87 // pred_check
          %p4370 = pneg %p281
        $region90: #{tpu_custom_call.1} parent=87 // pred_check_branch
          %4372 = sbr.rel (%p4370) target = $region92
        $region91: #{tpu_custom_call.1} parent=87 // pred_region
          %s4373 = sand.u32 %s266, 1
          %s4374 = scalar_lea.sflag [#allocation4], %s4373
          %s4375 = sand.u32 %s266, 1
          %s4376 = smul.addr %s4375, 256
          %s4377 = scalar_lea.vmem [#allocation11], %s4376
          %4379 = dma.done %s4374, 4096
        $region92: #{tpu_custom_call.1} parent=87 // pred_fallthru
          _
      $region88: #{tpu_custom_call.1} parent=5 // pred_fallthru
        _
    $region6: #{tpu_custom_call.1} parent=1 // loop_footer
      %s26 = sadd.s32 1, %s22
    $region7: #{tpu_custom_call.1} parent=1 // loop_footer_branch
      %21 = sbr.rel target = $region3
    $region8: #{tpu_custom_call.1} parent=1 // loop_exit
      _
    %4380 = vsyncpa [#allocation3], 1
    %s4381 = scalar_lea.sflag [#allocation3], 1
    %4382 = vsyncpa %s4381, 1
    %4383 = vsyncpa [#allocation6], 1
    %4384 = vsyncpa [#allocation9], 1
    %4385 = vsyncpa [#allocation4], 1
    %s4386 = scalar_lea.sflag [#allocation4], 1
    %4387 = vsyncpa %s4386, 1

</llo_original>
